<compile_context>
chip_gen: v6e
topology: v6e:2x2x1
jax: 0.10.0
libtpu: 0.0.40
codegen_flags: <defaults>
</compile_context>

<pallas_src>
import jax
import jax.numpy as jnp
from jax.experimental import pallas as pl
from jax.experimental.pallas import tpu as pltpu

C_IN = 686
C_OUT = 32
K = 9
PAD = (K - 1) // 2          # 4
HALO = 8                    # sublane-aligned halo block (>= PAD, multiple of 8)
OFF = HALO - PAD            # window row offset of output row 0
POOLED = C_OUT // 2         # 16, matches Linear(16, 10)
H1 = 10
H2 = 2


def net_kernel(xprev_ref, xbody_ref, xnext_ref, wc_ref, bc_ref,
               w1_ref, b1_ref, w2_ref, b2_ref, out_ref):
    i = pl.program_id(0)
    last = pl.num_programs(0) - 1
    TL = out_ref.shape[0]

    # Assemble the (TL + 2*HALO, C_IN) window; zero the halos at sequence edges
    # (the halo index_maps are clamped, so edge fetches are valid but discarded).
    pv = xprev_ref[...]
    nv = xnext_ref[...]
    prev = jnp.where(i == 0, jnp.zeros_like(pv), pv)
    nxt = jnp.where(i == last, jnp.zeros_like(nv), nv)
    xw = jnp.concatenate([prev, xbody_ref[...], nxt], axis=0)       # (TL+16, C_IN)
    xw = xw.astype(jnp.bfloat16)                                    # bf16 MXU operand

    # Fused Conv1d: single lane-dense MXU matmul, f32 accumulation.
    y = jnp.dot(xw, wc_ref[...], preferred_element_type=jnp.float32)  # (TL+16, K*C_OUT)

    # Combine the K=9 taps: conv[r, c] = sum_k y[OFF + k + r, k*C_OUT + c]
    conv = y[OFF:OFF + TL, 0:C_OUT]
    for k in range(1, K):                                           # static unroll
        conv = conv + y[OFF + k:OFF + k + TL, k * C_OUT:(k + 1) * C_OUT]
    conv = jnp.maximum(conv + bc_ref[...], 0.0)                     # bias + ReLU
    # TODO(synk): nn.Dropout(p=0.01) implemented as inference-mode identity.
    # TODO(synk): the module's debug print of the pooled shape is omitted.

    # MaxPool1d(2) over channels: columns were pre-permuted [even..., odd...].
    pooled = jnp.maximum(conv[:, :POOLED], conv[:, POOLED:])        # (TL, 16)

    h = jnp.dot(pooled, w1_ref[...], preferred_element_type=jnp.float32) + b1_ref[...]
    h = jnp.maximum(h, 0.0)                                         # relu(fc1)
    out = jnp.dot(h, w2_ref[...], preferred_element_type=jnp.float32) + b2_ref[...]
    out_ref[...] = out.astype(out_ref.dtype)                        # fc2


def net_forward(x, params, *, tl=128):
    """x: (L, C_IN) float32 -> (L, 2) float32.  Requires L % tl == 0, tl % 8 == 0."""
    wc, bc, w1, b1, w2, b2 = params
    L = x.shape[0]
    tl = min(tl, L)
    assert L % tl == 0 and tl % HALO == 0, (L, tl)
    r8 = tl // HALO          # body tile measured in 8-row halo blocks
    nblk = L // HALO         # total number of 8-row blocks in x

    def full(arr):           # whole array resident in VMEM (constant block index)
        return pl.BlockSpec(arr.shape, lambda i: (0,) * arr.ndim)

    return pl.pallas_call(
        net_kernel,
        out_shape=jax.ShapeDtypeStruct((L, H2), jnp.float32),
        grid=(L // tl,),
        in_specs=[
            # 8-row halo before the tile (clamped at the left edge)
            pl.BlockSpec((HALO, C_IN), lambda i: (jnp.maximum(i * r8 - 1, 0), 0)),
            # the body tile
            pl.BlockSpec((tl, C_IN), lambda i: (i, 0)),
            # 8-row halo after the tile (clamped at the right edge)
            pl.BlockSpec((HALO, C_IN), lambda i: (jnp.minimum((i + 1) * r8, nblk - 1), 0)),
            full(wc), full(bc), full(w1), full(b1), full(w2), full(b2),
        ],
        out_specs=pl.BlockSpec((tl, H2), lambda i: (i, 0)),
        compiler_params=pltpu.CompilerParams(
            dimension_semantics=("parallel",),        # shard tiles across TCs
            vmem_limit_bytes=32 * 1024 * 1024,        # explicit, fits all generations
        ),
    )(x, x, x, wc, bc, w1, b1, w2, b2)


def init_params(key):
    """Deterministic synthetic params (PyTorch-shaped) + kernel-layout versions."""
    ks = jax.random.split(key, 6)
    conv_w = jax.random.normal(ks[0], (C_OUT, C_IN, K), jnp.float32) / jnp.sqrt(C_IN * K)
    conv_b = jax.random.normal(ks[1], (C_OUT,), jnp.float32) * 0.01
    fc1_w = jax.random.normal(ks[2], (H1, POOLED), jnp.float32) / jnp.sqrt(POOLED)
    fc1_b = jax.random.normal(ks[3], (H1,), jnp.float32) * 0.01
    fc2_w = jax.random.normal(ks[4], (H2, H1), jnp.float32) / jnp.sqrt(H1)
    fc2_b = jax.random.normal(ks[5], (H2,), jnp.float32) * 0.01

    # Output channels permuted [0,2,...,30, 1,3,...,31] so pairwise max == halves max.
    order = jnp.concatenate([jnp.arange(0, C_OUT, 2), jnp.arange(1, C_OUT, 2)])
    # (C_OUT, C_IN, K) -> fused lane-dense RHS (C_IN, K*C_OUT), bf16 for the MXU.
    wt = jnp.transpose(conv_w, (2, 1, 0))[:, :, order]               # (K, C_IN, C_OUT)
    wc = jnp.transpose(wt, (1, 0, 2)).reshape(C_IN, K * C_OUT)       # (686, 288)
    wc = wc.astype(jnp.bfloat16)
    bc = conv_b[order].reshape(1, C_OUT)
    w1 = fc1_w.T                                                     # (16, 10)
    b1 = fc1_b.reshape(1, H1)
    w2 = fc2_w.T                                                     # (10, 2)
    b2 = fc2_b.reshape(1, H2)
    kernel_params = (wc, bc, w1, b1, w2, b2)
    torch_params = (conv_w, conv_b, fc1_w, fc1_b, fc2_w, fc2_b)
    return kernel_params, torch_params


def net_reference(x, torch_params):
    """Pure-JAX f32 reference matching the PyTorch forward (eval mode)."""
    conv_w, conv_b, fc1_w, fc1_b, fc2_w, fc2_b = torch_params
    L = x.shape[0]
    xin = x.T[None]                                                  # (1, C_IN, L)
    y = jax.lax.conv_general_dilated(
        xin, conv_w, window_strides=(1,), padding=[(PAD, PAD)],
        dimension_numbers=('NCH', 'OIH', 'NCH'))[0] + conv_b[:, None]
    y = jnp.maximum(y, 0.0).T                                        # (L, C_OUT)
    y = jnp.max(y.reshape(L, POOLED, 2), axis=-1)                    # MaxPool1d(2)
    h = jnp.maximum(y @ fc1_w.T + fc1_b, 0.0)
    return h @ fc2_w.T + fc2_b


if __name__ == "__main__":
    key = jax.random.PRNGKey(0)
    pkey, xkey = jax.random.split(key)
    params, torch_params = init_params(pkey)

    L = 512                                          # module input: (L, 686)
    x = jax.random.normal(xkey, (L, C_IN), jnp.float32)

    out = net_forward(x, params, tl=128)             # 4 pipelined / parallel tiles
    out = jax.block_until_ready(out)

    ref = net_reference(x, torch_params)
    assert out.shape == (L, H2), out.shape
    # Tolerance loosened vs pure f32 because conv operands are bf16 (f32 accumulation).
    err = float(jnp.max(jnp.abs(out - ref)))
    assert err < 7.5e-2, err
    print("KERNEL_OK")
</pallas_src>

<mosaic_0001>
module attributes {stable_mosaic.version = 11 : i64} {
  func.func @net_kernel(%arg0: i32, %arg1: memref<8x686xf32, #tpu.memory_space<vmem>>, %arg2: memref<128x686xf32, #tpu.memory_space<vmem>>, %arg3: memref<8x686xf32, #tpu.memory_space<vmem>>, %arg4: memref<686x288xbf16, #tpu.memory_space<vmem>>, %arg5: memref<1x32xf32, #tpu.memory_space<vmem>>, %arg6: memref<16x10xf32, #tpu.memory_space<vmem>>, %arg7: memref<1x10xf32, #tpu.memory_space<vmem>>, %arg8: memref<10x2xf32, #tpu.memory_space<vmem>>, %arg9: memref<1x2xf32, #tpu.memory_space<vmem>>, %arg10: memref<128x2xf32, #tpu.memory_space<vmem>>) attributes {dimension_semantics = [#tpu.dimension_semantics<parallel>], iteration_bounds = array<i64: 4>, scalar_prefetch = 0 : i64, scratch_operands = 0 : i64, tpu.core_type = #tpu.core_type<tc>, window_params = [{transform_indices = @transform_0, window_bounds = array<i64: 8, 686>}, {transform_indices = @transform_1, window_bounds = array<i64: 128, 686>}, {transform_indices = @transform_2, window_bounds = array<i64: 8, 686>}, {pipeline_mode = #tpu.pipeline_mode<synchronous>, transform_indices = @transform_3, window_bounds = array<i64: 686, 288>}, {pipeline_mode = #tpu.pipeline_mode<synchronous>, transform_indices = @transform_4, window_bounds = array<i64: 1, 32>}, {pipeline_mode = #tpu.pipeline_mode<synchronous>, transform_indices = @transform_5, window_bounds = array<i64: 16, 10>}, {pipeline_mode = #tpu.pipeline_mode<synchronous>, transform_indices = @transform_6, window_bounds = array<i64: 1, 10>}, {pipeline_mode = #tpu.pipeline_mode<synchronous>, transform_indices = @transform_7, window_bounds = array<i64: 10, 2>}, {pipeline_mode = #tpu.pipeline_mode<synchronous>, transform_indices = @transform_8, window_bounds = array<i64: 1, 2>}, {transform_indices = @transform_9, window_bounds = array<i64: 128, 2>}]} {
    %c0 = arith.constant 0 : index
    %c0_0 = arith.constant 0 : index
    %0 = vector.load %arg1[%c0, %c0_0] : memref<8x686xf32, #tpu.memory_space<vmem>>, vector<8x686xf32>
    %c0_1 = arith.constant 0 : index
    %c0_2 = arith.constant 0 : index
    %1 = vector.load %arg3[%c0_1, %c0_2] : memref<8x686xf32, #tpu.memory_space<vmem>>, vector<8x686xf32>
    %c0_i32 = arith.constant 0 : i32
    %2 = arith.cmpi eq, %arg0, %c0_i32 : i32
    %cst = arith.constant 0.000000e+00 : f32
    %3 = vector.broadcast %cst : f32 to vector<8x686xf32>
    %4 = arith.select %2, %3, %0 : vector<8x686xf32>
    %c3_i32 = arith.constant 3 : i32
    %5 = arith.cmpi eq, %arg0, %c3_i32 : i32
    %cst_3 = arith.constant 0.000000e+00 : f32
    %6 = vector.broadcast %cst_3 : f32 to vector<8x686xf32>
    %7 = arith.select %5, %6, %1 : vector<8x686xf32>
    %c0_4 = arith.constant 0 : index
    %c0_5 = arith.constant 0 : index
    %8 = vector.load %arg2[%c0_4, %c0_5] : memref<128x686xf32, #tpu.memory_space<vmem>>, vector<128x686xf32>
    %9 = tpu.concatenate %4, %8, %7 in 0 : vector<8x686xf32>, vector<128x686xf32>, vector<8x686xf32> -> vector<144x686xf32>
    %10 = arith.truncf %9 : vector<144x686xf32> to vector<144x686xbf16>
    %c0_6 = arith.constant 0 : index
    %c0_7 = arith.constant 0 : index
    %11 = vector.load %arg4[%c0_6, %c0_7] : memref<686x288xbf16, #tpu.memory_space<vmem>>, vector<686x288xbf16>
    %cst_8 = arith.constant dense<0.000000e+00> : vector<144x288xf32>
    %12 = tpu.matmul %10, %11, %cst_8 {dimension_numbers = #tpu.dot_dimension_numbers<[1], [0], [0], [1], [0, 0, 1, 1], [], []>} : vector<144x686xbf16>, vector<686x288xbf16>, vector<144x288xf32> -> vector<144x288xf32>
    %13 = vector.extract_strided_slice %12 {offsets = [4, 0], sizes = [128, 32], strides = [1, 1]} : vector<144x288xf32> to vector<128x32xf32>
    %14 = vector.extract_strided_slice %12 {offsets = [5, 32], sizes = [128, 32], strides = [1, 1]} : vector<144x288xf32> to vector<128x32xf32>
    %15 = arith.addf %13, %14 : vector<128x32xf32>
    %16 = vector.extract_strided_slice %12 {offsets = [6, 64], sizes = [128, 32], strides = [1, 1]} : vector<144x288xf32> to vector<128x32xf32>
    %17 = arith.addf %15, %16 : vector<128x32xf32>
    %18 = vector.extract_strided_slice %12 {offsets = [7, 96], sizes = [128, 32], strides = [1, 1]} : vector<144x288xf32> to vector<128x32xf32>
    %19 = arith.addf %17, %18 : vector<128x32xf32>
    %20 = vector.extract_strided_slice %12 {offsets = [8, 128], sizes = [128, 32], strides = [1, 1]} : vector<144x288xf32> to vector<128x32xf32>
    %21 = arith.addf %19, %20 : vector<128x32xf32>
    %22 = vector.extract_strided_slice %12 {offsets = [9, 160], sizes = [128, 32], strides = [1, 1]} : vector<144x288xf32> to vector<128x32xf32>
    %23 = arith.addf %21, %22 : vector<128x32xf32>
    %24 = vector.extract_strided_slice %12 {offsets = [10, 192], sizes = [128, 32], strides = [1, 1]} : vector<144x288xf32> to vector<128x32xf32>
    %25 = arith.addf %23, %24 : vector<128x32xf32>
    %26 = vector.extract_strided_slice %12 {offsets = [11, 224], sizes = [128, 32], strides = [1, 1]} : vector<144x288xf32> to vector<128x32xf32>
    %27 = arith.addf %25, %26 : vector<128x32xf32>
    %28 = vector.extract_strided_slice %12 {offsets = [12, 256], sizes = [128, 32], strides = [1, 1]} : vector<144x288xf32> to vector<128x32xf32>
    %29 = arith.addf %27, %28 : vector<128x32xf32>
    %c0_9 = arith.constant 0 : index
    %c0_10 = arith.constant 0 : index
    %30 = vector.load %arg5[%c0_9, %c0_10] : memref<1x32xf32, #tpu.memory_space<vmem>>, vector<1x32xf32>
    %31 = vector.broadcast %30 : vector<1x32xf32> to vector<128x32xf32>
    %32 = arith.addf %29, %31 : vector<128x32xf32>
    %cst_11 = arith.constant 0.000000e+00 : f32
    %33 = vector.broadcast %cst_11 : f32 to vector<128x32xf32>
    %34 = arith.maximumf %32, %33 : vector<128x32xf32>
    %35 = vector.extract_strided_slice %34 {offsets = [0, 0], sizes = [128, 16], strides = [1, 1]} : vector<128x32xf32> to vector<128x16xf32>
    %36 = vector.extract_strided_slice %34 {offsets = [0, 16], sizes = [128, 16], strides = [1, 1]} : vector<128x32xf32> to vector<128x16xf32>
    %37 = arith.maximumf %35, %36 : vector<128x16xf32>
    %c0_12 = arith.constant 0 : index
    %c0_13 = arith.constant 0 : index
    %38 = vector.load %arg6[%c0_12, %c0_13] : memref<16x10xf32, #tpu.memory_space<vmem>>, vector<16x10xf32>
    %cst_14 = arith.constant dense<0.000000e+00> : vector<128x10xf32>
    %39 = tpu.matmul %37, %38, %cst_14 {dimension_numbers = #tpu.dot_dimension_numbers<[1], [0], [0], [1], [0, 0, 1, 1], [], []>} : vector<128x16xf32>, vector<16x10xf32>, vector<128x10xf32> -> vector<128x10xf32>
    %c0_15 = arith.constant 0 : index
    %c0_16 = arith.constant 0 : index
    %40 = vector.load %arg7[%c0_15, %c0_16] : memref<1x10xf32, #tpu.memory_space<vmem>>, vector<1x10xf32>
    %41 = vector.broadcast %40 : vector<1x10xf32> to vector<128x10xf32>
    %42 = arith.addf %39, %41 : vector<128x10xf32>
    %cst_17 = arith.constant 0.000000e+00 : f32
    %43 = vector.broadcast %cst_17 : f32 to vector<128x10xf32>
    %44 = arith.maximumf %42, %43 : vector<128x10xf32>
    %c0_18 = arith.constant 0 : index
    %c0_19 = arith.constant 0 : index
    %45 = vector.load %arg8[%c0_18, %c0_19] : memref<10x2xf32, #tpu.memory_space<vmem>>, vector<10x2xf32>
    %cst_20 = arith.constant dense<0.000000e+00> : vector<128x2xf32>
    %46 = tpu.matmul %44, %45, %cst_20 {dimension_numbers = #tpu.dot_dimension_numbers<[1], [0], [0], [1], [0, 0, 1, 1], [], []>} : vector<128x10xf32>, vector<10x2xf32>, vector<128x2xf32> -> vector<128x2xf32>
    %c0_21 = arith.constant 0 : index
    %c0_22 = arith.constant 0 : index
    %47 = vector.load %arg9[%c0_21, %c0_22] : memref<1x2xf32, #tpu.memory_space<vmem>>, vector<1x2xf32>
    %48 = vector.broadcast %47 : vector<1x2xf32> to vector<128x2xf32>
    %49 = arith.addf %46, %48 : vector<128x2xf32>
    %c0_23 = arith.constant 0 : index
    %c0_24 = arith.constant 0 : index
    %50 = vector.load %arg10[%c0_23, %c0_24] : memref<128x2xf32, #tpu.memory_space<vmem>>, vector<128x2xf32>
    tpu.vector_store %arg10[%c0_23, %c0_24], %49 {strides = array<i32>} : memref<128x2xf32, #tpu.memory_space<vmem>>, vector<128x2xf32>,
    return
  }
  func.func @transform_0(%arg0: i32) -> (i32, i32) {
    %c16_i32 = arith.constant 16 : i32
    %0 = arith.muli %arg0, %c16_i32 : i32
    %c1_i32 = arith.constant 1 : i32
    %1 = arith.subi %0, %c1_i32 : i32
    %c0_i32 = arith.constant 0 : i32
    %2 = arith.maxsi %1, %c0_i32 : i32
    %c0_i32_0 = arith.constant 0 : i32
    %c0_i32_1 = arith.constant 0 : i32
    return %2, %c0_i32_0 : i32, i32
  }
  func.func @transform_1(%arg0: i32) -> (i32, i32) {
    %c0_i32 = arith.constant 0 : i32
    %c0_i32_0 = arith.constant 0 : i32
    return %arg0, %c0_i32 : i32, i32
  }
  func.func @transform_2(%arg0: i32) -> (i32, i32) {
    %c1_i32 = arith.constant 1 : i32
    %0 = arith.addi %arg0, %c1_i32 : i32
    %c16_i32 = arith.constant 16 : i32
    %1 = arith.muli %0, %c16_i32 : i32
    %c63_i32 = arith.constant 63 : i32
    %2 = arith.minsi %1, %c63_i32 : i32
    %c0_i32 = arith.constant 0 : i32
    %c0_i32_0 = arith.constant 0 : i32
    return %2, %c0_i32 : i32, i32
  }
  func.func @transform_3(%arg0: i32) -> (i32, i32) {
    %c0_i32 = arith.constant 0 : i32
    %c0_i32_0 = arith.constant 0 : i32
    %c0_i32_1 = arith.constant 0 : i32
    return %c0_i32, %c0_i32_0 : i32, i32
  }
  func.func @transform_4(%arg0: i32) -> (i32, i32) {
    %c0_i32 = arith.constant 0 : i32
    %c0_i32_0 = arith.constant 0 : i32
    %c0_i32_1 = arith.constant 0 : i32
    return %c0_i32, %c0_i32_0 : i32, i32
  }
  func.func @transform_5(%arg0: i32) -> (i32, i32) {
    %c0_i32 = arith.constant 0 : i32
    %c0_i32_0 = arith.constant 0 : i32
    %c0_i32_1 = arith.constant 0 : i32
    return %c0_i32, %c0_i32_0 : i32, i32
  }
  func.func @transform_6(%arg0: i32) -> (i32, i32) {
    %c0_i32 = arith.constant 0 : i32
    %c0_i32_0 = arith.constant 0 : i32
    %c0_i32_1 = arith.constant 0 : i32
    return %c0_i32, %c0_i32_0 : i32, i32
  }
  func.func @transform_7(%arg0: i32) -> (i32, i32) {
    %c0_i32 = arith.constant 0 : i32
    %c0_i32_0 = arith.constant 0 : i32
    %c0_i32_1 = arith.constant 0 : i32
    return %c0_i32, %c0_i32_0 : i32, i32
  }
  func.func @transform_8(%arg0: i32) -> (i32, i32) {
    %c0_i32 = arith.constant 0 : i32
    %c0_i32_0 = arith.constant 0 : i32
    %c0_i32_1 = arith.constant 0 : i32
    return %c0_i32, %c0_i32_0 : i32, i32
  }
  func.func @transform_9(%arg0: i32) -> (i32, i32) {
    %c0_i32 = arith.constant 0 : i32
    %c0_i32_0 = arith.constant 0 : i32
    return %arg0, %c0_i32 : i32, i32
  }
}

</mosaic_0001>

<llo_original>
// kernel: tpu_custom_call.1
$region0: #{tpu_custom_call.1}
  #allocation0 [shape = 'u32[]', space=smem, size = 0x4, offset = 0x4, fixed_abs, tag = 'smem constant byte address 0x4 - core index']
  #allocation1 [shape = 'u32[144,128]{1,0:T(1,128)}', space=vmem, size = 0x12000, scoped, tag = 'internal scratch']
  %s0 = inlined_call_operand.vmem [shape: f32[512,686], index: 0, kind: input, shape index: {}]
  %s1 = inlined_call_operand.vmem [shape: f32[512,686], index: 1, kind: input, shape index: {}]
  %s2 = inlined_call_operand.vmem [shape: f32[512,686], index: 2, kind: input, shape index: {}]
  %s3 = inlined_call_operand.vmem [shape: bf16[686,288], index: 3, kind: input, shape index: {}]
  %s4 = inlined_call_operand.vmem [shape: f32[1,32], index: 4, kind: input, shape index: {}]
  %s5 = inlined_call_operand.vmem [shape: f32[16,10], index: 5, kind: input, shape index: {}]
  %s6 = inlined_call_operand.vmem [shape: f32[1,10], index: 6, kind: input, shape index: {}]
  %s7 = inlined_call_operand.vmem [shape: f32[10,2], index: 7, kind: input, shape index: {}]
  %s8 = inlined_call_operand.vmem [shape: f32[1,2], index: 8, kind: input, shape index: {}]
  %s9 = inlined_call_operand.vmem [shape: f32[512,2], index: 9, kind: output, shape index: {}]
  %s10 = sld [smem:[#allocation0]]
  $region69: #{tpu_custom_call.1} parent=0
    _
  %s12 = ssub.s32 1, %s10
  %s13 = scalar_select 0, %s12, %s10
  loop: start=0, step=1, limit=6
  $region2: #{tpu_custom_call.1} parent=0 // loop_pre_header
    _
  $region3: #{tpu_custom_call.1} parent=0 // loop_header
    %s15 = sphi 0, %s19
    %p16 = scmp.ge.s32.totalorder %s15, 6
    %s33 = sphi 0, %s35
    %s36 = sphi 0, %s33
    %s37 = sphi 0, %s36
    %s53 = sphi 0, %s37
    %s59 = sphi 0, %s61
    %s62 = sphi 0, %s59
    %s63 = sphi 0, %s62
    %s79 = sphi 0, %s63
    %s93 = sphi 0, %s95
    %s96 = sphi 0, %s93
    %s97 = sphi 0, %s96
    %s113 = sphi 0, %s97
    %s117 = sphi 0, %s117
    %s119 = sphi 0, %s117
    %s120 = sphi 0, %s119
    %s134 = sphi 0, %s120
    %s138 = sphi 0, %s138
    %s140 = sphi 0, %s138
    %s141 = sphi 0, %s140
    %s155 = sphi 0, %s141
    %s159 = sphi 0, %s159
    %s161 = sphi 0, %s159
    %s162 = sphi 0, %s161
    %s176 = sphi 0, %s162
    %s180 = sphi 0, %s180
    %s182 = sphi 0, %s180
    %s183 = sphi 0, %s182
    %s197 = sphi 0, %s183
    %s201 = sphi 0, %s201
    %s203 = sphi 0, %s201
    %s204 = sphi 0, %s203
    %s218 = sphi 0, %s204
    %s222 = sphi 0, %s222
    %s224 = sphi 0, %s222
    %s225 = sphi 0, %s224
    %s239 = sphi 0, %s225
    %s245 = sphi 0, %s247
    %s248 = sphi 0, %s245
    %s249 = sphi 0, %s248
    %s265 = sphi 0, %s249
  $region4: #{tpu_custom_call.1} parent=0 // loop_header_branch
    %18 = sbr.rel (%p16) target = $region8
  $region5: #{tpu_custom_call.1} parent=0 // loop_body
    %s20 = ssub.s32 %s15, 1
    %s21 = ssub.s32 %s15, 2
    %s22 = sadd.s32 %s15, 1
    %s23 = smul.u32 %s15, 16
    %s24 = ssub.s32 %s23, 1
    %p25 = scmp.gt.s32.totalorder %s24, 0
    %s26 = scalar_select %p25, %s24, 0
    %s27 = smul.u32 %s22, 16
    %s28 = ssub.s32 %s27, 1
    %p29 = scmp.gt.s32.totalorder %s28, 0
    %s30 = scalar_select %p29, %s28, 0
    %s31 = ssub.s32 %s26, %s30
    %p32 = scmp.eq.s32.totalorder %s31, 0
    %s34 = sadd.s32 %s33, 1
    %s35 = scalar_select %p32, %s33, %s34
    %p38 = pneg %p32
    %p39 = scmp.eq.s32.totalorder %s15, 3
    %p40 = por %p38, %p39
    %p41 = scmp.ne.s32.totalorder %s33, %s36
    %p42 = scmp.eq.s32.totalorder %s15, 0
    %p43 = por %p41, %p42
    %p44 = scmp.ne.s32.totalorder %s33, %s36
    %p45 = scmp.eq.s32.totalorder %s20, 3
    %p46 = por %p44, %p45
    %p47 = scmp.ne.s32.totalorder %s36, %s37
    %p48 = scmp.eq.s32.totalorder %s20, 0
    %p49 = por %p47, %p48
    %p50 = scmp.ne.s32.totalorder %s36, %s37
    %p51 = scmp.eq.s32.totalorder %s21, 3
    %p52 = por %p50, %p51
    %p54 = scmp.ne.s32.totalorder %s37, %s53
    %p55 = scmp.eq.s32.totalorder %s21, 0
    %p56 = por %p54, %p55
    %s57 = ssub.s32 %s15, %s22
    %p58 = scmp.eq.s32.totalorder %s57, 0
    %s60 = sadd.s32 %s59, 1
    %s61 = scalar_select %p58, %s59, %s60
    %p64 = pneg %p58
    %p65 = scmp.eq.s32.totalorder %s15, 3
    %p66 = por %p64, %p65
    %p67 = scmp.ne.s32.totalorder %s59, %s62
    %p68 = scmp.eq.s32.totalorder %s15, 0
    %p69 = por %p67, %p68
    %p70 = scmp.ne.s32.totalorder %s59, %s62
    %p71 = scmp.eq.s32.totalorder %s20, 3
    %p72 = por %p70, %p71
    %p73 = scmp.ne.s32.totalorder %s62, %s63
    %p74 = scmp.eq.s32.totalorder %s20, 0
    %p75 = por %p73, %p74
    %p76 = scmp.ne.s32.totalorder %s62, %s63
    %p77 = scmp.eq.s32.totalorder %s21, 3
    %p78 = por %p76, %p77
    %p80 = scmp.ne.s32.totalorder %s63, %s79
    %p81 = scmp.eq.s32.totalorder %s21, 0
    %p82 = por %p80, %p81
    %s83 = sadd.s32 %s15, 1
    %s84 = smul.u32 %s83, 16
    %p85 = scmp.lt.s32.totalorder %s84, 63
    %s86 = scalar_select %p85, %s84, 63
    %s87 = sadd.s32 %s22, 1
    %s88 = smul.u32 %s87, 16
    %p89 = scmp.lt.s32.totalorder %s88, 63
    %s90 = scalar_select %p89, %s88, 63
    %s91 = ssub.s32 %s86, %s90
    %p92 = scmp.eq.s32.totalorder %s91, 0
    %s94 = sadd.s32 %s93, 1
    %s95 = scalar_select %p92, %s93, %s94
    %p98 = pneg %p92
    %p99 = scmp.eq.s32.totalorder %s15, 3
    %p100 = por %p98, %p99
    %p101 = scmp.ne.s32.totalorder %s93, %s96
    %p102 = scmp.eq.s32.totalorder %s15, 0
    %p103 = por %p101, %p102
    %p104 = scmp.ne.s32.totalorder %s93, %s96
    %p105 = scmp.eq.s32.totalorder %s20, 3
    %p106 = por %p104, %p105
    %p107 = scmp.ne.s32.totalorder %s96, %s97
    %p108 = scmp.eq.s32.totalorder %s20, 0
    %p109 = por %p107, %p108
    %p110 = scmp.ne.s32.totalorder %s96, %s97
    %p111 = scmp.eq.s32.totalorder %s21, 3
    %p112 = por %p110, %p111
    %p114 = scmp.ne.s32.totalorder %s97, %s113
    %p115 = scmp.eq.s32.totalorder %s21, 0
    %p116 = por %p114, %p115
    %s118 = sadd.s32 %s117, 1
    %p121 = scmp.eq.s32.totalorder %s15, 3
    %p122 = scmp.ne.s32.totalorder %s117, %s119
    %p123 = scmp.eq.s32.totalorder %s15, 0
    %p124 = por %p122, %p123
    %p125 = scmp.ne.s32.totalorder %s117, %s119
    %p126 = scmp.eq.s32.totalorder %s20, 3
    %p127 = por %p125, %p126
    %p128 = scmp.ne.s32.totalorder %s119, %s120
    %p129 = scmp.eq.s32.totalorder %s20, 0
    %p130 = por %p128, %p129
    %p131 = scmp.ne.s32.totalorder %s119, %s120
    %p132 = scmp.eq.s32.totalorder %s21, 3
    %p133 = por %p131, %p132
    %p135 = scmp.ne.s32.totalorder %s120, %s134
    %p136 = scmp.eq.s32.totalorder %s21, 0
    %p137 = por %p135, %p136
    %s139 = sadd.s32 %s138, 1
    %p142 = scmp.eq.s32.totalorder %s15, 3
    %p143 = scmp.ne.s32.totalorder %s138, %s140
    %p144 = scmp.eq.s32.totalorder %s15, 0
    %p145 = por %p143, %p144
    %p146 = scmp.ne.s32.totalorder %s138, %s140
    %p147 = scmp.eq.s32.totalorder %s20, 3
    %p148 = por %p146, %p147
    %p149 = scmp.ne.s32.totalorder %s140, %s141
    %p150 = scmp.eq.s32.totalorder %s20, 0
    %p151 = por %p149, %p150
    %p152 = scmp.ne.s32.totalorder %s140, %s141
    %p153 = scmp.eq.s32.totalorder %s21, 3
    %p154 = por %p152, %p153
    %p156 = scmp.ne.s32.totalorder %s141, %s155
    %p157 = scmp.eq.s32.totalorder %s21, 0
    %p158 = por %p156, %p157
    %s160 = sadd.s32 %s159, 1
    %p163 = scmp.eq.s32.totalorder %s15, 3
    %p164 = scmp.ne.s32.totalorder %s159, %s161
    %p165 = scmp.eq.s32.totalorder %s15, 0
    %p166 = por %p164, %p165
    %p167 = scmp.ne.s32.totalorder %s159, %s161
    %p168 = scmp.eq.s32.totalorder %s20, 3
    %p169 = por %p167, %p168
    %p170 = scmp.ne.s32.totalorder %s161, %s162
    %p171 = scmp.eq.s32.totalorder %s20, 0
    %p172 = por %p170, %p171
    %p173 = scmp.ne.s32.totalorder %s161, %s162
    %p174 = scmp.eq.s32.totalorder %s21, 3
    %p175 = por %p173, %p174
    %p177 = scmp.ne.s32.totalorder %s162, %s176
    %p178 = scmp.eq.s32.totalorder %s21, 0
    %p179 = por %p177, %p178
    %s181 = sadd.s32 %s180, 1
    %p184 = scmp.eq.s32.totalorder %s15, 3
    %p185 = scmp.ne.s32.totalorder %s180, %s182
    %p186 = scmp.eq.s32.totalorder %s15, 0
    %p187 = por %p185, %p186
    %p188 = scmp.ne.s32.totalorder %s180, %s182
    %p189 = scmp.eq.s32.totalorder %s20, 3
    %p190 = por %p188, %p189
    %p191 = scmp.ne.s32.totalorder %s182, %s183
    %p192 = scmp.eq.s32.totalorder %s20, 0
    %p193 = por %p191, %p192
    %p194 = scmp.ne.s32.totalorder %s182, %s183
    %p195 = scmp.eq.s32.totalorder %s21, 3
    %p196 = por %p194, %p195
    %p198 = scmp.ne.s32.totalorder %s183, %s197
    %p199 = scmp.eq.s32.totalorder %s21, 0
    %p200 = por %p198, %p199
    %s202 = sadd.s32 %s201, 1
    %p205 = scmp.eq.s32.totalorder %s15, 3
    %p206 = scmp.ne.s32.totalorder %s201, %s203
    %p207 = scmp.eq.s32.totalorder %s15, 0
    %p208 = por %p206, %p207
    %p209 = scmp.ne.s32.totalorder %s201, %s203
    %p210 = scmp.eq.s32.totalorder %s20, 3
    %p211 = por %p209, %p210
    %p212 = scmp.ne.s32.totalorder %s203, %s204
    %p213 = scmp.eq.s32.totalorder %s20, 0
    %p214 = por %p212, %p213
    %p215 = scmp.ne.s32.totalorder %s203, %s204
    %p216 = scmp.eq.s32.totalorder %s21, 3
    %p217 = por %p215, %p216
    %p219 = scmp.ne.s32.totalorder %s204, %s218
    %p220 = scmp.eq.s32.totalorder %s21, 0
    %p221 = por %p219, %p220
    %s223 = sadd.s32 %s222, 1
    %p226 = scmp.eq.s32.totalorder %s15, 3
    %p227 = scmp.ne.s32.totalorder %s222, %s224
    %p228 = scmp.eq.s32.totalorder %s15, 0
    %p229 = por %p227, %p228
    %p230 = scmp.ne.s32.totalorder %s222, %s224
    %p231 = scmp.eq.s32.totalorder %s20, 3
    %p232 = por %p230, %p231
    %p233 = scmp.ne.s32.totalorder %s224, %s225
    %p234 = scmp.eq.s32.totalorder %s20, 0
    %p235 = por %p233, %p234
    %p236 = scmp.ne.s32.totalorder %s224, %s225
    %p237 = scmp.eq.s32.totalorder %s21, 3
    %p238 = por %p236, %p237
    %p240 = scmp.ne.s32.totalorder %s225, %s239
    %p241 = scmp.eq.s32.totalorder %s21, 0
    %p242 = por %p240, %p241
    %s243 = ssub.s32 %s15, %s22
    %p244 = scmp.eq.s32.totalorder %s243, 0
    %s246 = sadd.s32 %s245, 1
    %s247 = scalar_select %p244, %s245, %s246
    %p250 = pneg %p244
    %p251 = scmp.eq.s32.totalorder %s15, 3
    %p252 = por %p250, %p251
    %p253 = scmp.ne.s32.totalorder %s245, %s248
    %p254 = scmp.eq.s32.totalorder %s15, 0
    %p255 = por %p253, %p254
    %p256 = scmp.ne.s32.totalorder %s245, %s248
    %p257 = scmp.eq.s32.totalorder %s20, 3
    %p258 = por %p256, %p257
    %p259 = scmp.ne.s32.totalorder %s248, %s249
    %p260 = scmp.eq.s32.totalorder %s20, 0
    %p261 = por %p259, %p260
    %p262 = scmp.ne.s32.totalorder %s248, %s249
    %p263 = scmp.eq.s32.totalorder %s21, 3
    %p264 = por %p262, %p263
    %p266 = scmp.ne.s32.totalorder %s249, %s265
    %p267 = scmp.eq.s32.totalorder %s21, 0
    %p268 = por %p266, %p267
    %p269 = scmp.le.s32.totalorder 1, %s15
    %p270 = scmp.lt.s32.totalorder %s15, 5
    %p271 = pnand %p269, %p270
    %p272 = pneg %p271
    // Predicated region
    $region9: #{tpu_custom_call.1} parent=5 // pred_check
      _
    $region10: #{tpu_custom_call.1} parent=5 // pred_check_branch
      %274 = sbr.rel (%p271) target = $region12
    $region11: #{tpu_custom_call.1} parent=5 // pred_region
      %s275 = ssub.s32 %s15, 1
      // Predicated region
      $region13: #{tpu_custom_call.1} parent=11 // pred_check
        %p276 = pneg %p130
      $region14: #{tpu_custom_call.1} parent=11 // pred_check_branch
        %278 = sbr.rel (%p276) target = $region16
      $region15: #{tpu_custom_call.1} parent=11 // pred_region
        _
      $region16: #{tpu_custom_call.1} parent=11 // pred_fallthru
        _
      // Predicated region
      $region17: #{tpu_custom_call.1} parent=11 // pred_check
        %p279 = pneg %p151
      $region18: #{tpu_custom_call.1} parent=11 // pred_check_branch
        %281 = sbr.rel (%p279) target = $region20
      $region19: #{tpu_custom_call.1} parent=11 // pred_region
        _
      $region20: #{tpu_custom_call.1} parent=11 // pred_fallthru
        _
      // Predicated region
      $region21: #{tpu_custom_call.1} parent=11 // pred_check
        %p282 = pneg %p172
      $region22: #{tpu_custom_call.1} parent=11 // pred_check_branch
        %284 = sbr.rel (%p282) target = $region24
      $region23: #{tpu_custom_call.1} parent=11 // pred_region
        _
      $region24: #{tpu_custom_call.1} parent=11 // pred_fallthru
        _
      // Predicated region
      $region25: #{tpu_custom_call.1} parent=11 // pred_check
        %p285 = pneg %p193
      $region26: #{tpu_custom_call.1} parent=11 // pred_check_branch
        %287 = sbr.rel (%p285) target = $region28
      $region27: #{tpu_custom_call.1} parent=11 // pred_region
        _
      $region28: #{tpu_custom_call.1} parent=11 // pred_fallthru
        _
      // Predicated region
      $region29: #{tpu_custom_call.1} parent=11 // pred_check
        %p288 = pneg %p214
      $region30: #{tpu_custom_call.1} parent=11 // pred_check_branch
        %290 = sbr.rel (%p288) target = $region32
      $region31: #{tpu_custom_call.1} parent=11 // pred_region
        _
      $region32: #{tpu_custom_call.1} parent=11 // pred_fallthru
        _
      // Predicated region
      $region33: #{tpu_custom_call.1} parent=11 // pred_check
        %p291 = pneg %p235
      $region34: #{tpu_custom_call.1} parent=11 // pred_check_branch
        %293 = sbr.rel (%p291) target = $region36
      $region35: #{tpu_custom_call.1} parent=11 // pred_region
        _
      $region36: #{tpu_custom_call.1} parent=11 // pred_fallthru
        _
    $region12: #{tpu_custom_call.1} parent=5 // pred_fallthru
      _
    %p294 = scmp.lt.s32.totalorder %s15, 4
    // Predicated region
    $region37: #{tpu_custom_call.1} parent=5 // pred_check
      %p295 = pneg %p294
    $region38: #{tpu_custom_call.1} parent=5 // pred_check_branch
      %297 = sbr.rel (%p295) target = $region40
    $region39: #{tpu_custom_call.1} parent=5 // pred_region
      // Predicated region
      $region41: #{tpu_custom_call.1} parent=39 // pred_check
        %p298 = pneg %p43
      $region42: #{tpu_custom_call.1} parent=39 // pred_check_branch
        %300 = sbr.rel (%p298) target = $region44
      $region43: #{tpu_custom_call.1} parent=39 // pred_region
        %s301 = smul.u32 %s15, 16
        %s302 = ssub.s32 %s301, 1
        %p303 = scmp.gt.s32.totalorder %s302, 0
        %s304 = scalar_select %p303, %s302, 0
        %p305 = scmp.lt.s32.totalorder %s304, 63
        %s306 = scalar_select %p305, %s304, 63
        %s307 = smul.addr %s306, 6
        %s308 = smul.addr %s307, 8
        %s309 = scalar_lea.vmem %s0, %s308
        %s310 = smul.u32 %s15, 16
        %s311 = ssub.s32 %s310, 1
        %p312 = scmp.gt.s32.totalorder %s311, 0
        %s313 = scalar_select %p312, %s311, 0
      $region44: #{tpu_custom_call.1} parent=39 // pred_fallthru
        _
      // Predicated region
      $region45: #{tpu_custom_call.1} parent=39 // pred_check
        %p314 = pneg %p69
      $region46: #{tpu_custom_call.1} parent=39 // pred_check_branch
        %316 = sbr.rel (%p314) target = $region48
      $region47: #{tpu_custom_call.1} parent=39 // pred_region
        %s317 = smul.u32 16, %s15
        %p318 = scmp.lt.s32.totalorder %s317, 63
        %s319 = scalar_select %p318, %s317, 63
        %s320 = smul.addr %s319, 6
        %s321 = smul.addr %s320, 8
        %s322 = scalar_lea.vmem %s1, %s321
        %s323 = smul.u32 16, %s15
      $region48: #{tpu_custom_call.1} parent=39 // pred_fallthru
        _
      // Predicated region
      $region49: #{tpu_custom_call.1} parent=39 // pred_check
        %p324 = pneg %p103
      $region50: #{tpu_custom_call.1} parent=39 // pred_check_branch
        %326 = sbr.rel (%p324) target = $region52
      $region51: #{tpu_custom_call.1} parent=39 // pred_region
        %s327 = sadd.s32 %s15, 1
        %s328 = smul.u32 %s327, 16
        %p329 = scmp.lt.s32.totalorder %s328, 63
        %s330 = scalar_select %p329, %s328, 63
        %p331 = scmp.lt.s32.totalorder %s330, 63
        %s332 = scalar_select %p331, %s330, 63
        %s333 = smul.addr %s332, 6
        %s334 = smul.addr %s333, 8
        %s335 = scalar_lea.vmem %s2, %s334
        %s336 = sadd.s32 %s15, 1
        %s337 = smul.u32 %s336, 16
        %p338 = scmp.lt.s32.totalorder %s337, 63
        %s339 = scalar_select %p338, %s337, 63
      $region52: #{tpu_custom_call.1} parent=39 // pred_fallthru
        _
    $region40: #{tpu_custom_call.1} parent=5 // pred_fallthru
      _
    %p340 = scmp.le.s32.totalorder 1, %s15
    %p341 = scmp.lt.s32.totalorder %s15, 5
    %p342 = pnand %p340, %p341
    %p343 = pneg %p342
    // Predicated region
    $region53: #{tpu_custom_call.1} parent=5 // pred_check
      _
    $region54: #{tpu_custom_call.1} parent=5 // pred_check_branch
      %345 = sbr.rel (%p342) target = $region56
    $region55: #{tpu_custom_call.1} parent=5 // pred_region
      %s346 = ssub.s32 %s15, 1
      %s347 = smul.u32 %s20, 16
      %s348 = ssub.s32 %s347, 1
      %p349 = scmp.gt.s32.totalorder %s348, 0
      %s350 = scalar_select %p349, %s348, 0
      %p351 = scmp.lt.s32.totalorder %s350, 63
      %s352 = scalar_select %p351, %s350, 63
      %s353 = smul.addr %s352, 6
      %s354 = smul.addr %s353, 8
      %s355 = scalar_lea.vmem %s0, %s354
      %p356 = pneg %p49
      %p357 = pneg %p46
      %s358 = smul.u32 16, %s20
      %p359 = scmp.lt.s32.totalorder %s358, 63
      %s360 = scalar_select %p359, %s358, 63
      %s361 = smul.addr %s360, 6
      %s362 = smul.addr %s361, 8
      %s363 = scalar_lea.vmem %s1, %s362
      %p364 = pneg %p75
      %p365 = pneg %p72
      %s366 = sadd.s32 %s20, 1
      %s367 = smul.u32 %s366, 16
      %p368 = scmp.lt.s32.totalorder %s367, 63
      %s369 = scalar_select %p368, %s367, 63
      %p370 = scmp.lt.s32.totalorder %s369, 63
      %s371 = scalar_select %p370, %s369, 63
      %s372 = smul.addr %s371, 6
      %s373 = smul.addr %s372, 8
      %s374 = scalar_lea.vmem %s2, %s373
      %p375 = pneg %p109
      %p376 = pneg %p106
      %p377 = pneg %p130
      %p378 = pneg %p127
      %p379 = pneg %p151
      %p380 = pneg %p148
      %p381 = pneg %p172
      %p382 = pneg %p169
      %p383 = pneg %p193
      %p384 = pneg %p190
      %p385 = pneg %p214
      %p386 = pneg %p211
      %p387 = pneg %p235
      %p388 = pneg %p232
      %p389 = pneg %p261
      %p390 = pneg %p258
      %s391 = smul.u32 16, %s20
      %p392 = scmp.lt.s32.totalorder %s391, 63
      %s393 = scalar_select %p392, %s391, 63
      %s394 = smul.addr %s393, 8
      %s395 = scalar_lea.vmem %s9, %s394
      %s396 = smul.u32 %s20, 16
      %s397 = ssub.s32 %s396, 1
      %p398 = scmp.gt.s32.totalorder %s397, 0
      %s399 = scalar_select %p398, %s397, 0
      %p400 = scmp.lt.s32.totalorder %s399, 63
      %s401 = scalar_select %p400, %s399, 63
      %s402 = smul.addr %s401, 6
      %s403 = smul.addr %s402, 8
      %s404 = scalar_lea.vmem %s0, %s403
      %s405 = smul.u32 %s20, 16
      %s406 = ssub.s32 %s405, 1
      %p407 = scmp.gt.s32.totalorder %s406, 0
      %s408 = scalar_select %p407, %s406, 0
      %s409 = smul.u32 16, %s20
      %p410 = scmp.lt.s32.totalorder %s409, 63
      %s411 = scalar_select %p410, %s409, 63
      %s412 = smul.addr %s411, 6
      %s413 = smul.addr %s412, 8
      %s414 = scalar_lea.vmem %s1, %s413
      %s415 = smul.u32 16, %s20
      %s416 = sadd.s32 %s20, 1
      %s417 = smul.u32 %s416, 16
      %p418 = scmp.lt.s32.totalorder %s417, 63
      %s419 = scalar_select %p418, %s417, 63
      %p420 = scmp.lt.s32.totalorder %s419, 63
      %s421 = scalar_select %p420, %s419, 63
      %s422 = smul.addr %s421, 6
      %s423 = smul.addr %s422, 8
      %s424 = scalar_lea.vmem %s2, %s423
      %s425 = sadd.s32 %s20, 1
      %s426 = smul.u32 %s425, 16
      %p427 = scmp.lt.s32.totalorder %s426, 63
      %s428 = scalar_select %p427, %s426, 63
      %s429 = smul.u32 16, %s20
      %p430 = scmp.lt.s32.totalorder %s429, 63
      %s431 = scalar_select %p430, %s429, 63
      %s432 = smul.addr %s431, 8
      %s433 = scalar_lea.vmem %s9, %s432
      %s434 = smul.u32 16, %s20
      %v436 = vld [vmem:[%s404] sm:$0xff]
      %v437 = vld [vmem:[%s404 + $0x8] sm:$0xff]
      %v438 = vld [vmem:[%s404 + $0x10] sm:$0xff]
      %v439 = vld [vmem:[%s404 + $0x18] sm:$0xff]
      %v440 = vld [vmem:[%s404 + $0x20] sm:$0xff]
      %v441 = vld [vmem:[%s404 + $0x28] sm:$0xff]
      %v442 = vld [vmem:[%s424] sm:$0xff]
      %v443 = vld [vmem:[%s424 + $0x8] sm:$0xff]
      %v444 = vld [vmem:[%s424 + $0x10] sm:$0xff]
      %v445 = vld [vmem:[%s424 + $0x18] sm:$0xff]
      %v446 = vld [vmem:[%s424 + $0x20] sm:$0xff]
      %v447 = vld [vmem:[%s424 + $0x28] sm:$0xff]
      %p448 = scmp.eq.s32.totalorder %s20, 0
      %s449 = scalar_select %p448, 1, 0
      %v450 = vstv %s449
      %vm451 = vcmp.eq.s32.totalorder %v450, 1
      %v452 = vsel %vm451, 0.0, %v436
      %v453 = vsel %vm451, 0.0, %v437
      %v454 = vsel %vm451, 0.0, %v438
      %v455 = vsel %vm451, 0.0, %v439
      %v456 = vsel %vm451, 0.0, %v440
      %v457 = vsel %vm451, 0.0, %v441
      %p458 = scmp.eq.s32.totalorder %s20, 3
      %s459 = scalar_select %p458, 1, 0
      %v460 = vstv %s459
      %vm461 = vcmp.eq.s32.totalorder %v460, 1
      %v462 = vsel %vm461, 0.0, %v442
      %v463 = vsel %vm461, 0.0, %v443
      %v464 = vsel %vm461, 0.0, %v444
      %v465 = vsel %vm461, 0.0, %v445
      %v466 = vsel %vm461, 0.0, %v446
      %v467 = vsel %vm461, 0.0, %v447
      %v468 = vld [vmem:[%s414] sm:$0xff]
      %v469 = vld [vmem:[%s414 + $0x8] sm:$0xff]
      %v470 = vld [vmem:[%s414 + $0x10] sm:$0xff]
      %v471 = vld [vmem:[%s414 + $0x18] sm:$0xff]
      %v472 = vld [vmem:[%s414 + $0x20] sm:$0xff]
      %v473 = vld [vmem:[%s414 + $0x28] sm:$0xff]
      %v474 = vld [vmem:[%s414 + $0x30] sm:$0xff]
      %v475 = vld [vmem:[%s414 + $0x38] sm:$0xff]
      %v476 = vld [vmem:[%s414 + $0x40] sm:$0xff]
      %v477 = vld [vmem:[%s414 + $0x48] sm:$0xff]
      %v478 = vld [vmem:[%s414 + $0x50] sm:$0xff]
      %v479 = vld [vmem:[%s414 + $0x58] sm:$0xff]
      %v480 = vld [vmem:[%s414 + $0x60] sm:$0xff]
      %v481 = vld [vmem:[%s414 + $0x68] sm:$0xff]
      %v482 = vld [vmem:[%s414 + $0x70] sm:$0xff]
      %v483 = vld [vmem:[%s414 + $0x78] sm:$0xff]
      %v484 = vld [vmem:[%s414 + $0x80] sm:$0xff]
      %v485 = vld [vmem:[%s414 + $0x88] sm:$0xff]
      %v486 = vld [vmem:[%s414 + $0x90] sm:$0xff]
      %v487 = vld [vmem:[%s414 + $0x98] sm:$0xff]
      %v488 = vld [vmem:[%s414 + $0xa0] sm:$0xff]
      %v489 = vld [vmem:[%s414 + $0xa8] sm:$0xff]
      %v490 = vld [vmem:[%s414 + $0xb0] sm:$0xff]
      %v491 = vld [vmem:[%s414 + $0xb8] sm:$0xff]
      %v492 = vld [vmem:[%s414 + $0xc0] sm:$0xff]
      %v493 = vld [vmem:[%s414 + $0xc8] sm:$0xff]
      %v494 = vld [vmem:[%s414 + $0xd0] sm:$0xff]
      %v495 = vld [vmem:[%s414 + $0xd8] sm:$0xff]
      %v496 = vld [vmem:[%s414 + $0xe0] sm:$0xff]
      %v497 = vld [vmem:[%s414 + $0xe8] sm:$0xff]
      %v498 = vld [vmem:[%s414 + $0xf0] sm:$0xff]
      %v499 = vld [vmem:[%s414 + $0xf8] sm:$0xff]
      %v500 = vld [vmem:[%s414 + $0x100] sm:$0xff]
      %v501 = vld [vmem:[%s414 + $0x108] sm:$0xff]
      %v502 = vld [vmem:[%s414 + $0x110] sm:$0xff]
      %v503 = vld [vmem:[%s414 + $0x118] sm:$0xff]
      %v504 = vld [vmem:[%s414 + $0x120] sm:$0xff]
      %v505 = vld [vmem:[%s414 + $0x128] sm:$0xff]
      %v506 = vld [vmem:[%s414 + $0x130] sm:$0xff]
      %v507 = vld [vmem:[%s414 + $0x138] sm:$0xff]
      %v508 = vld [vmem:[%s414 + $0x140] sm:$0xff]
      %v509 = vld [vmem:[%s414 + $0x148] sm:$0xff]
      %v510 = vld [vmem:[%s414 + $0x150] sm:$0xff]
      %v511 = vld [vmem:[%s414 + $0x158] sm:$0xff]
      %v512 = vld [vmem:[%s414 + $0x160] sm:$0xff]
      %v513 = vld [vmem:[%s414 + $0x168] sm:$0xff]
      %v514 = vld [vmem:[%s414 + $0x170] sm:$0xff]
      %v515 = vld [vmem:[%s414 + $0x178] sm:$0xff]
      %v516 = vld [vmem:[%s414 + $0x180] sm:$0xff]
      %v517 = vld [vmem:[%s414 + $0x188] sm:$0xff]
      %v518 = vld [vmem:[%s414 + $0x190] sm:$0xff]
      %v519 = vld [vmem:[%s414 + $0x198] sm:$0xff]
      %v520 = vld [vmem:[%s414 + $0x1a0] sm:$0xff]
      %v521 = vld [vmem:[%s414 + $0x1a8] sm:$0xff]
      %v522 = vld [vmem:[%s414 + $0x1b0] sm:$0xff]
      %v523 = vld [vmem:[%s414 + $0x1b8] sm:$0xff]
      %v524 = vld [vmem:[%s414 + $0x1c0] sm:$0xff]
      %v525 = vld [vmem:[%s414 + $0x1c8] sm:$0xff]
      %v526 = vld [vmem:[%s414 + $0x1d0] sm:$0xff]
      %v527 = vld [vmem:[%s414 + $0x1d8] sm:$0xff]
      %v528 = vld [vmem:[%s414 + $0x1e0] sm:$0xff]
      %v529 = vld [vmem:[%s414 + $0x1e8] sm:$0xff]
      %v530 = vld [vmem:[%s414 + $0x1f0] sm:$0xff]
      %v531 = vld [vmem:[%s414 + $0x1f8] sm:$0xff]
      %v532 = vld [vmem:[%s414 + $0x200] sm:$0xff]
      %v533 = vld [vmem:[%s414 + $0x208] sm:$0xff]
      %v534 = vld [vmem:[%s414 + $0x210] sm:$0xff]
      %v535 = vld [vmem:[%s414 + $0x218] sm:$0xff]
      %v536 = vld [vmem:[%s414 + $0x220] sm:$0xff]
      %v537 = vld [vmem:[%s414 + $0x228] sm:$0xff]
      %v538 = vld [vmem:[%s414 + $0x230] sm:$0xff]
      %v539 = vld [vmem:[%s414 + $0x238] sm:$0xff]
      %v540 = vld [vmem:[%s414 + $0x240] sm:$0xff]
      %v541 = vld [vmem:[%s414 + $0x248] sm:$0xff]
      %v542 = vld [vmem:[%s414 + $0x250] sm:$0xff]
      %v543 = vld [vmem:[%s414 + $0x258] sm:$0xff]
      %v544 = vld [vmem:[%s414 + $0x260] sm:$0xff]
      %v545 = vld [vmem:[%s414 + $0x268] sm:$0xff]
      %v546 = vld [vmem:[%s414 + $0x270] sm:$0xff]
      %v547 = vld [vmem:[%s414 + $0x278] sm:$0xff]
      %v548 = vld [vmem:[%s414 + $0x280] sm:$0xff]
      %v549 = vld [vmem:[%s414 + $0x288] sm:$0xff]
      %v550 = vld [vmem:[%s414 + $0x290] sm:$0xff]
      %v551 = vld [vmem:[%s414 + $0x298] sm:$0xff]
      %v552 = vld [vmem:[%s414 + $0x2a0] sm:$0xff]
      %v553 = vld [vmem:[%s414 + $0x2a8] sm:$0xff]
      %v554 = vld [vmem:[%s414 + $0x2b0] sm:$0xff]
      %v555 = vld [vmem:[%s414 + $0x2b8] sm:$0xff]
      %v556 = vld [vmem:[%s414 + $0x2c0] sm:$0xff]
      %v557 = vld [vmem:[%s414 + $0x2c8] sm:$0xff]
      %v558 = vld [vmem:[%s414 + $0x2d0] sm:$0xff]
      %v559 = vld [vmem:[%s414 + $0x2d8] sm:$0xff]
      %v560 = vld [vmem:[%s414 + $0x2e0] sm:$0xff]
      %v561 = vld [vmem:[%s414 + $0x2e8] sm:$0xff]
      %v562 = vld [vmem:[%s414 + $0x2f0] sm:$0xff]
      %v563 = vld [vmem:[%s414 + $0x2f8] sm:$0xff]
      %v564 = vpack.c.bf16 %v468, %v452
      %v565 = vpack.c.bf16 %v469, %v453
      %v566 = vpack.c.bf16 %v470, %v454
      %v567 = vpack.c.bf16 %v471, %v455
      %v568 = vpack.c.bf16 %v472, %v456
      %v569 = vpack.c.bf16 %v473, %v457
      %v570 = vpack.c.bf16 %v480, %v474
      %v571 = vpack.c.bf16 %v481, %v475
      %v572 = vpack.c.bf16 %v482, %v476
      %v573 = vpack.c.bf16 %v483, %v477
      %v574 = vpack.c.bf16 %v484, %v478
      %v575 = vpack.c.bf16 %v485, %v479
      %v576 = vpack.c.bf16 %v492, %v486
      %v577 = vpack.c.bf16 %v493, %v487
      %v578 = vpack.c.bf16 %v494, %v488
      %v579 = vpack.c.bf16 %v495, %v489
      %v580 = vpack.c.bf16 %v496, %v490
      %v581 = vpack.c.bf16 %v497, %v491
      %v582 = vpack.c.bf16 %v504, %v498
      %v583 = vpack.c.bf16 %v505, %v499
      %v584 = vpack.c.bf16 %v506, %v500
      %v585 = vpack.c.bf16 %v507, %v501
      %v586 = vpack.c.bf16 %v508, %v502
      %v587 = vpack.c.bf16 %v509, %v503
      %v588 = vpack.c.bf16 %v516, %v510
      %v589 = vpack.c.bf16 %v517, %v511
      %v590 = vpack.c.bf16 %v518, %v512
      %v591 = vpack.c.bf16 %v519, %v513
      %v592 = vpack.c.bf16 %v520, %v514
      %v593 = vpack.c.bf16 %v521, %v515
      %v594 = vpack.c.bf16 %v528, %v522
      %v595 = vpack.c.bf16 %v529, %v523
      %v596 = vpack.c.bf16 %v530, %v524
      %v597 = vpack.c.bf16 %v531, %v525
      %v598 = vpack.c.bf16 %v532, %v526
      %v599 = vpack.c.bf16 %v533, %v527
      %v600 = vpack.c.bf16 %v540, %v534
      %v601 = vpack.c.bf16 %v541, %v535
      %v602 = vpack.c.bf16 %v542, %v536
      %v603 = vpack.c.bf16 %v543, %v537
      %v604 = vpack.c.bf16 %v544, %v538
      %v605 = vpack.c.bf16 %v545, %v539
      %v606 = vpack.c.bf16 %v552, %v546
      %v607 = vpack.c.bf16 %v553, %v547
      %v608 = vpack.c.bf16 %v554, %v548
      %v609 = vpack.c.bf16 %v555, %v549
      %v610 = vpack.c.bf16 %v556, %v550
      %v611 = vpack.c.bf16 %v557, %v551
      %v612 = vpack.c.bf16 %v462, %v558
      %v613 = vpack.c.bf16 %v463, %v559
      %v614 = vpack.c.bf16 %v464, %v560
      %v615 = vpack.c.bf16 %v465, %v561
      %v616 = vpack.c.bf16 %v466, %v562
      %v617 = vpack.c.bf16 %v467, %v563
      %v618 = vld [vmem:[%s3] sm:$0xff]
      %v619 = vld [vmem:[%s3 + $0x8] sm:$0xf]
      %v620 = vld [vmem:[%s3 + $0xc] sm:$0xff]
      %v621 = vld [vmem:[%s3 + $0x14] sm:$0xf]
      %v622 = vld [vmem:[%s3 + $0x18] sm:$0xff]
      %v623 = vld [vmem:[%s3 + $0x20] sm:$0xf]
      %v624 = vld [vmem:[%s3 + $0x24] sm:$0xff]
      %v625 = vld [vmem:[%s3 + $0x2c] sm:$0xf]
      %v626 = vld [vmem:[%s3 + $0x30] sm:$0xff]
      %v627 = vld [vmem:[%s3 + $0x38] sm:$0xf]
      %v628 = vld [vmem:[%s3 + $0x3c] sm:$0xff]
      %v629 = vld [vmem:[%s3 + $0x44] sm:$0xf]
      %v630 = vld [vmem:[%s3 + $0x48] sm:$0xff]
      %v631 = vld [vmem:[%s3 + $0x50] sm:$0xf]
      %v632 = vld [vmem:[%s3 + $0x54] sm:$0xff]
      %v633 = vld [vmem:[%s3 + $0x5c] sm:$0xf]
      %v634 = vld [vmem:[%s3 + $0x60] sm:$0xff]
      %v635 = vld [vmem:[%s3 + $0x68] sm:$0xf]
      %v636 = vld [vmem:[%s3 + $0x6c] sm:$0xff]
      %v637 = vld [vmem:[%s3 + $0x74] sm:$0xf]
      %v638 = vld [vmem:[%s3 + $0x78] sm:$0xff]
      %v639 = vld [vmem:[%s3 + $0x80] sm:$0xf]
      %v640 = vld [vmem:[%s3 + $0x84] sm:$0xff]
      %v641 = vld [vmem:[%s3 + $0x8c] sm:$0xf]
      %v642 = vld [vmem:[%s3 + $0x90] sm:$0xff]
      %v643 = vld [vmem:[%s3 + $0x98] sm:$0xf]
      %v644 = vld [vmem:[%s3 + $0x9c] sm:$0xff]
      %v645 = vld [vmem:[%s3 + $0xa4] sm:$0xf]
      %v646 = vld [vmem:[%s3 + $0xa8] sm:$0xff]
      %v647 = vld [vmem:[%s3 + $0xb0] sm:$0xf]
      %v648 = vld [vmem:[%s3 + $0xb4] sm:$0xff]
      %v649 = vld [vmem:[%s3 + $0xbc] sm:$0xf]
      %v650 = vld [vmem:[%s3 + $0xc0] sm:$0xff]
      %v651 = vld [vmem:[%s3 + $0xc8] sm:$0xf]
      %v652 = vld [vmem:[%s3 + $0xcc] sm:$0xff]
      %v653 = vld [vmem:[%s3 + $0xd4] sm:$0xf]
      %v654 = vld [vmem:[%s3 + $0xd8] sm:$0xff]
      %v655 = vld [vmem:[%s3 + $0xe0] sm:$0xf]
      %v656 = vld [vmem:[%s3 + $0xe4] sm:$0xff]
      %v657 = vld [vmem:[%s3 + $0xec] sm:$0xf]
      %v658 = vld [vmem:[%s3 + $0xf0] sm:$0xff]
      %v659 = vld [vmem:[%s3 + $0xf8] sm:$0xf]
      %v660 = vld [vmem:[%s3 + $0xfc] sm:$0xff]
      %v661 = vld [vmem:[%s3 + $0x104] sm:$0xf]
      %v662 = vld [vmem:[%s3 + $0x108] sm:$0xff]
      %v663 = vld [vmem:[%s3 + $0x110] sm:$0xf]
      %v664 = vld [vmem:[%s3 + $0x114] sm:$0xff]
      %v665 = vld [vmem:[%s3 + $0x11c] sm:$0xf]
      %v666 = vld [vmem:[%s3 + $0x120] sm:$0xff]
      %v667 = vld [vmem:[%s3 + $0x128] sm:$0xf]
      %v668 = vld [vmem:[%s3 + $0x12c] sm:$0xff]
      %v669 = vld [vmem:[%s3 + $0x134] sm:$0xf]
      %v670 = vld [vmem:[%s3 + $0x138] sm:$0xff]
      %v671 = vld [vmem:[%s3 + $0x140] sm:$0xf]
      %v672 = vld [vmem:[%s3 + $0x144] sm:$0xff]
      %v673 = vld [vmem:[%s3 + $0x14c] sm:$0xf]
      %v674 = vld [vmem:[%s3 + $0x150] sm:$0xff]
      %v675 = vld [vmem:[%s3 + $0x158] sm:$0xf]
      %v676 = vld [vmem:[%s3 + $0x15c] sm:$0xff]
      %v677 = vld [vmem:[%s3 + $0x164] sm:$0xf]
      %v678 = vld [vmem:[%s3 + $0x168] sm:$0xff]
      %v679 = vld [vmem:[%s3 + $0x170] sm:$0xf]
      %v680 = vld [vmem:[%s3 + $0x174] sm:$0xff]
      %v681 = vld [vmem:[%s3 + $0x17c] sm:$0xf]
      %v682 = vld [vmem:[%s3 + $0x180] sm:$0xff]
      %v683 = vld [vmem:[%s3 + $0x188] sm:$0xf]
      %v684 = vld [vmem:[%s3 + $0x18c] sm:$0xff]
      %v685 = vld [vmem:[%s3 + $0x194] sm:$0xf]
      %v686 = vld [vmem:[%s3 + $0x198] sm:$0xff]
      %v687 = vld [vmem:[%s3 + $0x1a0] sm:$0xf]
      %v688 = vld [vmem:[%s3 + $0x1a4] sm:$0xff]
      %v689 = vld [vmem:[%s3 + $0x1ac] sm:$0xf]
      %v690 = vld [vmem:[%s3 + $0x1b0] sm:$0xff]
      %v691 = vld [vmem:[%s3 + $0x1b8] sm:$0xf]
      %v692 = vld [vmem:[%s3 + $0x1bc] sm:$0xff]
      %v693 = vld [vmem:[%s3 + $0x1c4] sm:$0xf]
      %v694 = vld [vmem:[%s3 + $0x1c8] sm:$0xff]
      %v695 = vld [vmem:[%s3 + $0x1d0] sm:$0xf]
      %v696 = vld [vmem:[%s3 + $0x1d4] sm:$0xff]
      %v697 = vld [vmem:[%s3 + $0x1dc] sm:$0xf]
      %v698 = vld [vmem:[%s3 + $0x1e0] sm:$0xff]
      %v699 = vld [vmem:[%s3 + $0x1e8] sm:$0xf]
      %v700 = vld [vmem:[%s3 + $0x1ec] sm:$0xff]
      %v701 = vld [vmem:[%s3 + $0x1f4] sm:$0xf]
      %v702 = vld [vmem:[%s3 + $0x1f8] sm:$0xff]
      %v703 = vld [vmem:[%s3 + $0x200] sm:$0xf]
      %v704 = vld [vmem:[%s3 + $0x204] sm:$0xff]
      %v705 = vld [vmem:[%s3 + $0x20c] sm:$0xf]
      %v706 = vld [vmem:[%s3 + $0x210] sm:$0xff]
      %v707 = vld [vmem:[%s3 + $0x218] sm:$0xf]
      %v708 = vld [vmem:[%s3 + $0x21c] sm:$0xff]
      %v709 = vld [vmem:[%s3 + $0x224] sm:$0xf]
      %v710 = vld [vmem:[%s3 + $0x228] sm:$0xff]
      %v711 = vld [vmem:[%s3 + $0x230] sm:$0xf]
      %v712 = vld [vmem:[%s3 + $0x234] sm:$0xff]
      %v713 = vld [vmem:[%s3 + $0x23c] sm:$0xf]
      %v714 = vld [vmem:[%s3 + $0x240] sm:$0xff]
      %v715 = vld [vmem:[%s3 + $0x248] sm:$0xf]
      %v716 = vld [vmem:[%s3 + $0x24c] sm:$0xff]
      %v717 = vld [vmem:[%s3 + $0x254] sm:$0xf]
      %v718 = vld [vmem:[%s3 + $0x258] sm:$0xff]
      %v719 = vld [vmem:[%s3 + $0x260] sm:$0xf]
      %v720 = vld [vmem:[%s3 + $0x264] sm:$0xff]
      %v721 = vld [vmem:[%s3 + $0x26c] sm:$0xf]
      %v722 = vld [vmem:[%s3 + $0x270] sm:$0xff]
      %v723 = vld [vmem:[%s3 + $0x278] sm:$0xf]
      %v724 = vld [vmem:[%s3 + $0x27c] sm:$0xff]
      %v725 = vld [vmem:[%s3 + $0x284] sm:$0xf]
      %v726 = vld [vmem:[%s3 + $0x288] sm:$0xff]
      %v727 = vld [vmem:[%s3 + $0x290] sm:$0xf]
      %v728 = vld [vmem:[%s3 + $0x294] sm:$0xff]
      %v729 = vld [vmem:[%s3 + $0x29c] sm:$0xf]
      %v730 = vld [vmem:[%s3 + $0x2a0] sm:$0xff]
      %v731 = vld [vmem:[%s3 + $0x2a8] sm:$0xf]
      %v732 = vld [vmem:[%s3 + $0x2ac] sm:$0xff]
      %v733 = vld [vmem:[%s3 + $0x2b4] sm:$0xf]
      %v734 = vld [vmem:[%s3 + $0x2b8] sm:$0xff]
      %v735 = vld [vmem:[%s3 + $0x2c0] sm:$0xf]
      %v736 = vld [vmem:[%s3 + $0x2c4] sm:$0xff]
      %v737 = vld [vmem:[%s3 + $0x2cc] sm:$0xf]
      %v738 = vld [vmem:[%s3 + $0x2d0] sm:$0xff]
      %v739 = vld [vmem:[%s3 + $0x2d8] sm:$0xf]
      %v740 = vld [vmem:[%s3 + $0x2dc] sm:$0xff]
      %v741 = vld [vmem:[%s3 + $0x2e4] sm:$0xf]
      %v742 = vld [vmem:[%s3 + $0x2e8] sm:$0xff]
      %v743 = vld [vmem:[%s3 + $0x2f0] sm:$0xf]
      %v744 = vld [vmem:[%s3 + $0x2f4] sm:$0xff]
      %v745 = vld [vmem:[%s3 + $0x2fc] sm:$0xf]
      %v746 = vld [vmem:[%s3 + $0x300] sm:$0xff]
      %v747 = vld [vmem:[%s3 + $0x308] sm:$0xf]
      %v748 = vld [vmem:[%s3 + $0x30c] sm:$0xff]
      %v749 = vld [vmem:[%s3 + $0x314] sm:$0xf]
      %v750 = vld [vmem:[%s3 + $0x318] sm:$0xff]
      %v751 = vld [vmem:[%s3 + $0x320] sm:$0xf]
      %v752 = vld [vmem:[%s3 + $0x324] sm:$0xff]
      %v753 = vld [vmem:[%s3 + $0x32c] sm:$0xf]
      %v754 = vld [vmem:[%s3 + $0x330] sm:$0xff]
      %v755 = vld [vmem:[%s3 + $0x338] sm:$0xf]
      %v756 = vld [vmem:[%s3 + $0x33c] sm:$0xff]
      %v757 = vld [vmem:[%s3 + $0x344] sm:$0xf]
      %v758 = vld [vmem:[%s3 + $0x348] sm:$0xff]
      %v759 = vld [vmem:[%s3 + $0x350] sm:$0xf]
      %v760 = vld [vmem:[%s3 + $0x354] sm:$0xff]
      %v761 = vld [vmem:[%s3 + $0x35c] sm:$0xf]
      %v762 = vld [vmem:[%s3 + $0x360] sm:$0xff]
      %v763 = vld [vmem:[%s3 + $0x368] sm:$0xf]
      %v764 = vld [vmem:[%s3 + $0x36c] sm:$0xff]
      %v765 = vld [vmem:[%s3 + $0x374] sm:$0xf]
      %v766 = vld [vmem:[%s3 + $0x378] sm:$0xff]
      %v767 = vld [vmem:[%s3 + $0x380] sm:$0xf]
      %v768 = vld [vmem:[%s3 + $0x384] sm:$0xff]
      %v769 = vld [vmem:[%s3 + $0x38c] sm:$0xf]
      %v770 = vld [vmem:[%s3 + $0x390] sm:$0xff]
      %v771 = vld [vmem:[%s3 + $0x398] sm:$0xf]
      %v772 = vld [vmem:[%s3 + $0x39c] sm:$0xff]
      %v773 = vld [vmem:[%s3 + $0x3a4] sm:$0xf]
      %v774 = vld [vmem:[%s3 + $0x3a8] sm:$0xff]
      %v775 = vld [vmem:[%s3 + $0x3b0] sm:$0xf]
      %v776 = vld [vmem:[%s3 + $0x3b4] sm:$0xff]
      %v777 = vld [vmem:[%s3 + $0x3bc] sm:$0xf]
      %v778 = vld [vmem:[%s3 + $0x3c0] sm:$0xff]
      %v779 = vld [vmem:[%s3 + $0x3c8] sm:$0xf]
      %v780 = vld [vmem:[%s3 + $0x3cc] sm:$0xff]
      %v781 = vld [vmem:[%s3 + $0x3d4] sm:$0xf]
      %v782 = vld [vmem:[%s3 + $0x3d8] sm:$0xff]
      %v783 = vld [vmem:[%s3 + $0x3e0] sm:$0xf]
      %v784 = vld [vmem:[%s3 + $0x3e4] sm:$0xff]
      %v785 = vld [vmem:[%s3 + $0x3ec] sm:$0xf]
      %v786 = vld [vmem:[%s3 + $0x3f0] sm:$0xff]
      %v787 = vld [vmem:[%s3 + $0x3f8] sm:$0xf]
      %v788 = vld [vmem:[%s3 + $0x3fc] sm:$0x77]
      %v789 = vld [vmem:[%s3 + $0x404] sm:$0x7]
      %v962 = vunpack.c.l.b16 %v618
      %v963 = vunpack.c.h.b16 %v618
      %v964 = vunpack.c.l.b16 %v619
      %v965 = vunpack.c.l.b16 %v620
      %v966 = vunpack.c.h.b16 %v620
      %v967 = vunpack.c.l.b16 %v621
      %v968 = vunpack.c.l.b16 %v622
      %v969 = vunpack.c.h.b16 %v622
      %v970 = vunpack.c.l.b16 %v623
      %v971 = vunpack.c.l.b16 %v624
      %v972 = vunpack.c.h.b16 %v624
      %v973 = vunpack.c.l.b16 %v625
      %v974 = vunpack.c.l.b16 %v626
      %v975 = vunpack.c.h.b16 %v626
      %v976 = vunpack.c.l.b16 %v627
      %v977 = vunpack.c.l.b16 %v628
      %v978 = vunpack.c.h.b16 %v628
      %v979 = vunpack.c.l.b16 %v629
      %v980 = vunpack.c.l.b16 %v630
      %v981 = vunpack.c.h.b16 %v630
      %v982 = vunpack.c.l.b16 %v631
      %v983 = vunpack.c.l.b16 %v632
      %v984 = vunpack.c.h.b16 %v632
      %v985 = vunpack.c.l.b16 %v633
      %v986 = vunpack.c.l.b16 %v634
      %v987 = vunpack.c.h.b16 %v634
      %v988 = vunpack.c.l.b16 %v635
      %v989 = vunpack.c.l.b16 %v636
      %v990 = vunpack.c.h.b16 %v636
      %v991 = vunpack.c.l.b16 %v637
      %v992 = vunpack.c.l.b16 %v638
      %v993 = vunpack.c.h.b16 %v638
      %v994 = vunpack.c.l.b16 %v639
      %v995 = vunpack.c.l.b16 %v640
      %v996 = vunpack.c.h.b16 %v640
      %v997 = vunpack.c.l.b16 %v641
      %v998 = vunpack.c.l.b16 %v642
      %v999 = vunpack.c.h.b16 %v642
      %v1000 = vunpack.c.l.b16 %v643
      %v1001 = vunpack.c.l.b16 %v644
      %v1002 = vunpack.c.h.b16 %v644
      %v1003 = vunpack.c.l.b16 %v645
      %v1004 = vunpack.c.l.b16 %v646
      %v1005 = vunpack.c.h.b16 %v646
      %v1006 = vunpack.c.l.b16 %v647
      %v1007 = vunpack.c.l.b16 %v648
      %v1008 = vunpack.c.h.b16 %v648
      %v1009 = vunpack.c.l.b16 %v649
      %v1010 = vunpack.c.l.b16 %v650
      %v1011 = vunpack.c.h.b16 %v650
      %v1012 = vunpack.c.l.b16 %v651
      %v1013 = vunpack.c.l.b16 %v652
      %v1014 = vunpack.c.h.b16 %v652
      %v1015 = vunpack.c.l.b16 %v653
      %v1016 = vunpack.c.l.b16 %v654
      %v1017 = vunpack.c.h.b16 %v654
      %v1018 = vunpack.c.l.b16 %v655
      %v1019 = vunpack.c.l.b16 %v656
      %v1020 = vunpack.c.h.b16 %v656
      %v1021 = vunpack.c.l.b16 %v657
      %v1022 = vunpack.c.l.b16 %v658
      %v1023 = vunpack.c.h.b16 %v658
      %v1024 = vunpack.c.l.b16 %v659
      %v1025 = vunpack.c.l.b16 %v660
      %v1026 = vunpack.c.h.b16 %v660
      %v1027 = vunpack.c.l.b16 %v661
      %v1028 = vunpack.c.l.b16 %v662
      %v1029 = vunpack.c.h.b16 %v662
      %v1030 = vunpack.c.l.b16 %v663
      %v1031 = vunpack.c.l.b16 %v664
      %v1032 = vunpack.c.h.b16 %v664
      %v1033 = vunpack.c.l.b16 %v665
      %v1034 = vunpack.c.l.b16 %v666
      %v1035 = vunpack.c.h.b16 %v666
      %v1036 = vunpack.c.l.b16 %v667
      %v1037 = vunpack.c.l.b16 %v668
      %v1038 = vunpack.c.h.b16 %v668
      %v1039 = vunpack.c.l.b16 %v669
      %v1040 = vunpack.c.l.b16 %v670
      %v1041 = vunpack.c.h.b16 %v670
      %v1042 = vunpack.c.l.b16 %v671
      %v1043 = vunpack.c.l.b16 %v672
      %v1044 = vunpack.c.h.b16 %v672
      %v1045 = vunpack.c.l.b16 %v673
      %v1046 = vunpack.c.l.b16 %v674
      %v1047 = vunpack.c.h.b16 %v674
      %v1048 = vunpack.c.l.b16 %v675
      %v1049 = vunpack.c.l.b16 %v676
      %v1050 = vunpack.c.h.b16 %v676
      %v1051 = vunpack.c.l.b16 %v677
      %v1052 = vunpack.c.l.b16 %v678
      %v1053 = vunpack.c.h.b16 %v678
      %v1054 = vunpack.c.l.b16 %v679
      %v1055 = vunpack.c.l.b16 %v680
      %v1056 = vunpack.c.h.b16 %v680
      %v1057 = vunpack.c.l.b16 %v681
      %v1058 = vunpack.c.l.b16 %v682
      %v1059 = vunpack.c.h.b16 %v682
      %v1060 = vunpack.c.l.b16 %v683
      %v1061 = vunpack.c.l.b16 %v684
      %v1062 = vunpack.c.h.b16 %v684
      %v1063 = vunpack.c.l.b16 %v685
      %v1064 = vunpack.c.l.b16 %v686
      %v1065 = vunpack.c.h.b16 %v686
      %v1066 = vunpack.c.l.b16 %v687
      %v1067 = vunpack.c.l.b16 %v688
      %v1068 = vunpack.c.h.b16 %v688
      %v1069 = vunpack.c.l.b16 %v689
      %v1070 = vunpack.c.l.b16 %v690
      %v1071 = vunpack.c.h.b16 %v690
      %v1072 = vunpack.c.l.b16 %v691
      %v1073 = vunpack.c.l.b16 %v692
      %v1074 = vunpack.c.h.b16 %v692
      %v1075 = vunpack.c.l.b16 %v693
      %v1076 = vunpack.c.l.b16 %v694
      %v1077 = vunpack.c.h.b16 %v694
      %v1078 = vunpack.c.l.b16 %v695
      %v1079 = vunpack.c.l.b16 %v696
      %v1080 = vunpack.c.h.b16 %v696
      %v1081 = vunpack.c.l.b16 %v697
      %v1082 = vunpack.c.l.b16 %v698
      %v1083 = vunpack.c.h.b16 %v698
      %v1084 = vunpack.c.l.b16 %v699
      %v1085 = vunpack.c.l.b16 %v700
      %v1086 = vunpack.c.h.b16 %v700
      %v1087 = vunpack.c.l.b16 %v701
      %v1088 = vunpack.c.l.b16 %v702
      %v1089 = vunpack.c.h.b16 %v702
      %v1090 = vunpack.c.l.b16 %v703
      %v1091 = vunpack.c.l.b16 %v704
      %v1092 = vunpack.c.h.b16 %v704
      %v1093 = vunpack.c.l.b16 %v705
      %v1094 = vunpack.c.l.b16 %v706
      %v1095 = vunpack.c.h.b16 %v706
      %v1096 = vunpack.c.l.b16 %v707
      %v1097 = vunpack.c.l.b16 %v708
      %v1098 = vunpack.c.h.b16 %v708
      %v1099 = vunpack.c.l.b16 %v709
      %v1100 = vunpack.c.l.b16 %v710
      %v1101 = vunpack.c.h.b16 %v710
      %v1102 = vunpack.c.l.b16 %v711
      %v1103 = vunpack.c.l.b16 %v712
      %v1104 = vunpack.c.h.b16 %v712
      %v1105 = vunpack.c.l.b16 %v713
      %v1106 = vunpack.c.l.b16 %v714
      %v1107 = vunpack.c.h.b16 %v714
      %v1108 = vunpack.c.l.b16 %v715
      %v1109 = vunpack.c.l.b16 %v716
      %v1110 = vunpack.c.h.b16 %v716
      %v1111 = vunpack.c.l.b16 %v717
      %v1112 = vunpack.c.l.b16 %v718
      %v1113 = vunpack.c.h.b16 %v718
      %v1114 = vunpack.c.l.b16 %v719
      %v1115 = vunpack.c.l.b16 %v720
      %v1116 = vunpack.c.h.b16 %v720
      %v1117 = vunpack.c.l.b16 %v721
      %v1118 = vunpack.c.l.b16 %v722
      %v1119 = vunpack.c.h.b16 %v722
      %v1120 = vunpack.c.l.b16 %v723
      %v1121 = vunpack.c.l.b16 %v724
      %v1122 = vunpack.c.h.b16 %v724
      %v1123 = vunpack.c.l.b16 %v725
      %v1124 = vunpack.c.l.b16 %v726
      %v1125 = vunpack.c.h.b16 %v726
      %v1126 = vunpack.c.l.b16 %v727
      %v1127 = vunpack.c.l.b16 %v728
      %v1128 = vunpack.c.h.b16 %v728
      %v1129 = vunpack.c.l.b16 %v729
      %v1130 = vunpack.c.l.b16 %v730
      %v1131 = vunpack.c.h.b16 %v730
      %v1132 = vunpack.c.l.b16 %v731
      %v1133 = vunpack.c.l.b16 %v732
      %v1134 = vunpack.c.h.b16 %v732
      %v1135 = vunpack.c.l.b16 %v733
      %v1136 = vunpack.c.l.b16 %v734
      %v1137 = vunpack.c.h.b16 %v734
      %v1138 = vunpack.c.l.b16 %v735
      %v1139 = vunpack.c.l.b16 %v736
      %v1140 = vunpack.c.h.b16 %v736
      %v1141 = vunpack.c.l.b16 %v737
      %v1142 = vunpack.c.l.b16 %v738
      %v1143 = vunpack.c.h.b16 %v738
      %v1144 = vunpack.c.l.b16 %v739
      %v1145 = vunpack.c.l.b16 %v740
      %v1146 = vunpack.c.h.b16 %v740
      %v1147 = vunpack.c.l.b16 %v741
      %v1148 = vunpack.c.l.b16 %v742
      %v1149 = vunpack.c.h.b16 %v742
      %v1150 = vunpack.c.l.b16 %v743
      %v1151 = vunpack.c.l.b16 %v744
      %v1152 = vunpack.c.h.b16 %v744
      %v1153 = vunpack.c.l.b16 %v745
      %v1154 = vunpack.c.l.b16 %v746
      %v1155 = vunpack.c.h.b16 %v746
      %v1156 = vunpack.c.l.b16 %v747
      %v1157 = vunpack.c.l.b16 %v748
      %v1158 = vunpack.c.h.b16 %v748
      %v1159 = vunpack.c.l.b16 %v749
      %v1160 = vunpack.c.l.b16 %v750
      %v1161 = vunpack.c.h.b16 %v750
      %v1162 = vunpack.c.l.b16 %v751
      %v1163 = vunpack.c.l.b16 %v752
      %v1164 = vunpack.c.h.b16 %v752
      %v1165 = vunpack.c.l.b16 %v753
      %v1166 = vunpack.c.l.b16 %v754
      %v1167 = vunpack.c.h.b16 %v754
      %v1168 = vunpack.c.l.b16 %v755
      %v1169 = vunpack.c.l.b16 %v756
      %v1170 = vunpack.c.h.b16 %v756
      %v1171 = vunpack.c.l.b16 %v757
      %v1172 = vunpack.c.l.b16 %v758
      %v1173 = vunpack.c.h.b16 %v758
      %v1174 = vunpack.c.l.b16 %v759
      %v1175 = vunpack.c.l.b16 %v760
      %v1176 = vunpack.c.h.b16 %v760
      %v1177 = vunpack.c.l.b16 %v761
      %v1178 = vunpack.c.l.b16 %v762
      %v1179 = vunpack.c.h.b16 %v762
      %v1180 = vunpack.c.l.b16 %v763
      %v1181 = vunpack.c.l.b16 %v764
      %v1182 = vunpack.c.h.b16 %v764
      %v1183 = vunpack.c.l.b16 %v765
      %v1184 = vunpack.c.l.b16 %v766
      %v1185 = vunpack.c.h.b16 %v766
      %v1186 = vunpack.c.l.b16 %v767
      %v1187 = vunpack.c.l.b16 %v768
      %v1188 = vunpack.c.h.b16 %v768
      %v1189 = vunpack.c.l.b16 %v769
      %v1190 = vunpack.c.l.b16 %v770
      %v1191 = vunpack.c.h.b16 %v770
      %v1192 = vunpack.c.l.b16 %v771
      %v1193 = vunpack.c.l.b16 %v772
      %v1194 = vunpack.c.h.b16 %v772
      %v1195 = vunpack.c.l.b16 %v773
      %v1196 = vunpack.c.l.b16 %v774
      %v1197 = vunpack.c.h.b16 %v774
      %v1198 = vunpack.c.l.b16 %v775
      %v1199 = vunpack.c.l.b16 %v776
      %v1200 = vunpack.c.h.b16 %v776
      %v1201 = vunpack.c.l.b16 %v777
      %v1202 = vunpack.c.l.b16 %v778
      %v1203 = vunpack.c.h.b16 %v778
      %v1204 = vunpack.c.l.b16 %v779
      %v1205 = vunpack.c.l.b16 %v780
      %v1206 = vunpack.c.h.b16 %v780
      %v1207 = vunpack.c.l.b16 %v781
      %v1208 = vunpack.c.l.b16 %v782
      %v1209 = vunpack.c.h.b16 %v782
      %v1210 = vunpack.c.l.b16 %v783
      %v1211 = vunpack.c.l.b16 %v784
      %v1212 = vunpack.c.h.b16 %v784
      %v1213 = vunpack.c.l.b16 %v785
      %v1214 = vunpack.c.l.b16 %v786
      %v1215 = vunpack.c.h.b16 %v786
      %v1216 = vunpack.c.l.b16 %v787
      %v1217 = vunpack.c.l.b16 %v788
      %v1218 = vunpack.c.h.b16 %v788
      %v1219 = vunpack.c.l.b16 %v789
      %v1220 = vpack.c.b16 %v965, %v962
      %v1221 = vpack.c.b16 %v966, %v963
      %v1222 = vpack.c.b16 %v967, %v964
      %v1223 = vpack.c.b16 %v971, %v968
      %v1224 = vpack.c.b16 %v972, %v969
      %v1225 = vpack.c.b16 %v973, %v970
      %v1226 = vpack.c.b16 %v977, %v974
      %v1227 = vpack.c.b16 %v978, %v975
      %v1228 = vpack.c.b16 %v979, %v976
      %v1229 = vpack.c.b16 %v983, %v980
      %v1230 = vpack.c.b16 %v984, %v981
      %v1231 = vpack.c.b16 %v985, %v982
      %v1232 = vpack.c.b16 %v989, %v986
      %v1233 = vpack.c.b16 %v990, %v987
      %v1234 = vpack.c.b16 %v991, %v988
      %v1235 = vpack.c.b16 %v995, %v992
      %v1236 = vpack.c.b16 %v996, %v993
      %v1237 = vpack.c.b16 %v997, %v994
      %v1238 = vpack.c.b16 %v1001, %v998
      %v1239 = vpack.c.b16 %v1002, %v999
      %v1240 = vpack.c.b16 %v1003, %v1000
      %v1241 = vpack.c.b16 %v1007, %v1004
      %v1242 = vpack.c.b16 %v1008, %v1005
      %v1243 = vpack.c.b16 %v1009, %v1006
      %v1244 = vpack.c.b16 %v1013, %v1010
      %v1245 = vpack.c.b16 %v1014, %v1011
      %v1246 = vpack.c.b16 %v1015, %v1012
      %v1247 = vpack.c.b16 %v1019, %v1016
      %v1248 = vpack.c.b16 %v1020, %v1017
      %v1249 = vpack.c.b16 %v1021, %v1018
      %v1250 = vpack.c.b16 %v1025, %v1022
      %v1251 = vpack.c.b16 %v1026, %v1023
      %v1252 = vpack.c.b16 %v1027, %v1024
      %v1253 = vpack.c.b16 %v1031, %v1028
      %v1254 = vpack.c.b16 %v1032, %v1029
      %v1255 = vpack.c.b16 %v1033, %v1030
      %v1256 = vpack.c.b16 %v1037, %v1034
      %v1257 = vpack.c.b16 %v1038, %v1035
      %v1258 = vpack.c.b16 %v1039, %v1036
      %v1259 = vpack.c.b16 %v1043, %v1040
      %v1260 = vpack.c.b16 %v1044, %v1041
      %v1261 = vpack.c.b16 %v1045, %v1042
      %v1262 = vpack.c.b16 %v1049, %v1046
      %v1263 = vpack.c.b16 %v1050, %v1047
      %v1264 = vpack.c.b16 %v1051, %v1048
      %v1265 = vpack.c.b16 %v1055, %v1052
      %v1266 = vpack.c.b16 %v1056, %v1053
      %v1267 = vpack.c.b16 %v1057, %v1054
      %v1268 = vpack.c.b16 %v1061, %v1058
      %v1269 = vpack.c.b16 %v1062, %v1059
      %v1270 = vpack.c.b16 %v1063, %v1060
      %v1271 = vpack.c.b16 %v1067, %v1064
      %v1272 = vpack.c.b16 %v1068, %v1065
      %v1273 = vpack.c.b16 %v1069, %v1066
      %v1274 = vpack.c.b16 %v1073, %v1070
      %v1275 = vpack.c.b16 %v1074, %v1071
      %v1276 = vpack.c.b16 %v1075, %v1072
      %v1277 = vpack.c.b16 %v1079, %v1076
      %v1278 = vpack.c.b16 %v1080, %v1077
      %v1279 = vpack.c.b16 %v1081, %v1078
      %v1280 = vpack.c.b16 %v1085, %v1082
      %v1281 = vpack.c.b16 %v1086, %v1083
      %v1282 = vpack.c.b16 %v1087, %v1084
      %v1283 = vpack.c.b16 %v1091, %v1088
      %v1284 = vpack.c.b16 %v1092, %v1089
      %v1285 = vpack.c.b16 %v1093, %v1090
      %v1286 = vpack.c.b16 %v1097, %v1094
      %v1287 = vpack.c.b16 %v1098, %v1095
      %v1288 = vpack.c.b16 %v1099, %v1096
      %v1289 = vpack.c.b16 %v1103, %v1100
      %v1290 = vpack.c.b16 %v1104, %v1101
      %v1291 = vpack.c.b16 %v1105, %v1102
      %v1292 = vpack.c.b16 %v1109, %v1106
      %v1293 = vpack.c.b16 %v1110, %v1107
      %v1294 = vpack.c.b16 %v1111, %v1108
      %v1295 = vpack.c.b16 %v1115, %v1112
      %v1296 = vpack.c.b16 %v1116, %v1113
      %v1297 = vpack.c.b16 %v1117, %v1114
      %v1298 = vpack.c.b16 %v1121, %v1118
      %v1299 = vpack.c.b16 %v1122, %v1119
      %v1300 = vpack.c.b16 %v1123, %v1120
      %v1301 = vpack.c.b16 %v1127, %v1124
      %v1302 = vpack.c.b16 %v1128, %v1125
      %v1303 = vpack.c.b16 %v1129, %v1126
      %v1304 = vpack.c.b16 %v1133, %v1130
      %v1305 = vpack.c.b16 %v1134, %v1131
      %v1306 = vpack.c.b16 %v1135, %v1132
      %v1307 = vpack.c.b16 %v1139, %v1136
      %v1308 = vpack.c.b16 %v1140, %v1137
      %v1309 = vpack.c.b16 %v1141, %v1138
      %v1310 = vpack.c.b16 %v1145, %v1142
      %v1311 = vpack.c.b16 %v1146, %v1143
      %v1312 = vpack.c.b16 %v1147, %v1144
      %v1313 = vpack.c.b16 %v1151, %v1148
      %v1314 = vpack.c.b16 %v1152, %v1149
      %v1315 = vpack.c.b16 %v1153, %v1150
      %v1316 = vpack.c.b16 %v1157, %v1154
      %v1317 = vpack.c.b16 %v1158, %v1155
      %v1318 = vpack.c.b16 %v1159, %v1156
      %v1319 = vpack.c.b16 %v1163, %v1160
      %v1320 = vpack.c.b16 %v1164, %v1161
      %v1321 = vpack.c.b16 %v1165, %v1162
      %v1322 = vpack.c.b16 %v1169, %v1166
      %v1323 = vpack.c.b16 %v1170, %v1167
      %v1324 = vpack.c.b16 %v1171, %v1168
      %v1325 = vpack.c.b16 %v1175, %v1172
      %v1326 = vpack.c.b16 %v1176, %v1173
      %v1327 = vpack.c.b16 %v1177, %v1174
      %v1328 = vpack.c.b16 %v1181, %v1178
      %v1329 = vpack.c.b16 %v1182, %v1179
      %v1330 = vpack.c.b16 %v1183, %v1180
      %v1331 = vpack.c.b16 %v1187, %v1184
      %v1332 = vpack.c.b16 %v1188, %v1185
      %v1333 = vpack.c.b16 %v1189, %v1186
      %v1334 = vpack.c.b16 %v1193, %v1190
      %v1335 = vpack.c.b16 %v1194, %v1191
      %v1336 = vpack.c.b16 %v1195, %v1192
      %v1337 = vpack.c.b16 %v1199, %v1196
      %v1338 = vpack.c.b16 %v1200, %v1197
      %v1339 = vpack.c.b16 %v1201, %v1198
      %v1340 = vpack.c.b16 %v1205, %v1202
      %v1341 = vpack.c.b16 %v1206, %v1203
      %v1342 = vpack.c.b16 %v1207, %v1204
      %v1343 = vpack.c.b16 %v1211, %v1208
      %v1344 = vpack.c.b16 %v1212, %v1209
      %v1345 = vpack.c.b16 %v1213, %v1210
      %v1346 = vpack.c.b16 %v1217, %v1214
      %v1347 = vpack.c.b16 %v1218, %v1215
      %v1348 = vpack.c.b16 %v1219, %v1216
      %vm1475 = vcmask 375808
      %v1477 = vsel %vm1475, %v569, 0
      %v1480 = vsel %vm1475, %v575, 0
      %v1483 = vsel %vm1475, %v581, 0
      %v1486 = vsel %vm1475, %v587, 0
      %v1489 = vsel %vm1475, %v593, 0
      %v1492 = vsel %vm1475, %v599, 0
      %v1495 = vsel %vm1475, %v605, 0
      %v1498 = vsel %vm1475, %v611, 0
      %v1501 = vsel %vm1475, %v617, 0
      %vm1503 = vcmask 1046528
      %v1505 = vsel %vm1503, %v1346, 0
      %v1508 = vsel %vm1503, %v1347, 0
      %v1511 = vsel %vm1503, %v1348, 0
      %1513 = vmatprep.subr.bf16.mxu0 %v1242
      %1514 = vmatpush1.bf16.msra.mxu0 %v1241
      %1515 = vmatprep.subr.bf16.mxu0 %v1239
      %1516 = vmatpush1.bf16.msra.mxu0 %v1238
      %1517 = vmatprep.subr.bf16.mxu0 %v1236
      %1518 = vmatpush1.bf16.msra.mxu0 %v1235
      %1519 = vmatprep.subr.bf16.mxu0 %v1233
      %1520 = vmatpush1.bf16.msra.mxu0 %v1232
      %1521 = vmatprep.subr.bf16.mxu0 %v1230
      %1522 = vmatpush1.bf16.msra.mxu0 %v1229
      %1523 = vmatprep.subr.bf16.mxu0 %v1227
      %1524 = vmatpush1.bf16.msra.mxu0 %v1226
      %1525 = vmatprep.subr.bf16.mxu0 %v1224
      %1526 = vmatpush1.bf16.msra.mxu0 %v1223
      %1527 = vmatprep.subr.bf16.mxu0 %v1221
      %1528 = vmatpush1.bf16.msra.mxu0 %v1220
      %1529 = vmatprep.subr.bf16.mxu0 %v1266
      %1530 = vmatpush2.bf16.msra.mxu0 %v1265
      %1531 = vmatprep.subr.bf16.mxu0 %v1263
      %1532 = vmatpush2.bf16.msra.mxu0 %v1262
      %1533 = vmatprep.subr.bf16.mxu0 %v1260
      %1534 = vmatpush2.bf16.msra.mxu0 %v1259
      %1535 = vmatprep.subr.bf16.mxu0 %v1257
      %1536 = vmatpush2.bf16.msra.mxu0 %v1256
      %1537 = vmatprep.subr.bf16.mxu0 %v1254
      %1538 = vmatpush2.bf16.msra.mxu0 %v1253
      %1539 = vmatprep.subr.bf16.mxu0 %v1251
      %1540 = vmatpush2.bf16.msra.mxu0 %v1250
      %1541 = vmatprep.subr.bf16.mxu0 %v1248
      %1542 = vmatpush2.bf16.msra.mxu0 %v1247
      %1543 = vmatprep.subr.bf16.mxu0 %v1245
      %1544 = vmatpush2.bf16.msra.mxu0 %v1244
      %1545 = vmatprep.mubr.bf16.mxu0 %v565
      %1546 = vmatmul.mubr.bf16.gmra.mxu0 %v564
      %v1547 = vpop.f32.mrf.mxu0
      %v1548 = vadd.f32 0.0, %v1547
      %v1549 = vpop.f32.mrf.mxu0
      %v1550 = vpop.f32.mrf.mxu0
      %v1551 = vadd.f32 0.0, %v1550
      %v1552 = vpop.f32.mrf.mxu0
      %v1553 = vadd.f32 0.0, %v1552
      %1554 = vmatprep.mubr.bf16.mxu0 %v571
      %1555 = vmatmul.mubr.bf16.gmra.mxu0 %v570
      %v1556 = vpop.f32.mrf.mxu0
      %v1557 = vadd.f32 0.0, %v1556
      %v1558 = vpop.f32.mrf.mxu0
      %v1559 = vadd.f32 0.0, %v1558
      %v1560 = vpop.f32.mrf.mxu0
      %v1561 = vadd.f32 0.0, %v1560
      %v1562 = vpop.f32.mrf.mxu0
      %v1563 = vadd.f32 0.0, %v1562
      %1564 = vmatprep.mubr.bf16.mxu0 %v577
      %1565 = vmatmul.mubr.bf16.gmra.mxu0 %v576
      %v1566 = vpop.f32.mrf.mxu0
      %v1567 = vadd.f32 0.0, %v1566
      %v1568 = vpop.f32.mrf.mxu0
      %v1569 = vadd.f32 0.0, %v1568
      %v1570 = vpop.f32.mrf.mxu0
      %v1571 = vadd.f32 0.0, %v1570
      %v1572 = vpop.f32.mrf.mxu0
      %v1573 = vadd.f32 0.0, %v1572
      %1574 = vmatprep.mubr.bf16.mxu0 %v583
      %1575 = vmatmul.mubr.bf16.gmra.mxu0 %v582
      %v1576 = vpop.f32.mrf.mxu0
      %v1577 = vadd.f32 0.0, %v1576
      %v1578 = vpop.f32.mrf.mxu0
      %v1579 = vadd.f32 0.0, %v1578
      %v1580 = vpop.f32.mrf.mxu0
      %v1581 = vadd.f32 0.0, %v1580
      %v1582 = vpop.f32.mrf.mxu0
      %v1583 = vadd.f32 0.0, %v1582
      %1584 = vmatprep.mubr.bf16.mxu0 %v589
      %1585 = vmatmul.mubr.bf16.gmra.mxu0 %v588
      %v1586 = vpop.f32.mrf.mxu0
      %v1587 = vadd.f32 0.0, %v1586
      %v1588 = vpop.f32.mrf.mxu0
      %v1589 = vadd.f32 0.0, %v1588
      %v1590 = vpop.f32.mrf.mxu0
      %v1591 = vadd.f32 0.0, %v1590
      %v1592 = vpop.f32.mrf.mxu0
      %v1593 = vadd.f32 0.0, %v1592
      %1594 = vmatprep.mubr.bf16.mxu0 %v595
      %1595 = vmatmul.mubr.bf16.gmra.mxu0 %v594
      %v1596 = vpop.f32.mrf.mxu0
      %v1597 = vadd.f32 0.0, %v1596
      %v1598 = vpop.f32.mrf.mxu0
      %v1599 = vadd.f32 0.0, %v1598
      %v1600 = vpop.f32.mrf.mxu0
      %v1601 = vadd.f32 0.0, %v1600
      %v1602 = vpop.f32.mrf.mxu0
      %v1603 = vadd.f32 0.0, %v1602
      %1604 = vmatprep.mubr.bf16.mxu0 %v601
      %1605 = vmatmul.mubr.bf16.gmra.mxu0 %v600
      %v1606 = vpop.f32.mrf.mxu0
      %v1607 = vadd.f32 0.0, %v1606
      %v1608 = vpop.f32.mrf.mxu0
      %v1609 = vadd.f32 0.0, %v1608
      %v1610 = vpop.f32.mrf.mxu0
      %v1611 = vadd.f32 0.0, %v1610
      %v1612 = vpop.f32.mrf.mxu0
      %v1613 = vadd.f32 0.0, %v1612
      %1614 = vmatprep.mubr.bf16.mxu0 %v607
      %1615 = vmatmul.mubr.bf16.gmra.mxu0 %v606
      %v1616 = vpop.f32.mrf.mxu0
      %v1617 = vadd.f32 0.0, %v1616
      %v1618 = vpop.f32.mrf.mxu0
      %v1619 = vadd.f32 0.0, %v1618
      %v1620 = vpop.f32.mrf.mxu0
      %v1621 = vadd.f32 0.0, %v1620
      %v1622 = vpop.f32.mrf.mxu0
      %v1623 = vadd.f32 0.0, %v1622
      %1624 = vmatprep.mubr.bf16.mxu0 %v613
      %1625 = vmatmul.mubr.bf16.gmra.mxu0 %v612
      %v1626 = vpop.f32.mrf.mxu0
      %v1627 = vadd.f32 0.0, %v1626
      %v1628 = vpop.f32.mrf.mxu0
      %v1629 = vadd.f32 0.0, %v1628
      %v1630 = vpop.f32.mrf.mxu0
      %v1631 = vpop.f32.mrf.mxu0
      %v1632 = vadd.f32 0.0, %v1631
      %1633 = vdwg.mxu0
      %1634 = vmatprep.subr.bf16.mxu0 %v1290
      %1635 = vmatpush1.bf16.msra.mxu0 %v1289
      %1636 = vmatprep.subr.bf16.mxu0 %v1287
      %1637 = vmatpush1.bf16.msra.mxu0 %v1286
      %1638 = vmatprep.subr.bf16.mxu0 %v1284
      %1639 = vmatpush1.bf16.msra.mxu0 %v1283
      %1640 = vmatprep.subr.bf16.mxu0 %v1281
      %1641 = vmatpush1.bf16.msra.mxu0 %v1280
      %1642 = vmatprep.subr.bf16.mxu0 %v1278
      %1643 = vmatpush1.bf16.msra.mxu0 %v1277
      %1644 = vmatprep.subr.bf16.mxu0 %v1275
      %1645 = vmatpush1.bf16.msra.mxu0 %v1274
      %1646 = vmatprep.subr.bf16.mxu0 %v1272
      %1647 = vmatpush1.bf16.msra.mxu0 %v1271
      %1648 = vmatprep.subr.bf16.mxu0 %v1269
      %1649 = vmatpush1.bf16.msra.mxu0 %v1268
      %1650 = vmatprep.subr.bf16.mxu0 %v1314
      %1651 = vmatpush2.bf16.msra.mxu0 %v1313
      %1652 = vmatprep.subr.bf16.mxu0 %v1311
      %1653 = vmatpush2.bf16.msra.mxu0 %v1310
      %1654 = vmatprep.subr.bf16.mxu0 %v1308
      %1655 = vmatpush2.bf16.msra.mxu0 %v1307
      %1656 = vmatprep.subr.bf16.mxu0 %v1305
      %1657 = vmatpush2.bf16.msra.mxu0 %v1304
      %1658 = vmatprep.subr.bf16.mxu0 %v1302
      %1659 = vmatpush2.bf16.msra.mxu0 %v1301
      %1660 = vmatprep.subr.bf16.mxu0 %v1299
      %1661 = vmatpush2.bf16.msra.mxu0 %v1298
      %1662 = vmatprep.subr.bf16.mxu0 %v1296
      %1663 = vmatpush2.bf16.msra.mxu0 %v1295
      %1664 = vmatprep.subr.bf16.mxu0 %v1293
      %1665 = vmatpush2.bf16.msra.mxu0 %v1292
      %1666 = vmatprep.mubr.bf16.mxu0 %v567
      %1667 = vmatmul.mubr.bf16.gmra.mxu0 %v566
      %v1668 = vpop.f32.mrf.mxu0
      %v1669 = vadd.f32 %v1548, %v1668
      %v1670 = vpop.f32.mrf.mxu0
      %v1671 = vpop.f32.mrf.mxu0
      %v1672 = vadd.f32 %v1551, %v1671
      %v1673 = vpop.f32.mrf.mxu0
      %v1674 = vadd.f32 %v1553, %v1673
      %1675 = vmatprep.mubr.bf16.mxu0 %v573
      %1676 = vmatmul.mubr.bf16.gmra.mxu0 %v572
      %v1677 = vpop.f32.mrf.mxu0
      %v1678 = vadd.f32 %v1557, %v1677
      %v1679 = vpop.f32.mrf.mxu0
      %v1680 = vadd.f32 %v1559, %v1679
      %v1681 = vpop.f32.mrf.mxu0
      %v1682 = vadd.f32 %v1561, %v1681
      %v1683 = vpop.f32.mrf.mxu0
      %v1684 = vadd.f32 %v1563, %v1683
      %1685 = vmatprep.mubr.bf16.mxu0 %v579
      %1686 = vmatmul.mubr.bf16.gmra.mxu0 %v578
      %v1687 = vpop.f32.mrf.mxu0
      %v1688 = vadd.f32 %v1567, %v1687
      %v1689 = vpop.f32.mrf.mxu0
      %v1690 = vadd.f32 %v1569, %v1689
      %v1691 = vpop.f32.mrf.mxu0
      %v1692 = vadd.f32 %v1571, %v1691
      %v1693 = vpop.f32.mrf.mxu0
      %v1694 = vadd.f32 %v1573, %v1693
      %1695 = vmatprep.mubr.bf16.mxu0 %v585
      %1696 = vmatmul.mubr.bf16.gmra.mxu0 %v584
      %v1697 = vpop.f32.mrf.mxu0
      %v1698 = vadd.f32 %v1577, %v1697
      %v1699 = vpop.f32.mrf.mxu0
      %v1700 = vadd.f32 %v1579, %v1699
      %v1701 = vpop.f32.mrf.mxu0
      %v1702 = vadd.f32 %v1581, %v1701
      %v1703 = vpop.f32.mrf.mxu0
      %v1704 = vadd.f32 %v1583, %v1703
      %1705 = vmatprep.mubr.bf16.mxu0 %v591
      %1706 = vmatmul.mubr.bf16.gmra.mxu0 %v590
      %v1707 = vpop.f32.mrf.mxu0
      %v1708 = vadd.f32 %v1587, %v1707
      %v1709 = vpop.f32.mrf.mxu0
      %v1710 = vadd.f32 %v1589, %v1709
      %v1711 = vpop.f32.mrf.mxu0
      %v1712 = vadd.f32 %v1591, %v1711
      %v1713 = vpop.f32.mrf.mxu0
      %v1714 = vadd.f32 %v1593, %v1713
      %1715 = vmatprep.mubr.bf16.mxu0 %v597
      %1716 = vmatmul.mubr.bf16.gmra.mxu0 %v596
      %v1717 = vpop.f32.mrf.mxu0
      %v1718 = vadd.f32 %v1597, %v1717
      %v1719 = vpop.f32.mrf.mxu0
      %v1720 = vadd.f32 %v1599, %v1719
      %v1721 = vpop.f32.mrf.mxu0
      %v1722 = vadd.f32 %v1601, %v1721
      %v1723 = vpop.f32.mrf.mxu0
      %v1724 = vadd.f32 %v1603, %v1723
      %1725 = vmatprep.mubr.bf16.mxu0 %v603
      %1726 = vmatmul.mubr.bf16.gmra.mxu0 %v602
      %v1727 = vpop.f32.mrf.mxu0
      %v1728 = vadd.f32 %v1607, %v1727
      %v1729 = vpop.f32.mrf.mxu0
      %v1730 = vadd.f32 %v1609, %v1729
      %v1731 = vpop.f32.mrf.mxu0
      %v1732 = vadd.f32 %v1611, %v1731
      %v1733 = vpop.f32.mrf.mxu0
      %v1734 = vadd.f32 %v1613, %v1733
      %1735 = vmatprep.mubr.bf16.mxu0 %v609
      %1736 = vmatmul.mubr.bf16.gmra.mxu0 %v608
      %v1737 = vpop.f32.mrf.mxu0
      %v1738 = vadd.f32 %v1617, %v1737
      %v1739 = vpop.f32.mrf.mxu0
      %v1740 = vadd.f32 %v1619, %v1739
      %v1741 = vpop.f32.mrf.mxu0
      %v1742 = vadd.f32 %v1621, %v1741
      %v1743 = vpop.f32.mrf.mxu0
      %v1744 = vadd.f32 %v1623, %v1743
      %1745 = vmatprep.mubr.bf16.mxu0 %v615
      %1746 = vmatmul.mubr.bf16.gmra.mxu0 %v614
      %v1747 = vpop.f32.mrf.mxu0
      %v1748 = vadd.f32 %v1627, %v1747
      %v1749 = vpop.f32.mrf.mxu0
      %v1750 = vadd.f32 %v1629, %v1749
      %v1751 = vpop.f32.mrf.mxu0
      %v1752 = vpop.f32.mrf.mxu0
      %v1753 = vadd.f32 %v1632, %v1752
      %1754 = vdwg.mxu0
      %1755 = vmatprep.subr.bf16.mxu0 %v1338
      %1756 = vmatpush1.bf16.msra.mxu0 %v1337
      %1757 = vmatprep.subr.bf16.mxu0 %v1335
      %1758 = vmatpush1.bf16.msra.mxu0 %v1334
      %1759 = vmatprep.subr.bf16.mxu0 %v1332
      %1760 = vmatpush1.bf16.msra.mxu0 %v1331
      %1761 = vmatprep.subr.bf16.mxu0 %v1329
      %1762 = vmatpush1.bf16.msra.mxu0 %v1328
      %1763 = vmatprep.subr.bf16.mxu0 %v1326
      %1764 = vmatpush1.bf16.msra.mxu0 %v1325
      %1765 = vmatprep.subr.bf16.mxu0 %v1323
      %1766 = vmatpush1.bf16.msra.mxu0 %v1322
      %1767 = vmatprep.subr.bf16.mxu0 %v1320
      %1768 = vmatpush1.bf16.msra.mxu0 %v1319
      %1769 = vmatprep.subr.bf16.mxu0 %v1317
      %1770 = vmatpush1.bf16.msra.mxu0 %v1316
      %1771 = vmatprep.subr.bf16.mxu0 0
      %1772 = vmatpush2.bf16.msra.mxu0 0
      %1773 = vmatprep.subr.bf16.mxu0 0
      %1774 = vmatpush2.bf16.msra.mxu0 0
      %1775 = vmatprep.subr.bf16.mxu0 0
      %1776 = vmatpush2.bf16.msra.mxu0 0
      %1777 = vmatprep.subr.bf16.mxu0 0
      %1778 = vmatpush2.bf16.msra.mxu0 0
      %1779 = vmatprep.subr.bf16.mxu0 0
      %1780 = vmatpush2.bf16.msra.mxu0 0
      %1781 = vmatprep.subr.bf16.mxu0 %v1508
      %1782 = vmatpush2.bf16.msra.mxu0 %v1505
      %1783 = vmatprep.subr.bf16.mxu0 %v1344
      %1784 = vmatpush2.bf16.msra.mxu0 %v1343
      %1785 = vmatprep.subr.bf16.mxu0 %v1341
      %1786 = vmatpush2.bf16.msra.mxu0 %v1340
      %1787 = vmatprep.mubr.bf16.mxu0 %v1477
      %1788 = vmatmul.mubr.bf16.gmra.mxu0 %v568
      %v1789 = vpop.f32.mrf.mxu0
      %v1790 = vadd.f32 %v1669, %v1789
      %v1791 = vpop.f32.mrf.mxu0
      %v1792 = vpop.f32.mrf.mxu0
      %v1793 = vadd.f32 %v1672, %v1792
      %v1794 = vpop.f32.mrf.mxu0
      %v1795 = vadd.f32 %v1674, %v1794
      %1796 = vmatprep.mubr.bf16.mxu0 %v1480
      %1797 = vmatmul.mubr.bf16.gmra.mxu0 %v574
      %v1798 = vpop.f32.mrf.mxu0
      %v1799 = vadd.f32 %v1678, %v1798
      %v1800 = vpop.f32.mrf.mxu0
      %v1801 = vadd.f32 %v1680, %v1800
      %v1802 = vpop.f32.mrf.mxu0
      %v1803 = vadd.f32 %v1682, %v1802
      %v1804 = vpop.f32.mrf.mxu0
      %v1805 = vadd.f32 %v1684, %v1804
      %1806 = vmatprep.mubr.bf16.mxu0 %v1483
      %1807 = vmatmul.mubr.bf16.gmra.mxu0 %v580
      %v1808 = vpop.f32.mrf.mxu0
      %v1809 = vadd.f32 %v1688, %v1808
      %v1810 = vpop.f32.mrf.mxu0
      %v1811 = vadd.f32 %v1690, %v1810
      %v1812 = vpop.f32.mrf.mxu0
      %v1813 = vadd.f32 %v1692, %v1812
      %v1814 = vpop.f32.mrf.mxu0
      %v1815 = vadd.f32 %v1694, %v1814
      %1816 = vmatprep.mubr.bf16.mxu0 %v1486
      %1817 = vmatmul.mubr.bf16.gmra.mxu0 %v586
      %v1818 = vpop.f32.mrf.mxu0
      %v1819 = vadd.f32 %v1698, %v1818
      %v1820 = vpop.f32.mrf.mxu0
      %v1821 = vadd.f32 %v1700, %v1820
      %v1822 = vpop.f32.mrf.mxu0
      %v1823 = vadd.f32 %v1702, %v1822
      %v1824 = vpop.f32.mrf.mxu0
      %v1825 = vadd.f32 %v1704, %v1824
      %1826 = vmatprep.mubr.bf16.mxu0 %v1489
      %1827 = vmatmul.mubr.bf16.gmra.mxu0 %v592
      %v1828 = vpop.f32.mrf.mxu0
      %v1829 = vadd.f32 %v1708, %v1828
      %v1830 = vpop.f32.mrf.mxu0
      %v1831 = vadd.f32 %v1710, %v1830
      %v1832 = vpop.f32.mrf.mxu0
      %v1833 = vadd.f32 %v1712, %v1832
      %v1834 = vpop.f32.mrf.mxu0
      %v1835 = vadd.f32 %v1714, %v1834
      %1836 = vmatprep.mubr.bf16.mxu0 %v1492
      %1837 = vmatmul.mubr.bf16.gmra.mxu0 %v598
      %v1838 = vpop.f32.mrf.mxu0
      %v1839 = vadd.f32 %v1718, %v1838
      %v1840 = vpop.f32.mrf.mxu0
      %v1841 = vadd.f32 %v1720, %v1840
      %v1842 = vpop.f32.mrf.mxu0
      %v1843 = vadd.f32 %v1722, %v1842
      %v1844 = vpop.f32.mrf.mxu0
      %v1845 = vadd.f32 %v1724, %v1844
      %1846 = vmatprep.mubr.bf16.mxu0 %v1495
      %1847 = vmatmul.mubr.bf16.gmra.mxu0 %v604
      %v1848 = vpop.f32.mrf.mxu0
      %v1849 = vadd.f32 %v1728, %v1848
      %v1850 = vpop.f32.mrf.mxu0
      %v1851 = vadd.f32 %v1730, %v1850
      %v1852 = vpop.f32.mrf.mxu0
      %v1853 = vadd.f32 %v1732, %v1852
      %v1854 = vpop.f32.mrf.mxu0
      %v1855 = vadd.f32 %v1734, %v1854
      %1856 = vmatprep.mubr.bf16.mxu0 %v1498
      %1857 = vmatmul.mubr.bf16.gmra.mxu0 %v610
      %v1858 = vpop.f32.mrf.mxu0
      %v1859 = vadd.f32 %v1738, %v1858
      %v1860 = vpop.f32.mrf.mxu0
      %v1861 = vadd.f32 %v1740, %v1860
      %v1862 = vpop.f32.mrf.mxu0
      %v1863 = vadd.f32 %v1742, %v1862
      %v1864 = vpop.f32.mrf.mxu0
      %v1865 = vadd.f32 %v1744, %v1864
      %1866 = vmatprep.mubr.bf16.mxu0 %v1501
      %1867 = vmatmul.mubr.bf16.gmra.mxu0 %v616
      %v1868 = vpop.f32.mrf.mxu0
      %v1869 = vadd.f32 %v1748, %v1868
      %v1870 = vpop.f32.mrf.mxu0
      %v1871 = vadd.f32 %v1750, %v1870
      %v1872 = vpop.f32.mrf.mxu0
      %v1873 = vpop.f32.mrf.mxu0
      %v1874 = vadd.f32 %v1753, %v1873
      %1875 = vdwg.mxu0
      %1876 = vmatprep.subr.bf16.mxu0 0
      %1877 = vmatpush1.bf16.msra.mxu0 %v1243
      %1878 = vmatprep.subr.bf16.mxu0 0
      %1879 = vmatpush1.bf16.msra.mxu0 %v1240
      %1880 = vmatprep.subr.bf16.mxu0 0
      %1881 = vmatpush1.bf16.msra.mxu0 %v1237
      %1882 = vmatprep.subr.bf16.mxu0 0
      %1883 = vmatpush1.bf16.msra.mxu0 %v1234
      %1884 = vmatprep.subr.bf16.mxu0 0
      %1885 = vmatpush1.bf16.msra.mxu0 %v1231
      %1886 = vmatprep.subr.bf16.mxu0 0
      %1887 = vmatpush1.bf16.msra.mxu0 %v1228
      %1888 = vmatprep.subr.bf16.mxu0 0
      %1889 = vmatpush1.bf16.msra.mxu0 %v1225
      %1890 = vmatprep.subr.bf16.mxu0 0
      %1891 = vmatpush1.bf16.msra.mxu0 %v1222
      %1892 = vmatprep.subr.bf16.mxu0 0
      %1893 = vmatpush2.bf16.msra.mxu0 %v1267
      %1894 = vmatprep.subr.bf16.mxu0 0
      %1895 = vmatpush2.bf16.msra.mxu0 %v1264
      %1896 = vmatprep.subr.bf16.mxu0 0
      %1897 = vmatpush2.bf16.msra.mxu0 %v1261
      %1898 = vmatprep.subr.bf16.mxu0 0
      %1899 = vmatpush2.bf16.msra.mxu0 %v1258
      %1900 = vmatprep.subr.bf16.mxu0 0
      %1901 = vmatpush2.bf16.msra.mxu0 %v1255
      %1902 = vmatprep.subr.bf16.mxu0 0
      %1903 = vmatpush2.bf16.msra.mxu0 %v1252
      %1904 = vmatprep.subr.bf16.mxu0 0
      %1905 = vmatpush2.bf16.msra.mxu0 %v1249
      %1906 = vmatprep.subr.bf16.mxu0 0
      %1907 = vmatpush2.bf16.msra.mxu0 %v1246
      %1908 = vmatprep.mubr.bf16.mxu0 %v565
      %1909 = vmatmul.mubr.bf16.gmra.mxu0 %v564
      %v1910 = vpop.f32.mrf.mxu0
      %v1911 = vpop.f32.mrf.mxu0
      %v1912 = vpop.f32.mrf.mxu0
      %v1913 = vadd.f32 0.0, %v1912
      %v1914 = vpop.f32.mrf.mxu0
      %1915 = vmatprep.mubr.bf16.mxu0 %v571
      %1916 = vmatmul.mubr.bf16.gmra.mxu0 %v570
      %v1917 = vpop.f32.mrf.mxu0
      %v1918 = vadd.f32 0.0, %v1917
      %v1919 = vpop.f32.mrf.mxu0
      %v1920 = vpop.f32.mrf.mxu0
      %v1921 = vadd.f32 0.0, %v1920
      %v1922 = vpop.f32.mrf.mxu0
      %1923 = vmatprep.mubr.bf16.mxu0 %v577
      %1924 = vmatmul.mubr.bf16.gmra.mxu0 %v576
      %v1925 = vpop.f32.mrf.mxu0
      %v1926 = vadd.f32 0.0, %v1925
      %v1927 = vpop.f32.mrf.mxu0
      %v1928 = vpop.f32.mrf.mxu0
      %v1929 = vadd.f32 0.0, %v1928
      %v1930 = vpop.f32.mrf.mxu0
      %1931 = vmatprep.mubr.bf16.mxu0 %v583
      %1932 = vmatmul.mubr.bf16.gmra.mxu0 %v582
      %v1933 = vpop.f32.mrf.mxu0
      %v1934 = vadd.f32 0.0, %v1933
      %v1935 = vpop.f32.mrf.mxu0
      %v1936 = vpop.f32.mrf.mxu0
      %v1937 = vadd.f32 0.0, %v1936
      %v1938 = vpop.f32.mrf.mxu0
      %1939 = vmatprep.mubr.bf16.mxu0 %v589
      %1940 = vmatmul.mubr.bf16.gmra.mxu0 %v588
      %v1941 = vpop.f32.mrf.mxu0
      %v1942 = vadd.f32 0.0, %v1941
      %v1943 = vpop.f32.mrf.mxu0
      %v1944 = vpop.f32.mrf.mxu0
      %v1945 = vadd.f32 0.0, %v1944
      %v1946 = vpop.f32.mrf.mxu0
      %1947 = vmatprep.mubr.bf16.mxu0 %v595
      %1948 = vmatmul.mubr.bf16.gmra.mxu0 %v594
      %v1949 = vpop.f32.mrf.mxu0
      %v1950 = vadd.f32 0.0, %v1949
      %v1951 = vpop.f32.mrf.mxu0
      %v1952 = vpop.f32.mrf.mxu0
      %v1953 = vadd.f32 0.0, %v1952
      %v1954 = vpop.f32.mrf.mxu0
      %1955 = vmatprep.mubr.bf16.mxu0 %v601
      %1956 = vmatmul.mubr.bf16.gmra.mxu0 %v600
      %v1957 = vpop.f32.mrf.mxu0
      %v1958 = vadd.f32 0.0, %v1957
      %v1959 = vpop.f32.mrf.mxu0
      %v1960 = vpop.f32.mrf.mxu0
      %v1961 = vadd.f32 0.0, %v1960
      %v1962 = vpop.f32.mrf.mxu0
      %1963 = vmatprep.mubr.bf16.mxu0 %v607
      %1964 = vmatmul.mubr.bf16.gmra.mxu0 %v606
      %v1965 = vpop.f32.mrf.mxu0
      %v1966 = vadd.f32 0.0, %v1965
      %v1967 = vpop.f32.mrf.mxu0
      %v1968 = vpop.f32.mrf.mxu0
      %v1969 = vadd.f32 0.0, %v1968
      %v1970 = vpop.f32.mrf.mxu0
      %1971 = vmatprep.mubr.bf16.mxu0 %v613
      %1972 = vmatmul.mubr.bf16.gmra.mxu0 %v612
      %v1973 = vpop.f32.mrf.mxu0
      %v1974 = vadd.f32 0.0, %v1973
      %v1975 = vpop.f32.mrf.mxu0
      %v1976 = vpop.f32.mrf.mxu0
      %v1977 = vadd.f32 0.0, %v1976
      %v1978 = vpop.f32.mrf.mxu0
      %1979 = vdwg.mxu0
      %1980 = vmatprep.subr.bf16.mxu0 0
      %1981 = vmatpush1.bf16.msra.mxu0 %v1291
      %1982 = vmatprep.subr.bf16.mxu0 0
      %1983 = vmatpush1.bf16.msra.mxu0 %v1288
      %1984 = vmatprep.subr.bf16.mxu0 0
      %1985 = vmatpush1.bf16.msra.mxu0 %v1285
      %1986 = vmatprep.subr.bf16.mxu0 0
      %1987 = vmatpush1.bf16.msra.mxu0 %v1282
      %1988 = vmatprep.subr.bf16.mxu0 0
      %1989 = vmatpush1.bf16.msra.mxu0 %v1279
      %1990 = vmatprep.subr.bf16.mxu0 0
      %1991 = vmatpush1.bf16.msra.mxu0 %v1276
      %1992 = vmatprep.subr.bf16.mxu0 0
      %1993 = vmatpush1.bf16.msra.mxu0 %v1273
      %1994 = vmatprep.subr.bf16.mxu0 0
      %1995 = vmatpush1.bf16.msra.mxu0 %v1270
      %1996 = vmatprep.subr.bf16.mxu0 0
      %1997 = vmatpush2.bf16.msra.mxu0 %v1315
      %1998 = vmatprep.subr.bf16.mxu0 0
      %1999 = vmatpush2.bf16.msra.mxu0 %v1312
      %2000 = vmatprep.subr.bf16.mxu0 0
      %2001 = vmatpush2.bf16.msra.mxu0 %v1309
      %2002 = vmatprep.subr.bf16.mxu0 0
      %2003 = vmatpush2.bf16.msra.mxu0 %v1306
      %2004 = vmatprep.subr.bf16.mxu0 0
      %2005 = vmatpush2.bf16.msra.mxu0 %v1303
      %2006 = vmatprep.subr.bf16.mxu0 0
      %2007 = vmatpush2.bf16.msra.mxu0 %v1300
      %2008 = vmatprep.subr.bf16.mxu0 0
      %2009 = vmatpush2.bf16.msra.mxu0 %v1297
      %2010 = vmatprep.subr.bf16.mxu0 0
      %2011 = vmatpush2.bf16.msra.mxu0 %v1294
      %2012 = vmatprep.mubr.bf16.mxu0 %v567
      %2013 = vmatmul.mubr.bf16.gmra.mxu0 %v566
      %v2014 = vpop.f32.mrf.mxu0
      %v2015 = vpop.f32.mrf.mxu0
      %v2016 = vpop.f32.mrf.mxu0
      %v2017 = vadd.f32 %v1913, %v2016
      %v2018 = vpop.f32.mrf.mxu0
      %2019 = vmatprep.mubr.bf16.mxu0 %v573
      %2020 = vmatmul.mubr.bf16.gmra.mxu0 %v572
      %v2021 = vpop.f32.mrf.mxu0
      %v2022 = vadd.f32 %v1918, %v2021
      %v2023 = vpop.f32.mrf.mxu0
      %v2024 = vpop.f32.mrf.mxu0
      %v2025 = vadd.f32 %v1921, %v2024
      %v2026 = vpop.f32.mrf.mxu0
      %2027 = vmatprep.mubr.bf16.mxu0 %v579
      %2028 = vmatmul.mubr.bf16.gmra.mxu0 %v578
      %v2029 = vpop.f32.mrf.mxu0
      %v2030 = vadd.f32 %v1926, %v2029
      %v2031 = vpop.f32.mrf.mxu0
      %v2032 = vpop.f32.mrf.mxu0
      %v2033 = vadd.f32 %v1929, %v2032
      %v2034 = vpop.f32.mrf.mxu0
      %2035 = vmatprep.mubr.bf16.mxu0 %v585
      %2036 = vmatmul.mubr.bf16.gmra.mxu0 %v584
      %v2037 = vpop.f32.mrf.mxu0
      %v2038 = vadd.f32 %v1934, %v2037
      %v2039 = vpop.f32.mrf.mxu0
      %v2040 = vpop.f32.mrf.mxu0
      %v2041 = vadd.f32 %v1937, %v2040
      %v2042 = vpop.f32.mrf.mxu0
      %2043 = vmatprep.mubr.bf16.mxu0 %v591
      %2044 = vmatmul.mubr.bf16.gmra.mxu0 %v590
      %v2045 = vpop.f32.mrf.mxu0
      %v2046 = vadd.f32 %v1942, %v2045
      %v2047 = vpop.f32.mrf.mxu0
      %v2048 = vpop.f32.mrf.mxu0
      %v2049 = vadd.f32 %v1945, %v2048
      %v2050 = vpop.f32.mrf.mxu0
      %2051 = vmatprep.mubr.bf16.mxu0 %v597
      %2052 = vmatmul.mubr.bf16.gmra.mxu0 %v596
      %v2053 = vpop.f32.mrf.mxu0
      %v2054 = vadd.f32 %v1950, %v2053
      %v2055 = vpop.f32.mrf.mxu0
      %v2056 = vpop.f32.mrf.mxu0
      %v2057 = vadd.f32 %v1953, %v2056
      %v2058 = vpop.f32.mrf.mxu0
      %2059 = vmatprep.mubr.bf16.mxu0 %v603
      %2060 = vmatmul.mubr.bf16.gmra.mxu0 %v602
      %v2061 = vpop.f32.mrf.mxu0
      %v2062 = vadd.f32 %v1958, %v2061
      %v2063 = vpop.f32.mrf.mxu0
      %v2064 = vpop.f32.mrf.mxu0
      %v2065 = vadd.f32 %v1961, %v2064
      %v2066 = vpop.f32.mrf.mxu0
      %2067 = vmatprep.mubr.bf16.mxu0 %v609
      %2068 = vmatmul.mubr.bf16.gmra.mxu0 %v608
      %v2069 = vpop.f32.mrf.mxu0
      %v2070 = vadd.f32 %v1966, %v2069
      %v2071 = vpop.f32.mrf.mxu0
      %v2072 = vpop.f32.mrf.mxu0
      %v2073 = vadd.f32 %v1969, %v2072
      %v2074 = vpop.f32.mrf.mxu0
      %2075 = vmatprep.mubr.bf16.mxu0 %v615
      %2076 = vmatmul.mubr.bf16.gmra.mxu0 %v614
      %v2077 = vpop.f32.mrf.mxu0
      %v2078 = vadd.f32 %v1974, %v2077
      %v2079 = vpop.f32.mrf.mxu0
      %v2080 = vpop.f32.mrf.mxu0
      %v2081 = vadd.f32 %v1977, %v2080
      %v2082 = vpop.f32.mrf.mxu0
      %2083 = vdwg.mxu0
      %2084 = vmatprep.subr.bf16.mxu0 0
      %2085 = vmatpush1.bf16.msra.mxu0 %v1339
      %2086 = vmatprep.subr.bf16.mxu0 0
      %2087 = vmatpush1.bf16.msra.mxu0 %v1336
      %2088 = vmatprep.subr.bf16.mxu0 0
      %2089 = vmatpush1.bf16.msra.mxu0 %v1333
      %2090 = vmatprep.subr.bf16.mxu0 0
      %2091 = vmatpush1.bf16.msra.mxu0 %v1330
      %2092 = vmatprep.subr.bf16.mxu0 0
      %2093 = vmatpush1.bf16.msra.mxu0 %v1327
      %2094 = vmatprep.subr.bf16.mxu0 0
      %2095 = vmatpush1.bf16.msra.mxu0 %v1324
      %2096 = vmatprep.subr.bf16.mxu0 0
      %2097 = vmatpush1.bf16.msra.mxu0 %v1321
      %2098 = vmatprep.subr.bf16.mxu0 0
      %2099 = vmatpush1.bf16.msra.mxu0 %v1318
      %2100 = vmatprep.subr.bf16.mxu0 0
      %2101 = vmatpush2.bf16.msra.mxu0 0
      %2102 = vmatprep.subr.bf16.mxu0 0
      %2103 = vmatpush2.bf16.msra.mxu0 0
      %2104 = vmatprep.subr.bf16.mxu0 0
      %2105 = vmatpush2.bf16.msra.mxu0 0
      %2106 = vmatprep.subr.bf16.mxu0 0
      %2107 = vmatpush2.bf16.msra.mxu0 0
      %2108 = vmatprep.subr.bf16.mxu0 0
      %2109 = vmatpush2.bf16.msra.mxu0 0
      %2110 = vmatprep.subr.bf16.mxu0 0
      %2111 = vmatpush2.bf16.msra.mxu0 %v1511
      %2112 = vmatprep.subr.bf16.mxu0 0
      %2113 = vmatpush2.bf16.msra.mxu0 %v1345
      %2114 = vmatprep.subr.bf16.mxu0 0
      %2115 = vmatpush2.bf16.msra.mxu0 %v1342
      %2116 = vmatprep.mubr.bf16.mxu0 %v1477
      %2117 = vmatmul.mubr.bf16.gmra.mxu0 %v568
      %v2118 = vpop.f32.mrf.mxu0
      %v2119 = vpop.f32.mrf.mxu0
      %v2120 = vpop.f32.mrf.mxu0
      %v2121 = vadd.f32 %v2017, %v2120
      %v2122 = vpop.f32.mrf.mxu0
      %2123 = vmatprep.mubr.bf16.mxu0 %v1480
      %2124 = vmatmul.mubr.bf16.gmra.mxu0 %v574
      %v2125 = vpop.f32.mrf.mxu0
      %v2126 = vadd.f32 %v2022, %v2125
      %v2127 = vpop.f32.mrf.mxu0
      %v2128 = vpop.f32.mrf.mxu0
      %v2129 = vadd.f32 %v2025, %v2128
      %v2130 = vpop.f32.mrf.mxu0
      %2131 = vmatprep.mubr.bf16.mxu0 %v1483
      %2132 = vmatmul.mubr.bf16.gmra.mxu0 %v580
      %v2133 = vpop.f32.mrf.mxu0
      %v2134 = vadd.f32 %v2030, %v2133
      %v2135 = vpop.f32.mrf.mxu0
      %v2136 = vpop.f32.mrf.mxu0
      %v2137 = vadd.f32 %v2033, %v2136
      %v2138 = vpop.f32.mrf.mxu0
      %2139 = vmatprep.mubr.bf16.mxu0 %v1486
      %2140 = vmatmul.mubr.bf16.gmra.mxu0 %v586
      %v2141 = vpop.f32.mrf.mxu0
      %v2142 = vadd.f32 %v2038, %v2141
      %v2143 = vpop.f32.mrf.mxu0
      %v2144 = vpop.f32.mrf.mxu0
      %v2145 = vadd.f32 %v2041, %v2144
      %v2146 = vpop.f32.mrf.mxu0
      %2147 = vmatprep.mubr.bf16.mxu0 %v1489
      %2148 = vmatmul.mubr.bf16.gmra.mxu0 %v592
      %v2149 = vpop.f32.mrf.mxu0
      %v2150 = vadd.f32 %v2046, %v2149
      %v2151 = vpop.f32.mrf.mxu0
      %v2152 = vpop.f32.mrf.mxu0
      %v2153 = vadd.f32 %v2049, %v2152
      %v2154 = vpop.f32.mrf.mxu0
      %2155 = vmatprep.mubr.bf16.mxu0 %v1492
      %2156 = vmatmul.mubr.bf16.gmra.mxu0 %v598
      %v2157 = vpop.f32.mrf.mxu0
      %v2158 = vadd.f32 %v2054, %v2157
      %v2159 = vpop.f32.mrf.mxu0
      %v2160 = vpop.f32.mrf.mxu0
      %v2161 = vadd.f32 %v2057, %v2160
      %v2162 = vpop.f32.mrf.mxu0
      %2163 = vmatprep.mubr.bf16.mxu0 %v1495
      %2164 = vmatmul.mubr.bf16.gmra.mxu0 %v604
      %v2165 = vpop.f32.mrf.mxu0
      %v2166 = vadd.f32 %v2062, %v2165
      %v2167 = vpop.f32.mrf.mxu0
      %v2168 = vpop.f32.mrf.mxu0
      %v2169 = vadd.f32 %v2065, %v2168
      %v2170 = vpop.f32.mrf.mxu0
      %2171 = vmatprep.mubr.bf16.mxu0 %v1498
      %2172 = vmatmul.mubr.bf16.gmra.mxu0 %v610
      %v2173 = vpop.f32.mrf.mxu0
      %v2174 = vadd.f32 %v2070, %v2173
      %v2175 = vpop.f32.mrf.mxu0
      %v2176 = vpop.f32.mrf.mxu0
      %v2177 = vadd.f32 %v2073, %v2176
      %v2178 = vpop.f32.mrf.mxu0
      %2179 = vmatprep.mubr.bf16.mxu0 %v1501
      %2180 = vmatmul.mubr.bf16.gmra.mxu0 %v616
      %v2181 = vpop.f32.mrf.mxu0
      %v2182 = vadd.f32 %v2078, %v2181
      %v2183 = vpop.f32.mrf.mxu0
      %v2184 = vpop.f32.mrf.mxu0
      %v2185 = vadd.f32 %v2081, %v2184
      %v2186 = vpop.f32.mrf.mxu0
      %2187 = vdwg.mxu0
      %v2205 = vrot.slane %v1790, 1
      %v2206 = vrot.slane %v1793, 1
      %v2207 = vsel %vm1503, %v2205, %v2206
      %v2208 = vrot.slane %v1799, 1
      %v2209 = vsel %vm1503, %v2206, %v2208
      %v2210 = vrot.slane %v1803, 1
      %v2211 = vsel %vm1503, %v2208, %v2210
      %v2212 = vrot.slane %v1809, 1
      %v2213 = vsel %vm1503, %v2210, %v2212
      %v2214 = vrot.slane %v1813, 1
      %v2215 = vsel %vm1503, %v2212, %v2214
      %v2216 = vrot.slane %v1819, 1
      %v2217 = vsel %vm1503, %v2214, %v2216
      %v2218 = vrot.slane %v1823, 1
      %v2219 = vsel %vm1503, %v2216, %v2218
      %v2220 = vrot.slane %v1829, 1
      %v2221 = vsel %vm1503, %v2218, %v2220
      %v2222 = vrot.slane %v1833, 1
      %v2223 = vsel %vm1503, %v2220, %v2222
      %v2224 = vrot.slane %v1839, 1
      %v2225 = vsel %vm1503, %v2222, %v2224
      %v2226 = vrot.slane %v1843, 1
      %v2227 = vsel %vm1503, %v2224, %v2226
      %v2228 = vrot.slane %v1849, 1
      %v2229 = vsel %vm1503, %v2226, %v2228
      %v2230 = vrot.slane %v1853, 1
      %v2231 = vsel %vm1503, %v2228, %v2230
      %v2232 = vrot.slane %v1859, 1
      %v2233 = vsel %vm1503, %v2230, %v2232
      %v2234 = vrot.slane %v1863, 1
      %v2235 = vsel %vm1503, %v2232, %v2234
      %v2236 = vrot.slane %v1869, 1
      %v2237 = vsel %vm1503, %v2234, %v2236
      %2238 = vrot.lane.b32.xlu0 %v2207, 96
      %v2239 = vpop.permute.xlu0 %2238
      %2240 = vrot.lane.b32.xlu0 %v2209, 96
      %v2241 = vpop.permute.xlu0 %2240
      %2242 = vrot.lane.b32.xlu0 %v2211, 96
      %v2243 = vpop.permute.xlu0 %2242
      %2244 = vrot.lane.b32.xlu0 %v2213, 96
      %v2245 = vpop.permute.xlu0 %2244
      %2246 = vrot.lane.b32.xlu0 %v2215, 96
      %v2247 = vpop.permute.xlu0 %2246
      %2248 = vrot.lane.b32.xlu0 %v2217, 96
      %v2249 = vpop.permute.xlu0 %2248
      %2250 = vrot.lane.b32.xlu0 %v2219, 96
      %v2251 = vpop.permute.xlu0 %2250
      %2252 = vrot.lane.b32.xlu0 %v2221, 96
      %v2253 = vpop.permute.xlu0 %2252
      %2254 = vrot.lane.b32.xlu0 %v2223, 96
      %v2255 = vpop.permute.xlu0 %2254
      %2256 = vrot.lane.b32.xlu0 %v2225, 96
      %v2257 = vpop.permute.xlu0 %2256
      %2258 = vrot.lane.b32.xlu0 %v2227, 96
      %v2259 = vpop.permute.xlu0 %2258
      %2260 = vrot.lane.b32.xlu0 %v2229, 96
      %v2261 = vpop.permute.xlu0 %2260
      %2262 = vrot.lane.b32.xlu0 %v2231, 96
      %v2263 = vpop.permute.xlu0 %2262
      %2264 = vrot.lane.b32.xlu0 %v2233, 96
      %v2265 = vpop.permute.xlu0 %2264
      %2266 = vrot.lane.b32.xlu0 %v2235, 96
      %v2267 = vpop.permute.xlu0 %2266
      %2268 = vrot.lane.b32.xlu0 %v2237, 96
      %v2269 = vpop.permute.xlu0 %2268
      %2270 = vrot.lane.b32.xlu0 %v2236, 96
      %v2271 = vpop.permute.xlu0 %2270
      %v2289 = vadd.f32 %v1790, %v2239
      %v2290 = vadd.f32 %v1793, %v2241
      %v2291 = vadd.f32 %v1799, %v2243
      %v2292 = vadd.f32 %v1803, %v2245
      %v2293 = vadd.f32 %v1809, %v2247
      %v2294 = vadd.f32 %v1813, %v2249
      %v2295 = vadd.f32 %v1819, %v2251
      %v2296 = vadd.f32 %v1823, %v2253
      %v2297 = vadd.f32 %v1829, %v2255
      %v2298 = vadd.f32 %v1833, %v2257
      %v2299 = vadd.f32 %v1839, %v2259
      %v2300 = vadd.f32 %v1843, %v2261
      %v2301 = vadd.f32 %v1849, %v2263
      %v2302 = vadd.f32 %v1853, %v2265
      %v2303 = vadd.f32 %v1859, %v2267
      %v2304 = vadd.f32 %v1863, %v2269
      %v2305 = vadd.f32 %v1869, %v2271
      %vm2306 = vcmask 1045504
      %v2307 = vrot.slane %v1790, 2
      %v2308 = vrot.slane %v1793, 2
      %v2309 = vsel %vm2306, %v2307, %v2308
      %v2310 = vrot.slane %v1799, 2
      %v2311 = vsel %vm2306, %v2308, %v2310
      %v2312 = vrot.slane %v1803, 2
      %v2313 = vsel %vm2306, %v2310, %v2312
      %v2314 = vrot.slane %v1809, 2
      %v2315 = vsel %vm2306, %v2312, %v2314
      %v2316 = vrot.slane %v1813, 2
      %v2317 = vsel %vm2306, %v2314, %v2316
      %v2318 = vrot.slane %v1819, 2
      %v2319 = vsel %vm2306, %v2316, %v2318
      %v2320 = vrot.slane %v1823, 2
      %v2321 = vsel %vm2306, %v2318, %v2320
      %v2322 = vrot.slane %v1829, 2
      %v2323 = vsel %vm2306, %v2320, %v2322
      %v2324 = vrot.slane %v1833, 2
      %v2325 = vsel %vm2306, %v2322, %v2324
      %v2326 = vrot.slane %v1839, 2
      %v2327 = vsel %vm2306, %v2324, %v2326
      %v2328 = vrot.slane %v1843, 2
      %v2329 = vsel %vm2306, %v2326, %v2328
      %v2330 = vrot.slane %v1849, 2
      %v2331 = vsel %vm2306, %v2328, %v2330
      %v2332 = vrot.slane %v1853, 2
      %v2333 = vsel %vm2306, %v2330, %v2332
      %v2334 = vrot.slane %v1859, 2
      %v2335 = vsel %vm2306, %v2332, %v2334
      %v2336 = vrot.slane %v1863, 2
      %v2337 = vsel %vm2306, %v2334, %v2336
      %v2338 = vrot.slane %v1869, 2
      %v2339 = vsel %vm2306, %v2336, %v2338
      %2340 = vrot.lane.b32.xlu0 %v2309, 64
      %v2341 = vpop.permute.xlu0 %2340
      %2342 = vrot.lane.b32.xlu0 %v2311, 64
      %v2343 = vpop.permute.xlu0 %2342
      %2344 = vrot.lane.b32.xlu0 %v2313, 64
      %v2345 = vpop.permute.xlu0 %2344
      %2346 = vrot.lane.b32.xlu0 %v2315, 64
      %v2347 = vpop.permute.xlu0 %2346
      %2348 = vrot.lane.b32.xlu0 %v2317, 64
      %v2349 = vpop.permute.xlu0 %2348
      %2350 = vrot.lane.b32.xlu0 %v2319, 64
      %v2351 = vpop.permute.xlu0 %2350
      %2352 = vrot.lane.b32.xlu0 %v2321, 64
      %v2353 = vpop.permute.xlu0 %2352
      %2354 = vrot.lane.b32.xlu0 %v2323, 64
      %v2355 = vpop.permute.xlu0 %2354
      %2356 = vrot.lane.b32.xlu0 %v2325, 64
      %v2357 = vpop.permute.xlu0 %2356
      %2358 = vrot.lane.b32.xlu0 %v2327, 64
      %v2359 = vpop.permute.xlu0 %2358
      %2360 = vrot.lane.b32.xlu0 %v2329, 64
      %v2361 = vpop.permute.xlu0 %2360
      %2362 = vrot.lane.b32.xlu0 %v2331, 64
      %v2363 = vpop.permute.xlu0 %2362
      %2364 = vrot.lane.b32.xlu0 %v2333, 64
      %v2365 = vpop.permute.xlu0 %2364
      %2366 = vrot.lane.b32.xlu0 %v2335, 64
      %v2367 = vpop.permute.xlu0 %2366
      %2368 = vrot.lane.b32.xlu0 %v2337, 64
      %v2369 = vpop.permute.xlu0 %2368
      %2370 = vrot.lane.b32.xlu0 %v2339, 64
      %v2371 = vpop.permute.xlu0 %2370
      %2372 = vrot.lane.b32.xlu0 %v2338, 64
      %v2373 = vpop.permute.xlu0 %2372
      %v2391 = vadd.f32 %v2289, %v2341
      %v2392 = vadd.f32 %v2290, %v2343
      %v2393 = vadd.f32 %v2291, %v2345
      %v2394 = vadd.f32 %v2292, %v2347
      %v2395 = vadd.f32 %v2293, %v2349
      %v2396 = vadd.f32 %v2294, %v2351
      %v2397 = vadd.f32 %v2295, %v2353
      %v2398 = vadd.f32 %v2296, %v2355
      %v2399 = vadd.f32 %v2297, %v2357
      %v2400 = vadd.f32 %v2298, %v2359
      %v2401 = vadd.f32 %v2299, %v2361
      %v2402 = vadd.f32 %v2300, %v2363
      %v2403 = vadd.f32 %v2301, %v2365
      %v2404 = vadd.f32 %v2302, %v2367
      %v2405 = vadd.f32 %v2303, %v2369
      %v2406 = vadd.f32 %v2304, %v2371
      %v2407 = vadd.f32 %v2305, %v2373
      %vm2408 = vcmask 1044480
      %v2409 = vrot.slane %v1790, 3
      %v2410 = vrot.slane %v1793, 3
      %v2411 = vsel %vm2408, %v2409, %v2410
      %v2412 = vrot.slane %v1799, 3
      %v2413 = vsel %vm2408, %v2410, %v2412
      %v2414 = vrot.slane %v1803, 3
      %v2415 = vsel %vm2408, %v2412, %v2414
      %v2416 = vrot.slane %v1809, 3
      %v2417 = vsel %vm2408, %v2414, %v2416
      %v2418 = vrot.slane %v1813, 3
      %v2419 = vsel %vm2408, %v2416, %v2418
      %v2420 = vrot.slane %v1819, 3
      %v2421 = vsel %vm2408, %v2418, %v2420
      %v2422 = vrot.slane %v1823, 3
      %v2423 = vsel %vm2408, %v2420, %v2422
      %v2424 = vrot.slane %v1829, 3
      %v2425 = vsel %vm2408, %v2422, %v2424
      %v2426 = vrot.slane %v1833, 3
      %v2427 = vsel %vm2408, %v2424, %v2426
      %v2428 = vrot.slane %v1839, 3
      %v2429 = vsel %vm2408, %v2426, %v2428
      %v2430 = vrot.slane %v1843, 3
      %v2431 = vsel %vm2408, %v2428, %v2430
      %v2432 = vrot.slane %v1849, 3
      %v2433 = vsel %vm2408, %v2430, %v2432
      %v2434 = vrot.slane %v1853, 3
      %v2435 = vsel %vm2408, %v2432, %v2434
      %v2436 = vrot.slane %v1859, 3
      %v2437 = vsel %vm2408, %v2434, %v2436
      %v2438 = vrot.slane %v1863, 3
      %v2439 = vsel %vm2408, %v2436, %v2438
      %v2440 = vrot.slane %v1869, 3
      %v2441 = vsel %vm2408, %v2438, %v2440
      %2442 = vrot.lane.b32.xlu0 %v2411, 32
      %v2443 = vpop.permute.xlu0 %2442
      %2444 = vrot.lane.b32.xlu0 %v2413, 32
      %v2445 = vpop.permute.xlu0 %2444
      %2446 = vrot.lane.b32.xlu0 %v2415, 32
      %v2447 = vpop.permute.xlu0 %2446
      %2448 = vrot.lane.b32.xlu0 %v2417, 32
      %v2449 = vpop.permute.xlu0 %2448
      %2450 = vrot.lane.b32.xlu0 %v2419, 32
      %v2451 = vpop.permute.xlu0 %2450
      %2452 = vrot.lane.b32.xlu0 %v2421, 32
      %v2453 = vpop.permute.xlu0 %2452
      %2454 = vrot.lane.b32.xlu0 %v2423, 32
      %v2455 = vpop.permute.xlu0 %2454
      %2456 = vrot.lane.b32.xlu0 %v2425, 32
      %v2457 = vpop.permute.xlu0 %2456
      %2458 = vrot.lane.b32.xlu0 %v2427, 32
      %v2459 = vpop.permute.xlu0 %2458
      %2460 = vrot.lane.b32.xlu0 %v2429, 32
      %v2461 = vpop.permute.xlu0 %2460
      %2462 = vrot.lane.b32.xlu0 %v2431, 32
      %v2463 = vpop.permute.xlu0 %2462
      %2464 = vrot.lane.b32.xlu0 %v2433, 32
      %v2465 = vpop.permute.xlu0 %2464
      %2466 = vrot.lane.b32.xlu0 %v2435, 32
      %v2467 = vpop.permute.xlu0 %2466
      %2468 = vrot.lane.b32.xlu0 %v2437, 32
      %v2469 = vpop.permute.xlu0 %2468
      %2470 = vrot.lane.b32.xlu0 %v2439, 32
      %v2471 = vpop.permute.xlu0 %2470
      %2472 = vrot.lane.b32.xlu0 %v2441, 32
      %v2473 = vpop.permute.xlu0 %2472
      %2474 = vrot.lane.b32.xlu0 %v2440, 32
      %v2475 = vpop.permute.xlu0 %2474
      %v2493 = vadd.f32 %v2391, %v2443
      %v2494 = vadd.f32 %v2392, %v2445
      %v2495 = vadd.f32 %v2393, %v2447
      %v2496 = vadd.f32 %v2394, %v2449
      %v2497 = vadd.f32 %v2395, %v2451
      %v2498 = vadd.f32 %v2396, %v2453
      %v2499 = vadd.f32 %v2397, %v2455
      %v2500 = vadd.f32 %v2398, %v2457
      %v2501 = vadd.f32 %v2399, %v2459
      %v2502 = vadd.f32 %v2400, %v2461
      %v2503 = vadd.f32 %v2401, %v2463
      %v2504 = vadd.f32 %v2402, %v2465
      %v2505 = vadd.f32 %v2403, %v2467
      %v2506 = vadd.f32 %v2404, %v2469
      %v2507 = vadd.f32 %v2405, %v2471
      %v2508 = vadd.f32 %v2406, %v2473
      %v2509 = vadd.f32 %v2407, %v2475
      %vm2526 = vcmask 1043456
      %v2527 = vrot.slane %v1795, 4
      %v2528 = vrot.slane %v1801, 4
      %v2529 = vsel %vm2526, %v2527, %v2528
      %v2530 = vrot.slane %v1805, 4
      %v2531 = vsel %vm2526, %v2528, %v2530
      %v2532 = vrot.slane %v1811, 4
      %v2533 = vsel %vm2526, %v2530, %v2532
      %v2534 = vrot.slane %v1815, 4
      %v2535 = vsel %vm2526, %v2532, %v2534
      %v2536 = vrot.slane %v1821, 4
      %v2537 = vsel %vm2526, %v2534, %v2536
      %v2538 = vrot.slane %v1825, 4
      %v2539 = vsel %vm2526, %v2536, %v2538
      %v2540 = vrot.slane %v1831, 4
      %v2541 = vsel %vm2526, %v2538, %v2540
      %v2542 = vrot.slane %v1835, 4
      %v2543 = vsel %vm2526, %v2540, %v2542
      %v2544 = vrot.slane %v1841, 4
      %v2545 = vsel %vm2526, %v2542, %v2544
      %v2546 = vrot.slane %v1845, 4
      %v2547 = vsel %vm2526, %v2544, %v2546
      %v2548 = vrot.slane %v1851, 4
      %v2549 = vsel %vm2526, %v2546, %v2548
      %v2550 = vrot.slane %v1855, 4
      %v2551 = vsel %vm2526, %v2548, %v2550
      %v2552 = vrot.slane %v1861, 4
      %v2553 = vsel %vm2526, %v2550, %v2552
      %v2554 = vrot.slane %v1865, 4
      %v2555 = vsel %vm2526, %v2552, %v2554
      %v2556 = vrot.slane %v1871, 4
      %v2557 = vsel %vm2526, %v2554, %v2556
      %v2575 = vadd.f32 %v2493, %v2527
      %v2576 = vadd.f32 %v2494, %v2529
      %v2577 = vadd.f32 %v2495, %v2531
      %v2578 = vadd.f32 %v2496, %v2533
      %v2579 = vadd.f32 %v2497, %v2535
      %v2580 = vadd.f32 %v2498, %v2537
      %v2581 = vadd.f32 %v2499, %v2539
      %v2582 = vadd.f32 %v2500, %v2541
      %v2583 = vadd.f32 %v2501, %v2543
      %v2584 = vadd.f32 %v2502, %v2545
      %v2585 = vadd.f32 %v2503, %v2547
      %v2586 = vadd.f32 %v2504, %v2549
      %v2587 = vadd.f32 %v2505, %v2551
      %v2588 = vadd.f32 %v2506, %v2553
      %v2589 = vadd.f32 %v2507, %v2555
      %v2590 = vadd.f32 %v2508, %v2557
      %v2591 = vadd.f32 %v2509, %v2556
      %vm2593 = vcmask 1042432
      %v2594 = vrot.slane %v1795, 5
      %v2595 = vrot.slane %v1801, 5
      %v2596 = vsel %vm2593, %v2594, %v2595
      %v2597 = vrot.slane %v1805, 5
      %v2598 = vsel %vm2593, %v2595, %v2597
      %v2599 = vrot.slane %v1811, 5
      %v2600 = vsel %vm2593, %v2597, %v2599
      %v2601 = vrot.slane %v1815, 5
      %v2602 = vsel %vm2593, %v2599, %v2601
      %v2603 = vrot.slane %v1821, 5
      %v2604 = vsel %vm2593, %v2601, %v2603
      %v2605 = vrot.slane %v1825, 5
      %v2606 = vsel %vm2593, %v2603, %v2605
      %v2607 = vrot.slane %v1831, 5
      %v2608 = vsel %vm2593, %v2605, %v2607
      %v2609 = vrot.slane %v1835, 5
      %v2610 = vsel %vm2593, %v2607, %v2609
      %v2611 = vrot.slane %v1841, 5
      %v2612 = vsel %vm2593, %v2609, %v2611
      %v2613 = vrot.slane %v1845, 5
      %v2614 = vsel %vm2593, %v2611, %v2613
      %v2615 = vrot.slane %v1851, 5
      %v2616 = vsel %vm2593, %v2613, %v2615
      %v2617 = vrot.slane %v1855, 5
      %v2618 = vsel %vm2593, %v2615, %v2617
      %v2619 = vrot.slane %v1861, 5
      %v2620 = vsel %vm2593, %v2617, %v2619
      %v2621 = vrot.slane %v1865, 5
      %v2622 = vsel %vm2593, %v2619, %v2621
      %v2623 = vrot.slane %v1871, 5
      %v2624 = vsel %vm2593, %v2621, %v2623
      %v2625 = vrot.slane %v1874, 5
      %v2626 = vsel %vm2593, %v2623, %v2625
      %2627 = vrot.lane.b32.xlu0 %v2594, 96
      %v2628 = vpop.permute.xlu0 %2627
      %2629 = vrot.lane.b32.xlu0 %v2596, 96
      %v2630 = vpop.permute.xlu0 %2629
      %2631 = vrot.lane.b32.xlu0 %v2598, 96
      %v2632 = vpop.permute.xlu0 %2631
      %2633 = vrot.lane.b32.xlu0 %v2600, 96
      %v2634 = vpop.permute.xlu0 %2633
      %2635 = vrot.lane.b32.xlu0 %v2602, 96
      %v2636 = vpop.permute.xlu0 %2635
      %2637 = vrot.lane.b32.xlu0 %v2604, 96
      %v2638 = vpop.permute.xlu0 %2637
      %2639 = vrot.lane.b32.xlu0 %v2606, 96
      %v2640 = vpop.permute.xlu0 %2639
      %2641 = vrot.lane.b32.xlu0 %v2608, 96
      %v2642 = vpop.permute.xlu0 %2641
      %2643 = vrot.lane.b32.xlu0 %v2610, 96
      %v2644 = vpop.permute.xlu0 %2643
      %2645 = vrot.lane.b32.xlu0 %v2612, 96
      %v2646 = vpop.permute.xlu0 %2645
      %2647 = vrot.lane.b32.xlu0 %v2614, 96
      %v2648 = vpop.permute.xlu0 %2647
      %2649 = vrot.lane.b32.xlu0 %v2616, 96
      %v2650 = vpop.permute.xlu0 %2649
      %2651 = vrot.lane.b32.xlu0 %v2618, 96
      %v2652 = vpop.permute.xlu0 %2651
      %2653 = vrot.lane.b32.xlu0 %v2620, 96
      %v2654 = vpop.permute.xlu0 %2653
      %2655 = vrot.lane.b32.xlu0 %v2622, 96
      %v2656 = vpop.permute.xlu0 %2655
      %2657 = vrot.lane.b32.xlu0 %v2624, 96
      %v2658 = vpop.permute.xlu0 %2657
      %2659 = vrot.lane.b32.xlu0 %v2626, 96
      %v2660 = vpop.permute.xlu0 %2659
      %v2678 = vadd.f32 %v2575, %v2628
      %v2679 = vadd.f32 %v2576, %v2630
      %v2680 = vadd.f32 %v2577, %v2632
      %v2681 = vadd.f32 %v2578, %v2634
      %v2682 = vadd.f32 %v2579, %v2636
      %v2683 = vadd.f32 %v2580, %v2638
      %v2684 = vadd.f32 %v2581, %v2640
      %v2685 = vadd.f32 %v2582, %v2642
      %v2686 = vadd.f32 %v2583, %v2644
      %v2687 = vadd.f32 %v2584, %v2646
      %v2688 = vadd.f32 %v2585, %v2648
      %v2689 = vadd.f32 %v2586, %v2650
      %v2690 = vadd.f32 %v2587, %v2652
      %v2691 = vadd.f32 %v2588, %v2654
      %v2692 = vadd.f32 %v2589, %v2656
      %v2693 = vadd.f32 %v2590, %v2658
      %v2694 = vadd.f32 %v2591, %v2660
      %vm2695 = vcmask 1041408
      %v2696 = vrot.slane %v1795, 6
      %v2697 = vrot.slane %v1801, 6
      %v2698 = vsel %vm2695, %v2696, %v2697
      %v2699 = vrot.slane %v1805, 6
      %v2700 = vsel %vm2695, %v2697, %v2699
      %v2701 = vrot.slane %v1811, 6
      %v2702 = vsel %vm2695, %v2699, %v2701
      %v2703 = vrot.slane %v1815, 6
      %v2704 = vsel %vm2695, %v2701, %v2703
      %v2705 = vrot.slane %v1821, 6
      %v2706 = vsel %vm2695, %v2703, %v2705
      %v2707 = vrot.slane %v1825, 6
      %v2708 = vsel %vm2695, %v2705, %v2707
      %v2709 = vrot.slane %v1831, 6
      %v2710 = vsel %vm2695, %v2707, %v2709
      %v2711 = vrot.slane %v1835, 6
      %v2712 = vsel %vm2695, %v2709, %v2711
      %v2713 = vrot.slane %v1841, 6
      %v2714 = vsel %vm2695, %v2711, %v2713
      %v2715 = vrot.slane %v1845, 6
      %v2716 = vsel %vm2695, %v2713, %v2715
      %v2717 = vrot.slane %v1851, 6
      %v2718 = vsel %vm2695, %v2715, %v2717
      %v2719 = vrot.slane %v1855, 6
      %v2720 = vsel %vm2695, %v2717, %v2719
      %v2721 = vrot.slane %v1861, 6
      %v2722 = vsel %vm2695, %v2719, %v2721
      %v2723 = vrot.slane %v1865, 6
      %v2724 = vsel %vm2695, %v2721, %v2723
      %v2725 = vrot.slane %v1871, 6
      %v2726 = vsel %vm2695, %v2723, %v2725
      %v2727 = vrot.slane %v1874, 6
      %v2728 = vsel %vm2695, %v2725, %v2727
      %2729 = vrot.lane.b32.xlu0 %v2696, 64
      %v2730 = vpop.permute.xlu0 %2729
      %2731 = vrot.lane.b32.xlu0 %v2698, 64
      %v2732 = vpop.permute.xlu0 %2731
      %2733 = vrot.lane.b32.xlu0 %v2700, 64
      %v2734 = vpop.permute.xlu0 %2733
      %2735 = vrot.lane.b32.xlu0 %v2702, 64
      %v2736 = vpop.permute.xlu0 %2735
      %2737 = vrot.lane.b32.xlu0 %v2704, 64
      %v2738 = vpop.permute.xlu0 %2737
      %2739 = vrot.lane.b32.xlu0 %v2706, 64
      %v2740 = vpop.permute.xlu0 %2739
      %2741 = vrot.lane.b32.xlu0 %v2708, 64
      %v2742 = vpop.permute.xlu0 %2741
      %2743 = vrot.lane.b32.xlu0 %v2710, 64
      %v2744 = vpop.permute.xlu0 %2743
      %2745 = vrot.lane.b32.xlu0 %v2712, 64
      %v2746 = vpop.permute.xlu0 %2745
      %2747 = vrot.lane.b32.xlu0 %v2714, 64
      %v2748 = vpop.permute.xlu0 %2747
      %2749 = vrot.lane.b32.xlu0 %v2716, 64
      %v2750 = vpop.permute.xlu0 %2749
      %2751 = vrot.lane.b32.xlu0 %v2718, 64
      %v2752 = vpop.permute.xlu0 %2751
      %2753 = vrot.lane.b32.xlu0 %v2720, 64
      %v2754 = vpop.permute.xlu0 %2753
      %2755 = vrot.lane.b32.xlu0 %v2722, 64
      %v2756 = vpop.permute.xlu0 %2755
      %2757 = vrot.lane.b32.xlu0 %v2724, 64
      %v2758 = vpop.permute.xlu0 %2757
      %2759 = vrot.lane.b32.xlu0 %v2726, 64
      %v2760 = vpop.permute.xlu0 %2759
      %2761 = vrot.lane.b32.xlu0 %v2728, 64
      %v2762 = vpop.permute.xlu0 %2761
      %v2780 = vadd.f32 %v2678, %v2730
      %v2781 = vadd.f32 %v2679, %v2732
      %v2782 = vadd.f32 %v2680, %v2734
      %v2783 = vadd.f32 %v2681, %v2736
      %v2784 = vadd.f32 %v2682, %v2738
      %v2785 = vadd.f32 %v2683, %v2740
      %v2786 = vadd.f32 %v2684, %v2742
      %v2787 = vadd.f32 %v2685, %v2744
      %v2788 = vadd.f32 %v2686, %v2746
      %v2789 = vadd.f32 %v2687, %v2748
      %v2790 = vadd.f32 %v2688, %v2750
      %v2791 = vadd.f32 %v2689, %v2752
      %v2792 = vadd.f32 %v2690, %v2754
      %v2793 = vadd.f32 %v2691, %v2756
      %v2794 = vadd.f32 %v2692, %v2758
      %v2795 = vadd.f32 %v2693, %v2760
      %v2796 = vadd.f32 %v2694, %v2762
      %vm2797 = vcmask 1040384
      %v2798 = vrot.slane %v1795, 7
      %v2799 = vrot.slane %v1801, 7
      %v2800 = vsel %vm2797, %v2798, %v2799
      %v2801 = vrot.slane %v1805, 7
      %v2802 = vsel %vm2797, %v2799, %v2801
      %v2803 = vrot.slane %v1811, 7
      %v2804 = vsel %vm2797, %v2801, %v2803
      %v2805 = vrot.slane %v1815, 7
      %v2806 = vsel %vm2797, %v2803, %v2805
      %v2807 = vrot.slane %v1821, 7
      %v2808 = vsel %vm2797, %v2805, %v2807
      %v2809 = vrot.slane %v1825, 7
      %v2810 = vsel %vm2797, %v2807, %v2809
      %v2811 = vrot.slane %v1831, 7
      %v2812 = vsel %vm2797, %v2809, %v2811
      %v2813 = vrot.slane %v1835, 7
      %v2814 = vsel %vm2797, %v2811, %v2813
      %v2815 = vrot.slane %v1841, 7
      %v2816 = vsel %vm2797, %v2813, %v2815
      %v2817 = vrot.slane %v1845, 7
      %v2818 = vsel %vm2797, %v2815, %v2817
      %v2819 = vrot.slane %v1851, 7
      %v2820 = vsel %vm2797, %v2817, %v2819
      %v2821 = vrot.slane %v1855, 7
      %v2822 = vsel %vm2797, %v2819, %v2821
      %v2823 = vrot.slane %v1861, 7
      %v2824 = vsel %vm2797, %v2821, %v2823
      %v2825 = vrot.slane %v1865, 7
      %v2826 = vsel %vm2797, %v2823, %v2825
      %v2827 = vrot.slane %v1871, 7
      %v2828 = vsel %vm2797, %v2825, %v2827
      %v2829 = vrot.slane %v1874, 7
      %v2830 = vsel %vm2797, %v2827, %v2829
      %2831 = vrot.lane.b32.xlu0 %v2798, 32
      %v2832 = vpop.permute.xlu0 %2831
      %2833 = vrot.lane.b32.xlu0 %v2800, 32
      %v2834 = vpop.permute.xlu0 %2833
      %2835 = vrot.lane.b32.xlu0 %v2802, 32
      %v2836 = vpop.permute.xlu0 %2835
      %2837 = vrot.lane.b32.xlu0 %v2804, 32
      %v2838 = vpop.permute.xlu0 %2837
      %2839 = vrot.lane.b32.xlu0 %v2806, 32
      %v2840 = vpop.permute.xlu0 %2839
      %2841 = vrot.lane.b32.xlu0 %v2808, 32
      %v2842 = vpop.permute.xlu0 %2841
      %2843 = vrot.lane.b32.xlu0 %v2810, 32
      %v2844 = vpop.permute.xlu0 %2843
      %2845 = vrot.lane.b32.xlu0 %v2812, 32
      %v2846 = vpop.permute.xlu0 %2845
      %2847 = vrot.lane.b32.xlu0 %v2814, 32
      %v2848 = vpop.permute.xlu0 %2847
      %2849 = vrot.lane.b32.xlu0 %v2816, 32
      %v2850 = vpop.permute.xlu0 %2849
      %2851 = vrot.lane.b32.xlu0 %v2818, 32
      %v2852 = vpop.permute.xlu0 %2851
      %2853 = vrot.lane.b32.xlu0 %v2820, 32
      %v2854 = vpop.permute.xlu0 %2853
      %2855 = vrot.lane.b32.xlu0 %v2822, 32
      %v2856 = vpop.permute.xlu0 %2855
      %2857 = vrot.lane.b32.xlu0 %v2824, 32
      %v2858 = vpop.permute.xlu0 %2857
      %2859 = vrot.lane.b32.xlu0 %v2826, 32
      %v2860 = vpop.permute.xlu0 %2859
      %2861 = vrot.lane.b32.xlu0 %v2828, 32
      %v2862 = vpop.permute.xlu0 %2861
      %2863 = vrot.lane.b32.xlu0 %v2830, 32
      %v2864 = vpop.permute.xlu0 %2863
      %v2882 = vadd.f32 %v2780, %v2832
      %v2883 = vadd.f32 %v2781, %v2834
      %v2884 = vadd.f32 %v2782, %v2836
      %v2885 = vadd.f32 %v2783, %v2838
      %v2886 = vadd.f32 %v2784, %v2840
      %v2887 = vadd.f32 %v2785, %v2842
      %v2888 = vadd.f32 %v2786, %v2844
      %v2889 = vadd.f32 %v2787, %v2846
      %v2890 = vadd.f32 %v2788, %v2848
      %v2891 = vadd.f32 %v2789, %v2850
      %v2892 = vadd.f32 %v2790, %v2852
      %v2893 = vadd.f32 %v2791, %v2854
      %v2894 = vadd.f32 %v2792, %v2856
      %v2895 = vadd.f32 %v2793, %v2858
      %v2896 = vadd.f32 %v2794, %v2860
      %v2897 = vadd.f32 %v2795, %v2862
      %v2898 = vadd.f32 %v2796, %v2864
      %v2899 = vadd.f32 %v2882, %v2121
      %v2900 = vadd.f32 %v2883, %v2126
      %v2901 = vadd.f32 %v2884, %v2129
      %v2902 = vadd.f32 %v2885, %v2134
      %v2903 = vadd.f32 %v2886, %v2137
      %v2904 = vadd.f32 %v2887, %v2142
      %v2905 = vadd.f32 %v2888, %v2145
      %v2906 = vadd.f32 %v2889, %v2150
      %v2907 = vadd.f32 %v2890, %v2153
      %v2908 = vadd.f32 %v2891, %v2158
      %v2909 = vadd.f32 %v2892, %v2161
      %v2910 = vadd.f32 %v2893, %v2166
      %v2911 = vadd.f32 %v2894, %v2169
      %v2912 = vadd.f32 %v2895, %v2174
      %v2913 = vadd.f32 %v2896, %v2177
      %v2914 = vadd.f32 %v2897, %v2182
      %v2915 = vadd.f32 %v2898, %v2185
      %v2916 = vld [vmem:[%s4] sm:$0x1]
      %v2918 = vlaneseq
      %v2919 = vshrl.u32 %v2918, 7
      %v2920 = vsub.s32 0, %v2919
      %v2921 = vrot.slane %v2916, %v2920
      %v2923 = vadd.f32 %v2899, %v2921
      %v2924 = vadd.f32 %v2900, %v2921
      %v2925 = vadd.f32 %v2901, %v2921
      %v2926 = vadd.f32 %v2902, %v2921
      %v2927 = vadd.f32 %v2903, %v2921
      %v2928 = vadd.f32 %v2904, %v2921
      %v2929 = vadd.f32 %v2905, %v2921
      %v2930 = vadd.f32 %v2906, %v2921
      %v2931 = vadd.f32 %v2907, %v2921
      %v2932 = vadd.f32 %v2908, %v2921
      %v2933 = vadd.f32 %v2909, %v2921
      %v2934 = vadd.f32 %v2910, %v2921
      %v2935 = vadd.f32 %v2911, %v2921
      %v2936 = vadd.f32 %v2912, %v2921
      %v2937 = vadd.f32 %v2913, %v2921
      %v2938 = vadd.f32 %v2914, %v2921
      %v2939 = vadd.f32 %v2915, %v2921
      %v2940 = vmax.f32 %v2923, 0.0
      %v2941 = vmax.f32 %v2924, 0.0
      %v2942 = vmax.f32 %v2925, 0.0
      %v2943 = vmax.f32 %v2926, 0.0
      %v2944 = vmax.f32 %v2927, 0.0
      %v2945 = vmax.f32 %v2928, 0.0
      %v2946 = vmax.f32 %v2929, 0.0
      %v2947 = vmax.f32 %v2930, 0.0
      %v2948 = vmax.f32 %v2931, 0.0
      %v2949 = vmax.f32 %v2932, 0.0
      %v2950 = vmax.f32 %v2933, 0.0
      %v2951 = vmax.f32 %v2934, 0.0
      %v2952 = vmax.f32 %v2935, 0.0
      %v2953 = vmax.f32 %v2936, 0.0
      %v2954 = vmax.f32 %v2937, 0.0
      %v2955 = vmax.f32 %v2938, 0.0
      %v2956 = vmax.f32 %v2939, 0.0
      %2974 = vrot.lane.b32.xlu0 %v2940, 112
      %v2975 = vpop.permute.xlu0 %2974
      %2976 = vrot.lane.b32.xlu0 %v2941, 112
      %v2977 = vpop.permute.xlu0 %2976
      %2978 = vrot.lane.b32.xlu0 %v2942, 112
      %v2979 = vpop.permute.xlu0 %2978
      %2980 = vrot.lane.b32.xlu0 %v2943, 112
      %v2981 = vpop.permute.xlu0 %2980
      %2982 = vrot.lane.b32.xlu0 %v2944, 112
      %v2983 = vpop.permute.xlu0 %2982
      %2984 = vrot.lane.b32.xlu0 %v2945, 112
      %v2985 = vpop.permute.xlu0 %2984
      %2986 = vrot.lane.b32.xlu0 %v2946, 112
      %v2987 = vpop.permute.xlu0 %2986
      %2988 = vrot.lane.b32.xlu0 %v2947, 112
      %v2989 = vpop.permute.xlu0 %2988
      %2990 = vrot.lane.b32.xlu0 %v2948, 112
      %v2991 = vpop.permute.xlu0 %2990
      %2992 = vrot.lane.b32.xlu0 %v2949, 112
      %v2993 = vpop.permute.xlu0 %2992
      %2994 = vrot.lane.b32.xlu0 %v2950, 112
      %v2995 = vpop.permute.xlu0 %2994
      %2996 = vrot.lane.b32.xlu0 %v2951, 112
      %v2997 = vpop.permute.xlu0 %2996
      %2998 = vrot.lane.b32.xlu0 %v2952, 112
      %v2999 = vpop.permute.xlu0 %2998
      %3000 = vrot.lane.b32.xlu0 %v2953, 112
      %v3001 = vpop.permute.xlu0 %3000
      %3002 = vrot.lane.b32.xlu0 %v2954, 112
      %v3003 = vpop.permute.xlu0 %3002
      %3004 = vrot.lane.b32.xlu0 %v2955, 112
      %v3005 = vpop.permute.xlu0 %3004
      %3006 = vrot.lane.b32.xlu0 %v2956, 112
      %v3007 = vpop.permute.xlu0 %3006
      %v3025 = vmax.f32 %v2940, %v2975
      %v3026 = vmax.f32 %v2941, %v2977
      %v3027 = vmax.f32 %v2942, %v2979
      %v3028 = vmax.f32 %v2943, %v2981
      %v3029 = vmax.f32 %v2944, %v2983
      %v3030 = vmax.f32 %v2945, %v2985
      %v3031 = vmax.f32 %v2946, %v2987
      %v3032 = vmax.f32 %v2947, %v2989
      %v3033 = vmax.f32 %v2948, %v2991
      %v3034 = vmax.f32 %v2949, %v2993
      %v3035 = vmax.f32 %v2950, %v2995
      %v3036 = vmax.f32 %v2951, %v2997
      %v3037 = vmax.f32 %v2952, %v2999
      %v3038 = vmax.f32 %v2953, %v3001
      %v3039 = vmax.f32 %v2954, %v3003
      %v3040 = vmax.f32 %v2955, %v3005
      %v3041 = vmax.f32 %v2956, %v3007
      %v3042 = vld [vmem:[%s5] sm:$0xff]
      %v3043 = vld [vmem:[%s5 + $0x8] sm:$0xff]
      %v3044 = vld [vmem:[%s6] sm:$0x1]
      %v3046 = vlaneseq
      %v3047 = vshrl.u32 %v3046, 7
      %v3048 = vsub.s32 0, %v3047
      %v3049 = vrot.slane %v3044, %v3048
      %v3068 = vrot.slane %v3025, 4
      %v3069 = vrot.slane %v3026, 4
      %v3070 = vsel %vm2526, %v3068, %v3069
      %v3071 = vrot.slane %v3027, 4
      %v3072 = vsel %vm2526, %v3069, %v3071
      %v3073 = vrot.slane %v3028, 4
      %v3074 = vsel %vm2526, %v3071, %v3073
      %v3075 = vrot.slane %v3029, 4
      %v3076 = vsel %vm2526, %v3073, %v3075
      %v3077 = vrot.slane %v3030, 4
      %v3078 = vsel %vm2526, %v3075, %v3077
      %v3079 = vrot.slane %v3031, 4
      %v3080 = vsel %vm2526, %v3077, %v3079
      %v3081 = vrot.slane %v3032, 4
      %v3082 = vsel %vm2526, %v3079, %v3081
      %v3083 = vrot.slane %v3033, 4
      %v3084 = vsel %vm2526, %v3081, %v3083
      %v3085 = vrot.slane %v3034, 4
      %v3086 = vsel %vm2526, %v3083, %v3085
      %v3087 = vrot.slane %v3035, 4
      %v3088 = vsel %vm2526, %v3085, %v3087
      %v3089 = vrot.slane %v3036, 4
      %v3090 = vsel %vm2526, %v3087, %v3089
      %v3091 = vrot.slane %v3037, 4
      %v3092 = vsel %vm2526, %v3089, %v3091
      %v3093 = vrot.slane %v3038, 4
      %v3094 = vsel %vm2526, %v3091, %v3093
      %v3095 = vrot.slane %v3039, 4
      %v3096 = vsel %vm2526, %v3093, %v3095
      %v3097 = vrot.slane %v3040, 4
      %v3098 = vsel %vm2526, %v3095, %v3097
      %v3099 = vrot.slane %v3041, 4
      %v3100 = vsel %vm2526, %v3097, %v3099
      %vm3101 = vcmask 130048
      %v3102 = vsel %vm3101, %v3070, 0
      %v3104 = vsel %vm3101, %v3072, 0
      %v3106 = vsel %vm3101, %v3074, 0
      %v3108 = vsel %vm3101, %v3076, 0
      %v3110 = vsel %vm3101, %v3078, 0
      %v3112 = vsel %vm3101, %v3080, 0
      %v3114 = vsel %vm3101, %v3082, 0
      %v3116 = vsel %vm3101, %v3084, 0
      %v3118 = vsel %vm3101, %v3086, 0
      %v3120 = vsel %vm3101, %v3088, 0
      %v3122 = vsel %vm3101, %v3090, 0
      %v3124 = vsel %vm3101, %v3092, 0
      %v3126 = vsel %vm3101, %v3094, 0
      %v3128 = vsel %vm3101, %v3096, 0
      %v3130 = vsel %vm3101, %v3098, 0
      %v3132 = vsel %vm3101, %v3100, 0
      %3134 = vmatprep.subr.mxu0 0.0
      %3135 = vmatpush1.msra.mxu0 0.0
      %3136 = vmatprep.subr.mxu0 0.0
      %3137 = vmatpush1.msra.mxu0 0.0
      %3138 = vmatprep.subr.mxu0 0.0
      %3139 = vmatpush1.msra.mxu0 0.0
      %3140 = vmatprep.subr.mxu0 0.0
      %3141 = vmatpush1.msra.mxu0 0.0
      %3142 = vmatprep.subr.mxu0 0.0
      %3143 = vmatpush1.msra.mxu0 0.0
      %3144 = vmatprep.subr.mxu0 0.0
      %3145 = vmatpush1.msra.mxu0 0.0
      %3146 = vmatprep.subr.mxu0 0.0
      %3147 = vmatpush1.msra.mxu0 0.0
      %3148 = vmatprep.subr.mxu0 0.0
      %3149 = vmatpush1.msra.mxu0 0.0
      %3150 = vmatprep.subr.mxu0 0.0
      %3151 = vmatpush1.msra.mxu0 0.0
      %3152 = vmatprep.subr.mxu0 0.0
      %3153 = vmatpush1.msra.mxu0 0.0
      %3154 = vmatprep.subr.mxu0 0.0
      %3155 = vmatpush1.msra.mxu0 0.0
      %3156 = vmatprep.subr.mxu0 0.0
      %3157 = vmatpush1.msra.mxu0 0.0
      %3158 = vmatprep.subr.mxu0 0.0
      %3159 = vmatpush1.msra.mxu0 0.0
      %3160 = vmatprep.subr.mxu0 0.0
      %3161 = vmatpush1.msra.mxu0 0.0
      %3162 = vmatprep.subr.mxu0 0.0
      %3163 = vmatpush1.msra.mxu0 %v3043
      %3164 = vmatprep.subr.mxu0 0.0
      %3165 = vmatpush1.msra.mxu0 %v3042
      %3166 = vmatprep.subr.mxu0 0.0
      %3167 = vmatpush2.msra.mxu0 0.0
      %3168 = vmatprep.subr.mxu0 0.0
      %3169 = vmatpush2.msra.mxu0 0.0
      %3170 = vmatprep.subr.mxu0 0.0
      %3171 = vmatpush2.msra.mxu0 0.0
      %3172 = vmatprep.subr.mxu0 0.0
      %3173 = vmatpush2.msra.mxu0 0.0
      %3174 = vmatprep.subr.mxu0 0.0
      %3175 = vmatpush2.msra.mxu0 0.0
      %3176 = vmatprep.subr.mxu0 0.0
      %3177 = vmatpush2.msra.mxu0 0.0
      %3178 = vmatprep.subr.mxu0 0.0
      %3179 = vmatpush2.msra.mxu0 0.0
      %3180 = vmatprep.subr.mxu0 0.0
      %3181 = vmatpush2.msra.mxu0 0.0
      %3182 = vmatprep.subr.mxu0 0.0
      %3183 = vmatpush2.msra.mxu0 0.0
      %3184 = vmatprep.subr.mxu0 0.0
      %3185 = vmatpush2.msra.mxu0 0.0
      %3186 = vmatprep.subr.mxu0 0.0
      %3187 = vmatpush2.msra.mxu0 0.0
      %3188 = vmatprep.subr.mxu0 0.0
      %3189 = vmatpush2.msra.mxu0 0.0
      %3190 = vmatprep.subr.mxu0 0.0
      %3191 = vmatpush2.msra.mxu0 0.0
      %3192 = vmatprep.subr.mxu0 0.0
      %3193 = vmatpush2.msra.mxu0 0.0
      %3194 = vmatprep.subr.mxu0 0.0
      %3195 = vmatpush2.msra.mxu0 0.0
      %3196 = vmatprep.subr.mxu0 0.0
      %3197 = vmatpush2.msra.mxu0 0.0
      %3198 = vmatprep.mubr.f32.mxu0 0.0
      %3199 = vmatmul.mubr.f32.gmra.mxu0 %v3102
      %v3200 = vpop.f32.mrf.mxu0
      %v3201 = vadd.f32 %v3049, %v3200
      %v3202 = vpop.f32.mrf.mxu0
      %3203 = vmatprep.mubr.f32.mxu0 0.0
      %3204 = vmatmul.mubr.f32.gmra.mxu0 %v3104
      %v3205 = vpop.f32.mrf.mxu0
      %v3206 = vadd.f32 %v3049, %v3205
      %v3207 = vpop.f32.mrf.mxu0
      %3208 = vmatprep.mubr.f32.mxu0 0.0
      %3209 = vmatmul.mubr.f32.gmra.mxu0 %v3106
      %v3210 = vpop.f32.mrf.mxu0
      %v3211 = vadd.f32 %v3049, %v3210
      %v3212 = vpop.f32.mrf.mxu0
      %3213 = vmatprep.mubr.f32.mxu0 0.0
      %3214 = vmatmul.mubr.f32.gmra.mxu0 %v3108
      %v3215 = vpop.f32.mrf.mxu0
      %v3216 = vadd.f32 %v3049, %v3215
      %v3217 = vpop.f32.mrf.mxu0
      %3218 = vmatprep.mubr.f32.mxu0 0.0
      %3219 = vmatmul.mubr.f32.gmra.mxu0 %v3110
      %v3220 = vpop.f32.mrf.mxu0
      %v3221 = vadd.f32 %v3049, %v3220
      %v3222 = vpop.f32.mrf.mxu0
      %3223 = vmatprep.mubr.f32.mxu0 0.0
      %3224 = vmatmul.mubr.f32.gmra.mxu0 %v3112
      %v3225 = vpop.f32.mrf.mxu0
      %v3226 = vadd.f32 %v3049, %v3225
      %v3227 = vpop.f32.mrf.mxu0
      %3228 = vmatprep.mubr.f32.mxu0 0.0
      %3229 = vmatmul.mubr.f32.gmra.mxu0 %v3114
      %v3230 = vpop.f32.mrf.mxu0
      %v3231 = vadd.f32 %v3049, %v3230
      %v3232 = vpop.f32.mrf.mxu0
      %3233 = vmatprep.mubr.f32.mxu0 0.0
      %3234 = vmatmul.mubr.f32.gmra.mxu0 %v3116
      %v3235 = vpop.f32.mrf.mxu0
      %v3236 = vadd.f32 %v3049, %v3235
      %v3237 = vpop.f32.mrf.mxu0
      %3238 = vmatprep.mubr.f32.mxu0 0.0
      %3239 = vmatmul.mubr.f32.gmra.mxu0 %v3118
      %v3240 = vpop.f32.mrf.mxu0
      %v3241 = vadd.f32 %v3049, %v3240
      %v3242 = vpop.f32.mrf.mxu0
      %3243 = vmatprep.mubr.f32.mxu0 0.0
      %3244 = vmatmul.mubr.f32.gmra.mxu0 %v3120
      %v3245 = vpop.f32.mrf.mxu0
      %v3246 = vadd.f32 %v3049, %v3245
      %v3247 = vpop.f32.mrf.mxu0
      %3248 = vmatprep.mubr.f32.mxu0 0.0
      %3249 = vmatmul.mubr.f32.gmra.mxu0 %v3122
      %v3250 = vpop.f32.mrf.mxu0
      %v3251 = vadd.f32 %v3049, %v3250
      %v3252 = vpop.f32.mrf.mxu0
      %3253 = vmatprep.mubr.f32.mxu0 0.0
      %3254 = vmatmul.mubr.f32.gmra.mxu0 %v3124
      %v3255 = vpop.f32.mrf.mxu0
      %v3256 = vadd.f32 %v3049, %v3255
      %v3257 = vpop.f32.mrf.mxu0
      %3258 = vmatprep.mubr.f32.mxu0 0.0
      %3259 = vmatmul.mubr.f32.gmra.mxu0 %v3126
      %v3260 = vpop.f32.mrf.mxu0
      %v3261 = vadd.f32 %v3049, %v3260
      %v3262 = vpop.f32.mrf.mxu0
      %3263 = vmatprep.mubr.f32.mxu0 0.0
      %3264 = vmatmul.mubr.f32.gmra.mxu0 %v3128
      %v3265 = vpop.f32.mrf.mxu0
      %v3266 = vadd.f32 %v3049, %v3265
      %v3267 = vpop.f32.mrf.mxu0
      %3268 = vmatprep.mubr.f32.mxu0 0.0
      %3269 = vmatmul.mubr.f32.gmra.mxu0 %v3130
      %v3270 = vpop.f32.mrf.mxu0
      %v3271 = vadd.f32 %v3049, %v3270
      %v3272 = vpop.f32.mrf.mxu0
      %3273 = vmatprep.mubr.f32.mxu0 0.0
      %3274 = vmatmul.mubr.f32.gmra.mxu0 %v3132
      %v3275 = vpop.f32.mrf.mxu0
      %v3276 = vadd.f32 %v3049, %v3275
      %v3277 = vpop.f32.mrf.mxu0
      %3278 = vdwg.mxu0
      %v3279 = vmax.f32 %v3201, 0.0
      %v3280 = vmax.f32 %v3206, 0.0
      %v3281 = vmax.f32 %v3211, 0.0
      %v3282 = vmax.f32 %v3216, 0.0
      %v3283 = vmax.f32 %v3221, 0.0
      %v3284 = vmax.f32 %v3226, 0.0
      %v3285 = vmax.f32 %v3231, 0.0
      %v3286 = vmax.f32 %v3236, 0.0
      %v3287 = vmax.f32 %v3241, 0.0
      %v3288 = vmax.f32 %v3246, 0.0
      %v3289 = vmax.f32 %v3251, 0.0
      %v3290 = vmax.f32 %v3256, 0.0
      %v3291 = vmax.f32 %v3261, 0.0
      %v3292 = vmax.f32 %v3266, 0.0
      %v3293 = vmax.f32 %v3271, 0.0
      %v3294 = vmax.f32 %v3276, 0.0
      %v3295 = vld [vmem:[%s7] sm:$0xff]
      %v3296 = vld [vmem:[%s7 + $0x8] sm:$0x3]
      %v3297 = vld [vmem:[%s8] sm:$0x1]
      %v3299 = vlaneseq
      %v3300 = vshrl.u32 %v3299, 7
      %v3301 = vsub.s32 0, %v3300
      %v3302 = vrot.slane %v3297, %v3301
      %vm3304 = vcmask 80896
      %v3306 = vsel %vm3304, %v3279, 0
      %v3309 = vsel %vm3304, %v3280, 0
      %v3312 = vsel %vm3304, %v3281, 0
      %v3315 = vsel %vm3304, %v3282, 0
      %v3318 = vsel %vm3304, %v3283, 0
      %v3321 = vsel %vm3304, %v3284, 0
      %v3324 = vsel %vm3304, %v3285, 0
      %v3327 = vsel %vm3304, %v3286, 0
      %v3330 = vsel %vm3304, %v3287, 0
      %v3333 = vsel %vm3304, %v3288, 0
      %v3336 = vsel %vm3304, %v3289, 0
      %v3339 = vsel %vm3304, %v3290, 0
      %v3342 = vsel %vm3304, %v3291, 0
      %v3345 = vsel %vm3304, %v3292, 0
      %v3348 = vsel %vm3304, %v3293, 0
      %v3351 = vsel %vm3304, %v3294, 0
      %v3354 = vsel %vm2695, %v3296, 0
      %3356 = vmatprep.subr.mxu0 0.0
      %3357 = vmatpush1.msra.mxu0 0.0
      %3358 = vmatprep.subr.mxu0 0.0
      %3359 = vmatpush1.msra.mxu0 0.0
      %3360 = vmatprep.subr.mxu0 0.0
      %3361 = vmatpush1.msra.mxu0 0.0
      %3362 = vmatprep.subr.mxu0 0.0
      %3363 = vmatpush1.msra.mxu0 0.0
      %3364 = vmatprep.subr.mxu0 0.0
      %3365 = vmatpush1.msra.mxu0 0.0
      %3366 = vmatprep.subr.mxu0 0.0
      %3367 = vmatpush1.msra.mxu0 0.0
      %3368 = vmatprep.subr.mxu0 0.0
      %3369 = vmatpush1.msra.mxu0 0.0
      %3370 = vmatprep.subr.mxu0 0.0
      %3371 = vmatpush1.msra.mxu0 0.0
      %3372 = vmatprep.subr.mxu0 0.0
      %3373 = vmatpush1.msra.mxu0 0.0
      %3374 = vmatprep.subr.mxu0 0.0
      %3375 = vmatpush1.msra.mxu0 0.0
      %3376 = vmatprep.subr.mxu0 0.0
      %3377 = vmatpush1.msra.mxu0 0.0
      %3378 = vmatprep.subr.mxu0 0.0
      %3379 = vmatpush1.msra.mxu0 0.0
      %3380 = vmatprep.subr.mxu0 0.0
      %3381 = vmatpush1.msra.mxu0 0.0
      %3382 = vmatprep.subr.mxu0 0.0
      %3383 = vmatpush1.msra.mxu0 0.0
      %3384 = vmatprep.subr.mxu0 0.0
      %3385 = vmatpush1.msra.mxu0 %v3354
      %3386 = vmatprep.subr.mxu0 0.0
      %3387 = vmatpush1.msra.mxu0 %v3295
      %3388 = vmatprep.subr.mxu0 0.0
      %3389 = vmatpush2.msra.mxu0 0.0
      %3390 = vmatprep.subr.mxu0 0.0
      %3391 = vmatpush2.msra.mxu0 0.0
      %3392 = vmatprep.subr.mxu0 0.0
      %3393 = vmatpush2.msra.mxu0 0.0
      %3394 = vmatprep.subr.mxu0 0.0
      %3395 = vmatpush2.msra.mxu0 0.0
      %3396 = vmatprep.subr.mxu0 0.0
      %3397 = vmatpush2.msra.mxu0 0.0
      %3398 = vmatprep.subr.mxu0 0.0
      %3399 = vmatpush2.msra.mxu0 0.0
      %3400 = vmatprep.subr.mxu0 0.0
      %3401 = vmatpush2.msra.mxu0 0.0
      %3402 = vmatprep.subr.mxu0 0.0
      %3403 = vmatpush2.msra.mxu0 0.0
      %3404 = vmatprep.subr.mxu0 0.0
      %3405 = vmatpush2.msra.mxu0 0.0
      %3406 = vmatprep.subr.mxu0 0.0
      %3407 = vmatpush2.msra.mxu0 0.0
      %3408 = vmatprep.subr.mxu0 0.0
      %3409 = vmatpush2.msra.mxu0 0.0
      %3410 = vmatprep.subr.mxu0 0.0
      %3411 = vmatpush2.msra.mxu0 0.0
      %3412 = vmatprep.subr.mxu0 0.0
      %3413 = vmatpush2.msra.mxu0 0.0
      %3414 = vmatprep.subr.mxu0 0.0
      %3415 = vmatpush2.msra.mxu0 0.0
      %3416 = vmatprep.subr.mxu0 0.0
      %3417 = vmatpush2.msra.mxu0 0.0
      %3418 = vmatprep.subr.mxu0 0.0
      %3419 = vmatpush2.msra.mxu0 0.0
      %3420 = vmatprep.mubr.f32.mxu0 0.0
      %3421 = vmatmul.mubr.f32.gmra.mxu0 %v3306
      %v3422 = vpop.f32.mrf.mxu0
      %v3423 = vadd.f32 %v3302, %v3422
      %v3424 = vpop.f32.mrf.mxu0
      %3425 = vmatprep.mubr.f32.mxu0 0.0
      %3426 = vmatmul.mubr.f32.gmra.mxu0 %v3309
      %v3427 = vpop.f32.mrf.mxu0
      %v3428 = vadd.f32 %v3302, %v3427
      %v3429 = vpop.f32.mrf.mxu0
      %3430 = vmatprep.mubr.f32.mxu0 0.0
      %3431 = vmatmul.mubr.f32.gmra.mxu0 %v3312
      %v3432 = vpop.f32.mrf.mxu0
      %v3433 = vadd.f32 %v3302, %v3432
      %v3434 = vpop.f32.mrf.mxu0
      %3435 = vmatprep.mubr.f32.mxu0 0.0
      %3436 = vmatmul.mubr.f32.gmra.mxu0 %v3315
      %v3437 = vpop.f32.mrf.mxu0
      %v3438 = vadd.f32 %v3302, %v3437
      %v3439 = vpop.f32.mrf.mxu0
      %3440 = vmatprep.mubr.f32.mxu0 0.0
      %3441 = vmatmul.mubr.f32.gmra.mxu0 %v3318
      %v3442 = vpop.f32.mrf.mxu0
      %v3443 = vadd.f32 %v3302, %v3442
      %v3444 = vpop.f32.mrf.mxu0
      %3445 = vmatprep.mubr.f32.mxu0 0.0
      %3446 = vmatmul.mubr.f32.gmra.mxu0 %v3321
      %v3447 = vpop.f32.mrf.mxu0
      %v3448 = vadd.f32 %v3302, %v3447
      %v3449 = vpop.f32.mrf.mxu0
      %3450 = vmatprep.mubr.f32.mxu0 0.0
      %3451 = vmatmul.mubr.f32.gmra.mxu0 %v3324
      %v3452 = vpop.f32.mrf.mxu0
      %v3453 = vadd.f32 %v3302, %v3452
      %v3454 = vpop.f32.mrf.mxu0
      %3455 = vmatprep.mubr.f32.mxu0 0.0
      %3456 = vmatmul.mubr.f32.gmra.mxu0 %v3327
      %v3457 = vpop.f32.mrf.mxu0
      %v3458 = vadd.f32 %v3302, %v3457
      %v3459 = vpop.f32.mrf.mxu0
      %3460 = vmatprep.mubr.f32.mxu0 0.0
      %3461 = vmatmul.mubr.f32.gmra.mxu0 %v3330
      %v3462 = vpop.f32.mrf.mxu0
      %v3463 = vadd.f32 %v3302, %v3462
      %v3464 = vpop.f32.mrf.mxu0
      %3465 = vmatprep.mubr.f32.mxu0 0.0
      %3466 = vmatmul.mubr.f32.gmra.mxu0 %v3333
      %v3467 = vpop.f32.mrf.mxu0
      %v3468 = vadd.f32 %v3302, %v3467
      %v3469 = vpop.f32.mrf.mxu0
      %3470 = vmatprep.mubr.f32.mxu0 0.0
      %3471 = vmatmul.mubr.f32.gmra.mxu0 %v3336
      %v3472 = vpop.f32.mrf.mxu0
      %v3473 = vadd.f32 %v3302, %v3472
      %v3474 = vpop.f32.mrf.mxu0
      %3475 = vmatprep.mubr.f32.mxu0 0.0
      %3476 = vmatmul.mubr.f32.gmra.mxu0 %v3339
      %v3477 = vpop.f32.mrf.mxu0
      %v3478 = vadd.f32 %v3302, %v3477
      %v3479 = vpop.f32.mrf.mxu0
      %3480 = vmatprep.mubr.f32.mxu0 0.0
      %3481 = vmatmul.mubr.f32.gmra.mxu0 %v3342
      %v3482 = vpop.f32.mrf.mxu0
      %v3483 = vadd.f32 %v3302, %v3482
      %v3484 = vpop.f32.mrf.mxu0
      %3485 = vmatprep.mubr.f32.mxu0 0.0
      %3486 = vmatmul.mubr.f32.gmra.mxu0 %v3345
      %v3487 = vpop.f32.mrf.mxu0
      %v3488 = vadd.f32 %v3302, %v3487
      %v3489 = vpop.f32.mrf.mxu0
      %3490 = vmatprep.mubr.f32.mxu0 0.0
      %3491 = vmatmul.mubr.f32.gmra.mxu0 %v3348
      %v3492 = vpop.f32.mrf.mxu0
      %v3493 = vadd.f32 %v3302, %v3492
      %v3494 = vpop.f32.mrf.mxu0
      %3495 = vmatprep.mubr.f32.mxu0 0.0
      %3496 = vmatmul.mubr.f32.gmra.mxu0 %v3351
      %v3497 = vpop.f32.mrf.mxu0
      %v3498 = vadd.f32 %v3302, %v3497
      %v3499 = vpop.f32.mrf.mxu0
      %3500 = vdwg.mxu0
      %vm3501 = vcmask 15360
      %3502 = vst.msk [vmem:[%s433] sm:$0xff] %vm3501, %v3423
      %3503 = vst.msk [vmem:[%s433 + $0x8] sm:$0xff] %vm3501, %v3428
      %3504 = vst.msk [vmem:[%s433 + $0x10] sm:$0xff] %vm3501, %v3433
      %3505 = vst.msk [vmem:[%s433 + $0x18] sm:$0xff] %vm3501, %v3438
      %3506 = vst.msk [vmem:[%s433 + $0x20] sm:$0xff] %vm3501, %v3443
      %3507 = vst.msk [vmem:[%s433 + $0x28] sm:$0xff] %vm3501, %v3448
      %3508 = vst.msk [vmem:[%s433 + $0x30] sm:$0xff] %vm3501, %v3453
      %3509 = vst.msk [vmem:[%s433 + $0x38] sm:$0xff] %vm3501, %v3458
      %3510 = vst.msk [vmem:[%s433 + $0x40] sm:$0xff] %vm3501, %v3463
      %3511 = vst.msk [vmem:[%s433 + $0x48] sm:$0xff] %vm3501, %v3468
      %3512 = vst.msk [vmem:[%s433 + $0x50] sm:$0xff] %vm3501, %v3473
      %3513 = vst.msk [vmem:[%s433 + $0x58] sm:$0xff] %vm3501, %v3478
      %3514 = vst.msk [vmem:[%s433 + $0x60] sm:$0xff] %vm3501, %v3483
      %3515 = vst.msk [vmem:[%s433 + $0x68] sm:$0xff] %vm3501, %v3488
      %3516 = vst.msk [vmem:[%s433 + $0x70] sm:$0xff] %vm3501, %v3493
      %3517 = vst.msk [vmem:[%s433 + $0x78] sm:$0xff] %vm3501, %v3498
      %s3518 = smul.u32 16, %s20
      %p3519 = scmp.lt.s32.totalorder %s3518, 63
      %s3520 = scalar_select %p3519, %s3518, 63
      %s3521 = smul.addr %s3520, 8
      %s3522 = scalar_lea.vmem %s9, %s3521
      // Predicated region
      $region57: #{tpu_custom_call.1} parent=55 // pred_check
        %p3523 = pneg %p258
      $region58: #{tpu_custom_call.1} parent=55 // pred_check_branch
        %3525 = sbr.rel (%p3523) target = $region60
      $region59: #{tpu_custom_call.1} parent=55 // pred_region
        %s3526 = smul.u32 16, %s20
      $region60: #{tpu_custom_call.1} parent=55 // pred_fallthru
        _
    $region56: #{tpu_custom_call.1} parent=5 // pred_fallthru
      _
    %p3527 = scmp.le.s32.totalorder 2, %s15
    // Predicated region
    $region61: #{tpu_custom_call.1} parent=5 // pred_check
      %p3528 = pneg %p3527
    $region62: #{tpu_custom_call.1} parent=5 // pred_check_branch
      %3530 = sbr.rel (%p3528) target = $region64
    $region63: #{tpu_custom_call.1} parent=5 // pred_region
      %s3531 = ssub.s32 %s15, 2
      // Predicated region
      $region65: #{tpu_custom_call.1} parent=63 // pred_check
        %p3532 = pneg %p264
      $region66: #{tpu_custom_call.1} parent=63 // pred_check_branch
        %3534 = sbr.rel (%p3532) target = $region68
      $region67: #{tpu_custom_call.1} parent=63 // pred_region
        %s3535 = smul.u32 16, %s21
        %p3536 = scmp.lt.s32.totalorder %s3535, 63
        %s3537 = scalar_select %p3536, %s3535, 63
        %s3538 = smul.addr %s3537, 8
        %s3539 = scalar_lea.vmem %s9, %s3538
      $region68: #{tpu_custom_call.1} parent=63 // pred_fallthru
        _
    $region64: #{tpu_custom_call.1} parent=5 // pred_fallthru
      _
  $region6: #{tpu_custom_call.1} parent=0 // loop_footer
    %s19 = sadd.s32 1, %s15
  $region7: #{tpu_custom_call.1} parent=0 // loop_footer_branch
    %14 = sbr.rel target = $region3
  $region8: #{tpu_custom_call.1} parent=0 // loop_exit
    _

</llo_original>
